<compile_context>
chip_gen: v6e
topology: v6e:2x2x1
jax: 0.10.0
libtpu: 0.0.40
codegen_flags: <defaults>
</compile_context>

<pallas_src>
import jax
import jax.numpy as jnp
import numpy as np
from jax import lax
from jax.experimental import pallas as pl
from jax.experimental.pallas import tpu as pltpu

NEG_SLOPE = 0.2
KS = 3        # conv kernel size
PADR = 16     # sublane-aligned top/bottom zero halo rows for the shifted-slice conv


def _lrelu(z):
    return jnp.where(z > 0.0, z, NEG_SLOPE * z)


# ----------------------------- fused Pallas kernel --------------------------------

def _make_fused_kernel(ho, wo):
    """Fused 4-layer convnet for one batch element (grid axis 0 = batch)."""
    hw = ho * wo
    assert PADR >= wo + 1, "halo must cover a +/- one-image-row shift"

    def kernel(p1_ref, w1_ref, b1_ref, w2_ref, b2_ref, w3_ref, b3_ref,
               w4_ref, b4_ref, o_ref, xp32, xp64, xp128):
        # Column-border masks shared by all three stride-1 3x3 convs.
        col = lax.broadcasted_iota(jnp.int32, (hw, 1), 0) % wo
        not_left = (col != 0).astype(jnp.float32)         # kills dw == -1 wrap-around
        not_right = (col != wo - 1).astype(jnp.float32)   # kills dw == +1 wrap-around

        def conv3x3(x, w_ref, b_ref, xp_ref, act):
            # x: (hw, cin) channel-last feature map; w_ref: (9, cin, cout)
            cin = x.shape[1]
            cout = w_ref.shape[2]
            xp_ref[...] = jnp.zeros(xp_ref.shape, xp_ref.dtype)   # zero halo rows
            xp_ref[PADR:PADR + hw, :] = x                         # aligned store
            acc = jnp.zeros((hw, cout), jnp.float32)
            for t in range(9):                                    # static unroll
                dh, dw = t // 3 - 1, t % 3 - 1
                s = dh * wo + dw
                xs = xp_ref[PADR + s:PADR + s + hw, :]            # shifted slice
                if dw == -1:
                    xs = xs * not_left
                elif dw == 1:
                    xs = xs * not_right
                acc = acc + jnp.dot(xs, w_ref[t],
                                    preferred_element_type=jnp.float32)
            y = acc + b_ref[...]
            return _lrelu(y) if act else y

        # conv1 (stride 2) as one im2col matmul: (hw, Cin*9) @ (Cin*9, 32)
        p1 = p1_ref[0]
        x1 = _lrelu(jnp.dot(p1, w1_ref[...],
                            preferred_element_type=jnp.float32) + b1_ref[...])
        x2 = conv3x3(x1, w2_ref, b2_ref, xp32, act=True)          # (hw, 64)
        x3 = conv3x3(x2, w3_ref, b3_ref, xp64, act=True)          # (hw, 128)
        o_ref[0] = conv3x3(x3, w4_ref, b4_ref, xp128, act=False)  # (hw, 1)

    return kernel


# ----------------------------- host-side glue --------------------------------------

def _im2col_stride2(x, k=KS, pad=1, stride=2):
    """im2col for the k x k / stride-2 / pad-1 first conv.
    Returns (B, Ho*Wo, C*k*k) with inner order (c, kh, kw) matching
    torch_weight.reshape(O, -1).T."""
    xp = jnp.pad(x, ((0, 0), (0, 0), (pad, pad), (pad, pad)))
    b, c, hp, wp = xp.shape
    ho = (hp - k) // stride + 1
    wo = (wp - k) // stride + 1
    cols = []
    for kh in range(k):
        for kw in range(k):
            cols.append(xp[:, :, kh:kh + stride * (ho - 1) + 1:stride,
                               kw:kw + stride * (wo - 1) + 1:stride])
    p = jnp.stack(cols, axis=-1).reshape(b, c, ho, wo, k, k)
    p = p.transpose(0, 2, 3, 1, 4, 5).reshape(b, ho * wo, c * k * k)
    return p, ho, wo


def small_patch_discriminator(obs, kp):
    """obs: (B, Cin, H, W) float32 pixels in [0, 255] (NCHW). Returns (B, 1, Ho, Wo)."""
    B, cin, _, _ = obs.shape
    xn = obs.astype(jnp.float32) / 255.0 - 0.5
    p1, ho, wo = _im2col_stride2(xn)            # (B, hw, cin*9)
    hw = ho * wo
    k1 = cin * KS * KS
    rows = hw + 2 * PADR

    out = pl.pallas_call(
        _make_fused_kernel(ho, wo),
        out_shape=jax.ShapeDtypeStruct((B, hw, 1), jnp.float32),
        grid=(B,),
        in_specs=[
            pl.BlockSpec((1, hw, k1), lambda b: (b, 0, 0)),    # im2col patches
            pl.BlockSpec((k1, 32), lambda b: (0, 0)),          # w1
            pl.BlockSpec((1, 32), lambda b: (0, 0)),           # b1
            pl.BlockSpec((9, 32, 64), lambda b: (0, 0, 0)),    # w2 (per-tap)
            pl.BlockSpec((1, 64), lambda b: (0, 0)),           # b2
            pl.BlockSpec((9, 64, 128), lambda b: (0, 0, 0)),   # w3 (per-tap)
            pl.BlockSpec((1, 128), lambda b: (0, 0)),          # b3
            pl.BlockSpec((9, 128, 1), lambda b: (0, 0, 0)),    # w4 (per-tap)
            pl.BlockSpec((1, 1), lambda b: (0, 0)),            # b4
        ],
        out_specs=pl.BlockSpec((1, hw, 1), lambda b: (b, 0, 0)),
        scratch_shapes=[
            pltpu.VMEM((rows, 32), jnp.float32),    # halo buffer for conv2 input
            pltpu.VMEM((rows, 64), jnp.float32),    # halo buffer for conv3 input
            pltpu.VMEM((rows, 128), jnp.float32),   # halo buffer for conv4 input
        ],
        compiler_params=pltpu.CompilerParams(
            dimension_semantics=("parallel",)),
    )(p1, kp['w1'], kp['b1'], kp['w2'], kp['b2'],
      kp['w3'], kp['b3'], kp['w4'], kp['b4'])

    return out.reshape(B, ho, wo)[:, None, :, :]


# ----------------------------- params & reference ----------------------------------

def init_params(key, in_dim):
    ks = jax.random.split(key, 8)
    n = lambda k, s: 0.1 * jax.random.normal(k, s, jnp.float32)
    pt = dict(
        C1=n(ks[0], (32, in_dim, KS, KS)), c1b=n(ks[1], (32,)),
        C2=n(ks[2], (64, 32, KS, KS)),     c2b=n(ks[3], (64,)),
        C3=n(ks[4], (128, 64, KS, KS)),    c3b=n(ks[5], (128,)),
        C4=n(ks[6], (1, 128, KS, KS)),     c4b=n(ks[7], (1,)),
    )
    kp = dict(
        w1=pt['C1'].reshape(32, -1).T,                          # (in_dim*9, 32)
        b1=pt['c1b'].reshape(1, 32),
        w2=pt['C2'].transpose(2, 3, 1, 0).reshape(9, 32, 64),   # [kh*3+kw, cin, cout]
        b2=pt['c2b'].reshape(1, 64),
        w3=pt['C3'].transpose(2, 3, 1, 0).reshape(9, 64, 128),
        b3=pt['c3b'].reshape(1, 128),
        w4=pt['C4'].transpose(2, 3, 1, 0).reshape(9, 128, 1),
        b4=pt['c4b'].reshape(1, 1),
    )
    return pt, kp


def reference_forward(obs, pt):
    x = obs.astype(jnp.float32) / 255.0 - 0.5

    def conv(t, w, b, stride):
        y = lax.conv_general_dilated(
            t, w, (stride, stride), [(1, 1), (1, 1)],
            dimension_numbers=('NCHW', 'OIHW', 'NCHW'))
        return y + b[None, :, None, None]

    h = _lrelu(conv(x, pt['C1'], pt['c1b'], 2))
    h = _lrelu(conv(h, pt['C2'], pt['c2b'], 1))
    h = _lrelu(conv(h, pt['C3'], pt['c3b'], 1))
    return conv(h, pt['C4'], pt['c4b'], 1)


# ----------------------------- main -------------------------------------------------

if __name__ == "__main__":
    key = jax.random.PRNGKey(0)
    kx, kparam = jax.random.split(key)
    B, Cin, H, W = 2, 4, 16, 16
    obs = jax.random.uniform(kx, (B, Cin, H, W), jnp.float32, 0.0, 255.0)

    pt_params, kernel_params = init_params(kparam, Cin)

    fwd = jax.jit(small_patch_discriminator)
    out = jax.block_until_ready(fwd(obs, kernel_params))

    ref = jax.block_until_ready(reference_forward(obs, pt_params))
    assert out.shape == ref.shape == (B, 1, 8, 8), (out.shape, ref.shape)
    np.testing.assert_allclose(np.asarray(out), np.asarray(ref),
                               rtol=1e-4, atol=1e-4)

    print("KERNEL_OK")
</pallas_src>

<mosaic_0001>
module attributes {stable_mosaic.version = 11 : i64} {
  func.func @kernel(%arg0: i32, %arg1: memref<1x64x36xf32, #tpu.memory_space<vmem>>, %arg2: memref<36x32xf32, #tpu.memory_space<vmem>>, %arg3: memref<1x32xf32, #tpu.memory_space<vmem>>, %arg4: memref<9x32x64xf32, #tpu.memory_space<vmem>>, %arg5: memref<1x64xf32, #tpu.memory_space<vmem>>, %arg6: memref<9x64x128xf32, #tpu.memory_space<vmem>>, %arg7: memref<1x128xf32, #tpu.memory_space<vmem>>, %arg8: memref<9x128x1xf32, #tpu.memory_space<vmem>>, %arg9: memref<1x1xf32, #tpu.memory_space<vmem>>, %arg10: memref<1x64x1xf32, #tpu.memory_space<vmem>>, %arg11: memref<96x32xf32, #tpu.memory_space<vmem>>, %arg12: memref<96x64xf32, #tpu.memory_space<vmem>>, %arg13: memref<96x128xf32, #tpu.memory_space<vmem>>) attributes {dimension_semantics = [#tpu.dimension_semantics<parallel>], iteration_bounds = array<i64: 2>, scalar_prefetch = 0 : i64, scratch_operands = 3 : i64, tpu.core_type = #tpu.core_type<tc>, window_params = [{transform_indices = @transform_0, window_bounds = array<i64: 1, 64, 36>}, {pipeline_mode = #tpu.pipeline_mode<synchronous>, transform_indices = @transform_1, window_bounds = array<i64: 36, 32>}, {pipeline_mode = #tpu.pipeline_mode<synchronous>, transform_indices = @transform_2, window_bounds = array<i64: 1, 32>}, {pipeline_mode = #tpu.pipeline_mode<synchronous>, transform_indices = @transform_3, window_bounds = array<i64: 9, 32, 64>}, {pipeline_mode = #tpu.pipeline_mode<synchronous>, transform_indices = @transform_4, window_bounds = array<i64: 1, 64>}, {pipeline_mode = #tpu.pipeline_mode<synchronous>, transform_indices = @transform_5, window_bounds = array<i64: 9, 64, 128>}, {pipeline_mode = #tpu.pipeline_mode<synchronous>, transform_indices = @transform_6, window_bounds = array<i64: 1, 128>}, {pipeline_mode = #tpu.pipeline_mode<synchronous>, transform_indices = @transform_7, window_bounds = array<i64: 9, 128, 1>}, {pipeline_mode = #tpu.pipeline_mode<synchronous>, transform_indices = @transform_8, window_bounds = array<i64: 1, 1>}, {transform_indices = @transform_9, window_bounds = array<i64: 1, 64, 1>}]} {
    %0 = tpu.iota {dimensions = array<i32: 0>} : vector<64x1xi32>
    %c8_i32 = arith.constant 8 : i32
    %c0_i32 = arith.constant 0 : i32
    %1 = arith.cmpi eq, %c8_i32, %c0_i32 : i32
    %c1_i32 = arith.constant 1 : i32
    %2 = arith.select %1, %c1_i32, %c8_i32 : i32
    %3 = vector.broadcast %2 : i32 to vector<64x1xi32>
    %4 = arith.remsi %0, %3 : vector<64x1xi32>
    %c0_i32_0 = arith.constant 0 : i32
    %5 = vector.broadcast %c0_i32_0 : i32 to vector<64x1xi32>
    %6 = arith.cmpi ne, %4, %5 : vector<64x1xi32>
    %c0_i32_1 = arith.constant 0 : i32
    %7 = vector.broadcast %c0_i32_1 : i32 to vector<64x1xi32>
    %8 = arith.cmpi slt, %4, %7 : vector<64x1xi32>
    %c0_i32_2 = arith.constant 0 : i32
    %9 = arith.cmpi slt, %2, %c0_i32_2 : i32
    %10 = vector.broadcast %9 : i1 to vector<64x1xi1>
    %11 = vector.broadcast %10 : vector<64x1xi1> to vector<64x1xi1>
    %12 = arith.xori %8, %11 : vector<64x1xi1>
    %13 = arith.andi %12, %6 : vector<64x1xi1>
    %14 = vector.broadcast %2 : i32 to vector<64x1xi32>
    %15 = arith.addi %4, %14 : vector<64x1xi32>
    %16 = arith.select %13, %15, %4 : vector<64x1xi1>, vector<64x1xi32>
    %c0_i32_3 = arith.constant 0 : i32
    %17 = vector.broadcast %c0_i32_3 : i32 to vector<64x1xi32>
    %18 = arith.cmpi ne, %16, %17 : vector<64x1xi32>
    %19 = arith.extui %18 : vector<64x1xi1> to vector<64x1xi32>
    %20 = arith.sitofp %19 : vector<64x1xi32> to vector<64x1xf32>
    %c7_i32 = arith.constant 7 : i32
    %21 = vector.broadcast %c7_i32 : i32 to vector<64x1xi32>
    %22 = arith.cmpi ne, %16, %21 : vector<64x1xi32>
    %23 = arith.extui %22 : vector<64x1xi1> to vector<64x1xi32>
    %24 = arith.sitofp %23 : vector<64x1xi32> to vector<64x1xf32>
    %c0 = arith.constant 0 : index
    %c0_4 = arith.constant 0 : index
    %c0_5 = arith.constant 0 : index
    %25 = vector.load %arg1[%c0, %c0_4, %c0_5] : memref<1x64x36xf32, #tpu.memory_space<vmem>>, vector<1x64x36xf32>
    %26 = vector.shape_cast %25 : vector<1x64x36xf32> to vector<64x36xf32>
    %c0_6 = arith.constant 0 : index
    %c0_7 = arith.constant 0 : index
    %27 = vector.load %arg2[%c0_6, %c0_7] : memref<36x32xf32, #tpu.memory_space<vmem>>, vector<36x32xf32>
    %cst = arith.constant dense<0.000000e+00> : vector<64x32xf32>
    %28 = tpu.matmul %26, %27, %cst {dimension_numbers = #tpu.dot_dimension_numbers<[1], [0], [0], [1], [0, 0, 1, 1], [], []>} : vector<64x36xf32>, vector<36x32xf32>, vector<64x32xf32> -> vector<64x32xf32>
    %c0_8 = arith.constant 0 : index
    %c0_9 = arith.constant 0 : index
    %29 = vector.load %arg3[%c0_8, %c0_9] : memref<1x32xf32, #tpu.memory_space<vmem>>, vector<1x32xf32>
    %30 = vector.broadcast %29 : vector<1x32xf32> to vector<64x32xf32>
    %31 = arith.addf %28, %30 : vector<64x32xf32>
    %cst_10 = arith.constant 0.000000e+00 : f32
    %32 = vector.broadcast %cst_10 : f32 to vector<64x32xf32>
    %33 = arith.cmpf ogt, %31, %32 : vector<64x32xf32>
    %cst_11 = arith.constant 2.000000e-01 : f32
    %34 = vector.broadcast %cst_11 : f32 to vector<64x32xf32>
    %35 = arith.mulf %34, %31 : vector<64x32xf32>
    %36 = arith.select %33, %31, %35 : vector<64x32xi1>, vector<64x32xf32>
    %cst_12 = arith.constant 0.000000e+00 : f32
    %37 = vector.broadcast %cst_12 : f32 to vector<96x32xf32>
    %c0_13 = arith.constant 0 : index
    %c0_14 = arith.constant 0 : index
    %38 = vector.load %arg11[%c0_13, %c0_14] : memref<96x32xf32, #tpu.memory_space<vmem>>, vector<96x32xf32>
    tpu.vector_store %arg11[%c0_13, %c0_14], %37 {strides = array<i32>} : memref<96x32xf32, #tpu.memory_space<vmem>>, vector<96x32xf32>,
    %c16 = arith.constant 16 : index
    %c0_15 = arith.constant 0 : index
    %39 = vector.load %arg11[%c16, %c0_15] : memref<96x32xf32, #tpu.memory_space<vmem>>, vector<64x32xf32>
    tpu.vector_store %arg11[%c16, %c0_15], %36 {strides = array<i32>} : memref<96x32xf32, #tpu.memory_space<vmem>>, vector<64x32xf32>,
    %cst_16 = arith.constant 0.000000e+00 : f32
    %40 = vector.broadcast %cst_16 : f32 to vector<64x64xf32>
    %c7 = arith.constant 7 : index
    %c0_17 = arith.constant 0 : index
    %41 = vector.load %arg11[%c7, %c0_17] : memref<96x32xf32, #tpu.memory_space<vmem>>, vector<64x32xf32>
    %42 = vector.broadcast %20 : vector<64x1xf32> to vector<64x32xf32>
    %43 = arith.mulf %41, %42 : vector<64x32xf32>
    %c0_18 = arith.constant 0 : index
    %c0_19 = arith.constant 0 : index
    %c0_20 = arith.constant 0 : index
    %44 = vector.load %arg4[%c0_18, %c0_19, %c0_20] : memref<9x32x64xf32, #tpu.memory_space<vmem>>, vector<1x32x64xf32>
    %45 = vector.shape_cast %44 : vector<1x32x64xf32> to vector<32x64xf32>
    %cst_21 = arith.constant dense<0.000000e+00> : vector<64x64xf32>
    %46 = tpu.matmul %43, %45, %cst_21 {dimension_numbers = #tpu.dot_dimension_numbers<[1], [0], [0], [1], [0, 0, 1, 1], [], []>} : vector<64x32xf32>, vector<32x64xf32>, vector<64x64xf32> -> vector<64x64xf32>
    %47 = arith.addf %40, %46 : vector<64x64xf32>
    %c8 = arith.constant 8 : index
    %c0_22 = arith.constant 0 : index
    %48 = vector.load %arg11[%c8, %c0_22] : memref<96x32xf32, #tpu.memory_space<vmem>>, vector<64x32xf32>
    %c1 = arith.constant 1 : index
    %c0_23 = arith.constant 0 : index
    %c0_24 = arith.constant 0 : index
    %49 = vector.load %arg4[%c1, %c0_23, %c0_24] : memref<9x32x64xf32, #tpu.memory_space<vmem>>, vector<1x32x64xf32>
    %50 = vector.shape_cast %49 : vector<1x32x64xf32> to vector<32x64xf32>
    %cst_25 = arith.constant dense<0.000000e+00> : vector<64x64xf32>
    %51 = tpu.matmul %48, %50, %cst_25 {dimension_numbers = #tpu.dot_dimension_numbers<[1], [0], [0], [1], [0, 0, 1, 1], [], []>} : vector<64x32xf32>, vector<32x64xf32>, vector<64x64xf32> -> vector<64x64xf32>
    %52 = arith.addf %47, %51 : vector<64x64xf32>
    %c9 = arith.constant 9 : index
    %c0_26 = arith.constant 0 : index
    %53 = vector.load %arg11[%c9, %c0_26] : memref<96x32xf32, #tpu.memory_space<vmem>>, vector<64x32xf32>
    %54 = vector.broadcast %24 : vector<64x1xf32> to vector<64x32xf32>
    %55 = arith.mulf %53, %54 : vector<64x32xf32>
    %c2 = arith.constant 2 : index
    %c0_27 = arith.constant 0 : index
    %c0_28 = arith.constant 0 : index
    %56 = vector.load %arg4[%c2, %c0_27, %c0_28] : memref<9x32x64xf32, #tpu.memory_space<vmem>>, vector<1x32x64xf32>
    %57 = vector.shape_cast %56 : vector<1x32x64xf32> to vector<32x64xf32>
    %cst_29 = arith.constant dense<0.000000e+00> : vector<64x64xf32>
    %58 = tpu.matmul %55, %57, %cst_29 {dimension_numbers = #tpu.dot_dimension_numbers<[1], [0], [0], [1], [0, 0, 1, 1], [], []>} : vector<64x32xf32>, vector<32x64xf32>, vector<64x64xf32> -> vector<64x64xf32>
    %59 = arith.addf %52, %58 : vector<64x64xf32>
    %c15 = arith.constant 15 : index
    %c0_30 = arith.constant 0 : index
    %60 = vector.load %arg11[%c15, %c0_30] : memref<96x32xf32, #tpu.memory_space<vmem>>, vector<64x32xf32>
    %61 = vector.broadcast %20 : vector<64x1xf32> to vector<64x32xf32>
    %62 = arith.mulf %60, %61 : vector<64x32xf32>
    %c3 = arith.constant 3 : index
    %c0_31 = arith.constant 0 : index
    %c0_32 = arith.constant 0 : index
    %63 = vector.load %arg4[%c3, %c0_31, %c0_32] : memref<9x32x64xf32, #tpu.memory_space<vmem>>, vector<1x32x64xf32>
    %64 = vector.shape_cast %63 : vector<1x32x64xf32> to vector<32x64xf32>
    %cst_33 = arith.constant dense<0.000000e+00> : vector<64x64xf32>
    %65 = tpu.matmul %62, %64, %cst_33 {dimension_numbers = #tpu.dot_dimension_numbers<[1], [0], [0], [1], [0, 0, 1, 1], [], []>} : vector<64x32xf32>, vector<32x64xf32>, vector<64x64xf32> -> vector<64x64xf32>
    %66 = arith.addf %59, %65 : vector<64x64xf32>
    %c16_34 = arith.constant 16 : index
    %c0_35 = arith.constant 0 : index
    %67 = vector.load %arg11[%c16_34, %c0_35] : memref<96x32xf32, #tpu.memory_space<vmem>>, vector<64x32xf32>
    %c4 = arith.constant 4 : index
    %c0_36 = arith.constant 0 : index
    %c0_37 = arith.constant 0 : index
    %68 = vector.load %arg4[%c4, %c0_36, %c0_37] : memref<9x32x64xf32, #tpu.memory_space<vmem>>, vector<1x32x64xf32>
    %69 = vector.shape_cast %68 : vector<1x32x64xf32> to vector<32x64xf32>
    %cst_38 = arith.constant dense<0.000000e+00> : vector<64x64xf32>
    %70 = tpu.matmul %67, %69, %cst_38 {dimension_numbers = #tpu.dot_dimension_numbers<[1], [0], [0], [1], [0, 0, 1, 1], [], []>} : vector<64x32xf32>, vector<32x64xf32>, vector<64x64xf32> -> vector<64x64xf32>
    %71 = arith.addf %66, %70 : vector<64x64xf32>
    %c17 = arith.constant 17 : index
    %c0_39 = arith.constant 0 : index
    %72 = vector.load %arg11[%c17, %c0_39] : memref<96x32xf32, #tpu.memory_space<vmem>>, vector<64x32xf32>
    %73 = vector.broadcast %24 : vector<64x1xf32> to vector<64x32xf32>
    %74 = arith.mulf %72, %73 : vector<64x32xf32>
    %c5 = arith.constant 5 : index
    %c0_40 = arith.constant 0 : index
    %c0_41 = arith.constant 0 : index
    %75 = vector.load %arg4[%c5, %c0_40, %c0_41] : memref<9x32x64xf32, #tpu.memory_space<vmem>>, vector<1x32x64xf32>
    %76 = vector.shape_cast %75 : vector<1x32x64xf32> to vector<32x64xf32>
    %cst_42 = arith.constant dense<0.000000e+00> : vector<64x64xf32>
    %77 = tpu.matmul %74, %76, %cst_42 {dimension_numbers = #tpu.dot_dimension_numbers<[1], [0], [0], [1], [0, 0, 1, 1], [], []>} : vector<64x32xf32>, vector<32x64xf32>, vector<64x64xf32> -> vector<64x64xf32>
    %78 = arith.addf %71, %77 : vector<64x64xf32>
    %c23 = arith.constant 23 : index
    %c0_43 = arith.constant 0 : index
    %79 = vector.load %arg11[%c23, %c0_43] : memref<96x32xf32, #tpu.memory_space<vmem>>, vector<64x32xf32>
    %80 = vector.broadcast %20 : vector<64x1xf32> to vector<64x32xf32>
    %81 = arith.mulf %79, %80 : vector<64x32xf32>
    %c6 = arith.constant 6 : index
    %c0_44 = arith.constant 0 : index
    %c0_45 = arith.constant 0 : index
    %82 = vector.load %arg4[%c6, %c0_44, %c0_45] : memref<9x32x64xf32, #tpu.memory_space<vmem>>, vector<1x32x64xf32>
    %83 = vector.shape_cast %82 : vector<1x32x64xf32> to vector<32x64xf32>
    %cst_46 = arith.constant dense<0.000000e+00> : vector<64x64xf32>
    %84 = tpu.matmul %81, %83, %cst_46 {dimension_numbers = #tpu.dot_dimension_numbers<[1], [0], [0], [1], [0, 0, 1, 1], [], []>} : vector<64x32xf32>, vector<32x64xf32>, vector<64x64xf32> -> vector<64x64xf32>
    %85 = arith.addf %78, %84 : vector<64x64xf32>
    %c24 = arith.constant 24 : index
    %c0_47 = arith.constant 0 : index
    %86 = vector.load %arg11[%c24, %c0_47] : memref<96x32xf32, #tpu.memory_space<vmem>>, vector<64x32xf32>
    %c7_48 = arith.constant 7 : index
    %c0_49 = arith.constant 0 : index
    %c0_50 = arith.constant 0 : index
    %87 = vector.load %arg4[%c7_48, %c0_49, %c0_50] : memref<9x32x64xf32, #tpu.memory_space<vmem>>, vector<1x32x64xf32>
    %88 = vector.shape_cast %87 : vector<1x32x64xf32> to vector<32x64xf32>
    %cst_51 = arith.constant dense<0.000000e+00> : vector<64x64xf32>
    %89 = tpu.matmul %86, %88, %cst_51 {dimension_numbers = #tpu.dot_dimension_numbers<[1], [0], [0], [1], [0, 0, 1, 1], [], []>} : vector<64x32xf32>, vector<32x64xf32>, vector<64x64xf32> -> vector<64x64xf32>
    %90 = arith.addf %85, %89 : vector<64x64xf32>
    %c25 = arith.constant 25 : index
    %c0_52 = arith.constant 0 : index
    %91 = vector.load %arg11[%c25, %c0_52] : memref<96x32xf32, #tpu.memory_space<vmem>>, vector<64x32xf32>
    %92 = vector.broadcast %24 : vector<64x1xf32> to vector<64x32xf32>
    %93 = arith.mulf %91, %92 : vector<64x32xf32>
    %c8_53 = arith.constant 8 : index
    %c0_54 = arith.constant 0 : index
    %c0_55 = arith.constant 0 : index
    %94 = vector.load %arg4[%c8_53, %c0_54, %c0_55] : memref<9x32x64xf32, #tpu.memory_space<vmem>>, vector<1x32x64xf32>
    %95 = vector.shape_cast %94 : vector<1x32x64xf32> to vector<32x64xf32>
    %cst_56 = arith.constant dense<0.000000e+00> : vector<64x64xf32>
    %96 = tpu.matmul %93, %95, %cst_56 {dimension_numbers = #tpu.dot_dimension_numbers<[1], [0], [0], [1], [0, 0, 1, 1], [], []>} : vector<64x32xf32>, vector<32x64xf32>, vector<64x64xf32> -> vector<64x64xf32>
    %97 = arith.addf %90, %96 : vector<64x64xf32>
    %c0_57 = arith.constant 0 : index
    %c0_58 = arith.constant 0 : index
    %98 = vector.load %arg5[%c0_57, %c0_58] : memref<1x64xf32, #tpu.memory_space<vmem>>, vector<1x64xf32>
    %99 = vector.broadcast %98 : vector<1x64xf32> to vector<64x64xf32>
    %100 = arith.addf %97, %99 : vector<64x64xf32>
    %cst_59 = arith.constant 0.000000e+00 : f32
    %101 = vector.broadcast %cst_59 : f32 to vector<64x64xf32>
    %102 = arith.cmpf ogt, %100, %101 : vector<64x64xf32>
    %cst_60 = arith.constant 2.000000e-01 : f32
    %103 = vector.broadcast %cst_60 : f32 to vector<64x64xf32>
    %104 = arith.mulf %103, %100 : vector<64x64xf32>
    %105 = arith.select %102, %100, %104 : vector<64x64xi1>, vector<64x64xf32>
    %cst_61 = arith.constant 0.000000e+00 : f32
    %106 = vector.broadcast %cst_61 : f32 to vector<96x64xf32>
    %c0_62 = arith.constant 0 : index
    %c0_63 = arith.constant 0 : index
    %107 = vector.load %arg12[%c0_62, %c0_63] : memref<96x64xf32, #tpu.memory_space<vmem>>, vector<96x64xf32>
    tpu.vector_store %arg12[%c0_62, %c0_63], %106 {strides = array<i32>} : memref<96x64xf32, #tpu.memory_space<vmem>>, vector<96x64xf32>,
    %c16_64 = arith.constant 16 : index
    %c0_65 = arith.constant 0 : index
    %108 = vector.load %arg12[%c16_64, %c0_65] : memref<96x64xf32, #tpu.memory_space<vmem>>, vector<64x64xf32>
    tpu.vector_store %arg12[%c16_64, %c0_65], %105 {strides = array<i32>} : memref<96x64xf32, #tpu.memory_space<vmem>>, vector<64x64xf32>,
    %cst_66 = arith.constant 0.000000e+00 : f32
    %109 = vector.broadcast %cst_66 : f32 to vector<64x128xf32>
    %c7_67 = arith.constant 7 : index
    %c0_68 = arith.constant 0 : index
    %110 = vector.load %arg12[%c7_67, %c0_68] : memref<96x64xf32, #tpu.memory_space<vmem>>, vector<64x64xf32>
    %111 = vector.broadcast %20 : vector<64x1xf32> to vector<64x64xf32>
    %112 = arith.mulf %110, %111 : vector<64x64xf32>
    %c0_69 = arith.constant 0 : index
    %c0_70 = arith.constant 0 : index
    %c0_71 = arith.constant 0 : index
    %113 = vector.load %arg6[%c0_69, %c0_70, %c0_71] : memref<9x64x128xf32, #tpu.memory_space<vmem>>, vector<1x64x128xf32>
    %114 = vector.shape_cast %113 : vector<1x64x128xf32> to vector<64x128xf32>
    %cst_72 = arith.constant dense<0.000000e+00> : vector<64x128xf32>
    %115 = tpu.matmul %112, %114, %cst_72 {dimension_numbers = #tpu.dot_dimension_numbers<[1], [0], [0], [1], [0, 0, 1, 1], [], []>} : vector<64x64xf32>, vector<64x128xf32>, vector<64x128xf32> -> vector<64x128xf32>
    %116 = arith.addf %109, %115 : vector<64x128xf32>
    %c8_73 = arith.constant 8 : index
    %c0_74 = arith.constant 0 : index
    %117 = vector.load %arg12[%c8_73, %c0_74] : memref<96x64xf32, #tpu.memory_space<vmem>>, vector<64x64xf32>
    %c1_75 = arith.constant 1 : index
    %c0_76 = arith.constant 0 : index
    %c0_77 = arith.constant 0 : index
    %118 = vector.load %arg6[%c1_75, %c0_76, %c0_77] : memref<9x64x128xf32, #tpu.memory_space<vmem>>, vector<1x64x128xf32>
    %119 = vector.shape_cast %118 : vector<1x64x128xf32> to vector<64x128xf32>
    %cst_78 = arith.constant dense<0.000000e+00> : vector<64x128xf32>
    %120 = tpu.matmul %117, %119, %cst_78 {dimension_numbers = #tpu.dot_dimension_numbers<[1], [0], [0], [1], [0, 0, 1, 1], [], []>} : vector<64x64xf32>, vector<64x128xf32>, vector<64x128xf32> -> vector<64x128xf32>
    %121 = arith.addf %116, %120 : vector<64x128xf32>
    %c9_79 = arith.constant 9 : index
    %c0_80 = arith.constant 0 : index
    %122 = vector.load %arg12[%c9_79, %c0_80] : memref<96x64xf32, #tpu.memory_space<vmem>>, vector<64x64xf32>
    %123 = vector.broadcast %24 : vector<64x1xf32> to vector<64x64xf32>
    %124 = arith.mulf %122, %123 : vector<64x64xf32>
    %c2_81 = arith.constant 2 : index
    %c0_82 = arith.constant 0 : index
    %c0_83 = arith.constant 0 : index
    %125 = vector.load %arg6[%c2_81, %c0_82, %c0_83] : memref<9x64x128xf32, #tpu.memory_space<vmem>>, vector<1x64x128xf32>
    %126 = vector.shape_cast %125 : vector<1x64x128xf32> to vector<64x128xf32>
    %cst_84 = arith.constant dense<0.000000e+00> : vector<64x128xf32>
    %127 = tpu.matmul %124, %126, %cst_84 {dimension_numbers = #tpu.dot_dimension_numbers<[1], [0], [0], [1], [0, 0, 1, 1], [], []>} : vector<64x64xf32>, vector<64x128xf32>, vector<64x128xf32> -> vector<64x128xf32>
    %128 = arith.addf %121, %127 : vector<64x128xf32>
    %c15_85 = arith.constant 15 : index
    %c0_86 = arith.constant 0 : index
    %129 = vector.load %arg12[%c15_85, %c0_86] : memref<96x64xf32, #tpu.memory_space<vmem>>, vector<64x64xf32>
    %130 = vector.broadcast %20 : vector<64x1xf32> to vector<64x64xf32>
    %131 = arith.mulf %129, %130 : vector<64x64xf32>
    %c3_87 = arith.constant 3 : index
    %c0_88 = arith.constant 0 : index
    %c0_89 = arith.constant 0 : index
    %132 = vector.load %arg6[%c3_87, %c0_88, %c0_89] : memref<9x64x128xf32, #tpu.memory_space<vmem>>, vector<1x64x128xf32>
    %133 = vector.shape_cast %132 : vector<1x64x128xf32> to vector<64x128xf32>
    %cst_90 = arith.constant dense<0.000000e+00> : vector<64x128xf32>
    %134 = tpu.matmul %131, %133, %cst_90 {dimension_numbers = #tpu.dot_dimension_numbers<[1], [0], [0], [1], [0, 0, 1, 1], [], []>} : vector<64x64xf32>, vector<64x128xf32>, vector<64x128xf32> -> vector<64x128xf32>
    %135 = arith.addf %128, %134 : vector<64x128xf32>
    %c16_91 = arith.constant 16 : index
    %c0_92 = arith.constant 0 : index
    %136 = vector.load %arg12[%c16_91, %c0_92] : memref<96x64xf32, #tpu.memory_space<vmem>>, vector<64x64xf32>
    %c4_93 = arith.constant 4 : index
    %c0_94 = arith.constant 0 : index
    %c0_95 = arith.constant 0 : index
    %137 = vector.load %arg6[%c4_93, %c0_94, %c0_95] : memref<9x64x128xf32, #tpu.memory_space<vmem>>, vector<1x64x128xf32>
    %138 = vector.shape_cast %137 : vector<1x64x128xf32> to vector<64x128xf32>
    %cst_96 = arith.constant dense<0.000000e+00> : vector<64x128xf32>
    %139 = tpu.matmul %136, %138, %cst_96 {dimension_numbers = #tpu.dot_dimension_numbers<[1], [0], [0], [1], [0, 0, 1, 1], [], []>} : vector<64x64xf32>, vector<64x128xf32>, vector<64x128xf32> -> vector<64x128xf32>
    %140 = arith.addf %135, %139 : vector<64x128xf32>
    %c17_97 = arith.constant 17 : index
    %c0_98 = arith.constant 0 : index
    %141 = vector.load %arg12[%c17_97, %c0_98] : memref<96x64xf32, #tpu.memory_space<vmem>>, vector<64x64xf32>
    %142 = vector.broadcast %24 : vector<64x1xf32> to vector<64x64xf32>
    %143 = arith.mulf %141, %142 : vector<64x64xf32>
    %c5_99 = arith.constant 5 : index
    %c0_100 = arith.constant 0 : index
    %c0_101 = arith.constant 0 : index
    %144 = vector.load %arg6[%c5_99, %c0_100, %c0_101] : memref<9x64x128xf32, #tpu.memory_space<vmem>>, vector<1x64x128xf32>
    %145 = vector.shape_cast %144 : vector<1x64x128xf32> to vector<64x128xf32>
    %cst_102 = arith.constant dense<0.000000e+00> : vector<64x128xf32>
    %146 = tpu.matmul %143, %145, %cst_102 {dimension_numbers = #tpu.dot_dimension_numbers<[1], [0], [0], [1], [0, 0, 1, 1], [], []>} : vector<64x64xf32>, vector<64x128xf32>, vector<64x128xf32> -> vector<64x128xf32>
    %147 = arith.addf %140, %146 : vector<64x128xf32>
    %c23_103 = arith.constant 23 : index
    %c0_104 = arith.constant 0 : index
    %148 = vector.load %arg12[%c23_103, %c0_104] : memref<96x64xf32, #tpu.memory_space<vmem>>, vector<64x64xf32>
    %149 = vector.broadcast %20 : vector<64x1xf32> to vector<64x64xf32>
    %150 = arith.mulf %148, %149 : vector<64x64xf32>
    %c6_105 = arith.constant 6 : index
    %c0_106 = arith.constant 0 : index
    %c0_107 = arith.constant 0 : index
    %151 = vector.load %arg6[%c6_105, %c0_106, %c0_107] : memref<9x64x128xf32, #tpu.memory_space<vmem>>, vector<1x64x128xf32>
    %152 = vector.shape_cast %151 : vector<1x64x128xf32> to vector<64x128xf32>
    %cst_108 = arith.constant dense<0.000000e+00> : vector<64x128xf32>
    %153 = tpu.matmul %150, %152, %cst_108 {dimension_numbers = #tpu.dot_dimension_numbers<[1], [0], [0], [1], [0, 0, 1, 1], [], []>} : vector<64x64xf32>, vector<64x128xf32>, vector<64x128xf32> -> vector<64x128xf32>
    %154 = arith.addf %147, %153 : vector<64x128xf32>
    %c24_109 = arith.constant 24 : index
    %c0_110 = arith.constant 0 : index
    %155 = vector.load %arg12[%c24_109, %c0_110] : memref<96x64xf32, #tpu.memory_space<vmem>>, vector<64x64xf32>
    %c7_111 = arith.constant 7 : index
    %c0_112 = arith.constant 0 : index
    %c0_113 = arith.constant 0 : index
    %156 = vector.load %arg6[%c7_111, %c0_112, %c0_113] : memref<9x64x128xf32, #tpu.memory_space<vmem>>, vector<1x64x128xf32>
    %157 = vector.shape_cast %156 : vector<1x64x128xf32> to vector<64x128xf32>
    %cst_114 = arith.constant dense<0.000000e+00> : vector<64x128xf32>
    %158 = tpu.matmul %155, %157, %cst_114 {dimension_numbers = #tpu.dot_dimension_numbers<[1], [0], [0], [1], [0, 0, 1, 1], [], []>} : vector<64x64xf32>, vector<64x128xf32>, vector<64x128xf32> -> vector<64x128xf32>
    %159 = arith.addf %154, %158 : vector<64x128xf32>
    %c25_115 = arith.constant 25 : index
    %c0_116 = arith.constant 0 : index
    %160 = vector.load %arg12[%c25_115, %c0_116] : memref<96x64xf32, #tpu.memory_space<vmem>>, vector<64x64xf32>
    %161 = vector.broadcast %24 : vector<64x1xf32> to vector<64x64xf32>
    %162 = arith.mulf %160, %161 : vector<64x64xf32>
    %c8_117 = arith.constant 8 : index
    %c0_118 = arith.constant 0 : index
    %c0_119 = arith.constant 0 : index
    %163 = vector.load %arg6[%c8_117, %c0_118, %c0_119] : memref<9x64x128xf32, #tpu.memory_space<vmem>>, vector<1x64x128xf32>
    %164 = vector.shape_cast %163 : vector<1x64x128xf32> to vector<64x128xf32>
    %cst_120 = arith.constant dense<0.000000e+00> : vector<64x128xf32>
    %165 = tpu.matmul %162, %164, %cst_120 {dimension_numbers = #tpu.dot_dimension_numbers<[1], [0], [0], [1], [0, 0, 1, 1], [], []>} : vector<64x64xf32>, vector<64x128xf32>, vector<64x128xf32> -> vector<64x128xf32>
    %166 = arith.addf %159, %165 : vector<64x128xf32>
    %c0_121 = arith.constant 0 : index
    %c0_122 = arith.constant 0 : index
    %167 = vector.load %arg7[%c0_121, %c0_122] : memref<1x128xf32, #tpu.memory_space<vmem>>, vector<1x128xf32>
    %168 = vector.broadcast %167 : vector<1x128xf32> to vector<64x128xf32>
    %169 = arith.addf %166, %168 : vector<64x128xf32>
    %cst_123 = arith.constant 0.000000e+00 : f32
    %170 = vector.broadcast %cst_123 : f32 to vector<64x128xf32>
    %171 = arith.cmpf ogt, %169, %170 : vector<64x128xf32>
    %cst_124 = arith.constant 2.000000e-01 : f32
    %172 = vector.broadcast %cst_124 : f32 to vector<64x128xf32>
    %173 = arith.mulf %172, %169 : vector<64x128xf32>
    %174 = arith.select %171, %169, %173 : vector<64x128xi1>, vector<64x128xf32>
    %cst_125 = arith.constant 0.000000e+00 : f32
    %175 = vector.broadcast %cst_125 : f32 to vector<96x128xf32>
    %c0_126 = arith.constant 0 : index
    %c0_127 = arith.constant 0 : index
    %176 = vector.load %arg13[%c0_126, %c0_127] : memref<96x128xf32, #tpu.memory_space<vmem>>, vector<96x128xf32>
    tpu.vector_store %arg13[%c0_126, %c0_127], %175 {strides = array<i32>} : memref<96x128xf32, #tpu.memory_space<vmem>>, vector<96x128xf32>,
    %c16_128 = arith.constant 16 : index
    %c0_129 = arith.constant 0 : index
    %177 = vector.load %arg13[%c16_128, %c0_129] : memref<96x128xf32, #tpu.memory_space<vmem>>, vector<64x128xf32>
    tpu.vector_store %arg13[%c16_128, %c0_129], %174 {strides = array<i32>} : memref<96x128xf32, #tpu.memory_space<vmem>>, vector<64x128xf32>,
    %cst_130 = arith.constant 0.000000e+00 : f32
    %178 = vector.broadcast %cst_130 : f32 to vector<64x1xf32>
    %c7_131 = arith.constant 7 : index
    %c0_132 = arith.constant 0 : index
    %179 = vector.load %arg13[%c7_131, %c0_132] : memref<96x128xf32, #tpu.memory_space<vmem>>, vector<64x128xf32>
    %180 = vector.broadcast %20 : vector<64x1xf32> to vector<64x128xf32>
    %181 = arith.mulf %179, %180 : vector<64x128xf32>
    %c0_133 = arith.constant 0 : index
    %c0_134 = arith.constant 0 : index
    %c0_135 = arith.constant 0 : index
    %182 = vector.load %arg8[%c0_133, %c0_134, %c0_135] : memref<9x128x1xf32, #tpu.memory_space<vmem>>, vector<1x128x1xf32>
    %183 = vector.shape_cast %182 : vector<1x128x1xf32> to vector<128x1xf32>
    %cst_136 = arith.constant dense<0.000000e+00> : vector<64x1xf32>
    %184 = tpu.matmul %181, %183, %cst_136 {dimension_numbers = #tpu.dot_dimension_numbers<[1], [0], [0], [1], [0, 0, 1, 1], [], []>} : vector<64x128xf32>, vector<128x1xf32>, vector<64x1xf32> -> vector<64x1xf32>
    %185 = arith.addf %178, %184 : vector<64x1xf32>
    %c8_137 = arith.constant 8 : index
    %c0_138 = arith.constant 0 : index
    %186 = vector.load %arg13[%c8_137, %c0_138] : memref<96x128xf32, #tpu.memory_space<vmem>>, vector<64x128xf32>
    %c1_139 = arith.constant 1 : index
    %c0_140 = arith.constant 0 : index
    %c0_141 = arith.constant 0 : index
    %187 = vector.load %arg8[%c1_139, %c0_140, %c0_141] : memref<9x128x1xf32, #tpu.memory_space<vmem>>, vector<1x128x1xf32>
    %188 = vector.shape_cast %187 : vector<1x128x1xf32> to vector<128x1xf32>
    %cst_142 = arith.constant dense<0.000000e+00> : vector<64x1xf32>
    %189 = tpu.matmul %186, %188, %cst_142 {dimension_numbers = #tpu.dot_dimension_numbers<[1], [0], [0], [1], [0, 0, 1, 1], [], []>} : vector<64x128xf32>, vector<128x1xf32>, vector<64x1xf32> -> vector<64x1xf32>
    %190 = arith.addf %185, %189 : vector<64x1xf32>
    %c9_143 = arith.constant 9 : index
    %c0_144 = arith.constant 0 : index
    %191 = vector.load %arg13[%c9_143, %c0_144] : memref<96x128xf32, #tpu.memory_space<vmem>>, vector<64x128xf32>
    %192 = vector.broadcast %24 : vector<64x1xf32> to vector<64x128xf32>
    %193 = arith.mulf %191, %192 : vector<64x128xf32>
    %c2_145 = arith.constant 2 : index
    %c0_146 = arith.constant 0 : index
    %c0_147 = arith.constant 0 : index
    %194 = vector.load %arg8[%c2_145, %c0_146, %c0_147] : memref<9x128x1xf32, #tpu.memory_space<vmem>>, vector<1x128x1xf32>
    %195 = vector.shape_cast %194 : vector<1x128x1xf32> to vector<128x1xf32>
    %cst_148 = arith.constant dense<0.000000e+00> : vector<64x1xf32>
    %196 = tpu.matmul %193, %195, %cst_148 {dimension_numbers = #tpu.dot_dimension_numbers<[1], [0], [0], [1], [0, 0, 1, 1], [], []>} : vector<64x128xf32>, vector<128x1xf32>, vector<64x1xf32> -> vector<64x1xf32>
    %197 = arith.addf %190, %196 : vector<64x1xf32>
    %c15_149 = arith.constant 15 : index
    %c0_150 = arith.constant 0 : index
    %198 = vector.load %arg13[%c15_149, %c0_150] : memref<96x128xf32, #tpu.memory_space<vmem>>, vector<64x128xf32>
    %199 = vector.broadcast %20 : vector<64x1xf32> to vector<64x128xf32>
    %200 = arith.mulf %198, %199 : vector<64x128xf32>
    %c3_151 = arith.constant 3 : index
    %c0_152 = arith.constant 0 : index
    %c0_153 = arith.constant 0 : index
    %201 = vector.load %arg8[%c3_151, %c0_152, %c0_153] : memref<9x128x1xf32, #tpu.memory_space<vmem>>, vector<1x128x1xf32>
    %202 = vector.shape_cast %201 : vector<1x128x1xf32> to vector<128x1xf32>
    %cst_154 = arith.constant dense<0.000000e+00> : vector<64x1xf32>
    %203 = tpu.matmul %200, %202, %cst_154 {dimension_numbers = #tpu.dot_dimension_numbers<[1], [0], [0], [1], [0, 0, 1, 1], [], []>} : vector<64x128xf32>, vector<128x1xf32>, vector<64x1xf32> -> vector<64x1xf32>
    %204 = arith.addf %197, %203 : vector<64x1xf32>
    %c16_155 = arith.constant 16 : index
    %c0_156 = arith.constant 0 : index
    %205 = vector.load %arg13[%c16_155, %c0_156] : memref<96x128xf32, #tpu.memory_space<vmem>>, vector<64x128xf32>
    %c4_157 = arith.constant 4 : index
    %c0_158 = arith.constant 0 : index
    %c0_159 = arith.constant 0 : index
    %206 = vector.load %arg8[%c4_157, %c0_158, %c0_159] : memref<9x128x1xf32, #tpu.memory_space<vmem>>, vector<1x128x1xf32>
    %207 = vector.shape_cast %206 : vector<1x128x1xf32> to vector<128x1xf32>
    %cst_160 = arith.constant dense<0.000000e+00> : vector<64x1xf32>
    %208 = tpu.matmul %205, %207, %cst_160 {dimension_numbers = #tpu.dot_dimension_numbers<[1], [0], [0], [1], [0, 0, 1, 1], [], []>} : vector<64x128xf32>, vector<128x1xf32>, vector<64x1xf32> -> vector<64x1xf32>
    %209 = arith.addf %204, %208 : vector<64x1xf32>
    %c17_161 = arith.constant 17 : index
    %c0_162 = arith.constant 0 : index
    %210 = vector.load %arg13[%c17_161, %c0_162] : memref<96x128xf32, #tpu.memory_space<vmem>>, vector<64x128xf32>
    %211 = vector.broadcast %24 : vector<64x1xf32> to vector<64x128xf32>
    %212 = arith.mulf %210, %211 : vector<64x128xf32>
    %c5_163 = arith.constant 5 : index
    %c0_164 = arith.constant 0 : index
    %c0_165 = arith.constant 0 : index
    %213 = vector.load %arg8[%c5_163, %c0_164, %c0_165] : memref<9x128x1xf32, #tpu.memory_space<vmem>>, vector<1x128x1xf32>
    %214 = vector.shape_cast %213 : vector<1x128x1xf32> to vector<128x1xf32>
    %cst_166 = arith.constant dense<0.000000e+00> : vector<64x1xf32>
    %215 = tpu.matmul %212, %214, %cst_166 {dimension_numbers = #tpu.dot_dimension_numbers<[1], [0], [0], [1], [0, 0, 1, 1], [], []>} : vector<64x128xf32>, vector<128x1xf32>, vector<64x1xf32> -> vector<64x1xf32>
    %216 = arith.addf %209, %215 : vector<64x1xf32>
    %c23_167 = arith.constant 23 : index
    %c0_168 = arith.constant 0 : index
    %217 = vector.load %arg13[%c23_167, %c0_168] : memref<96x128xf32, #tpu.memory_space<vmem>>, vector<64x128xf32>
    %218 = vector.broadcast %20 : vector<64x1xf32> to vector<64x128xf32>
    %219 = arith.mulf %217, %218 : vector<64x128xf32>
    %c6_169 = arith.constant 6 : index
    %c0_170 = arith.constant 0 : index
    %c0_171 = arith.constant 0 : index
    %220 = vector.load %arg8[%c6_169, %c0_170, %c0_171] : memref<9x128x1xf32, #tpu.memory_space<vmem>>, vector<1x128x1xf32>
    %221 = vector.shape_cast %220 : vector<1x128x1xf32> to vector<128x1xf32>
    %cst_172 = arith.constant dense<0.000000e+00> : vector<64x1xf32>
    %222 = tpu.matmul %219, %221, %cst_172 {dimension_numbers = #tpu.dot_dimension_numbers<[1], [0], [0], [1], [0, 0, 1, 1], [], []>} : vector<64x128xf32>, vector<128x1xf32>, vector<64x1xf32> -> vector<64x1xf32>
    %223 = arith.addf %216, %222 : vector<64x1xf32>
    %c24_173 = arith.constant 24 : index
    %c0_174 = arith.constant 0 : index
    %224 = vector.load %arg13[%c24_173, %c0_174] : memref<96x128xf32, #tpu.memory_space<vmem>>, vector<64x128xf32>
    %c7_175 = arith.constant 7 : index
    %c0_176 = arith.constant 0 : index
    %c0_177 = arith.constant 0 : index
    %225 = vector.load %arg8[%c7_175, %c0_176, %c0_177] : memref<9x128x1xf32, #tpu.memory_space<vmem>>, vector<1x128x1xf32>
    %226 = vector.shape_cast %225 : vector<1x128x1xf32> to vector<128x1xf32>
    %cst_178 = arith.constant dense<0.000000e+00> : vector<64x1xf32>
    %227 = tpu.matmul %224, %226, %cst_178 {dimension_numbers = #tpu.dot_dimension_numbers<[1], [0], [0], [1], [0, 0, 1, 1], [], []>} : vector<64x128xf32>, vector<128x1xf32>, vector<64x1xf32> -> vector<64x1xf32>
    %228 = arith.addf %223, %227 : vector<64x1xf32>
    %c25_179 = arith.constant 25 : index
    %c0_180 = arith.constant 0 : index
    %229 = vector.load %arg13[%c25_179, %c0_180] : memref<96x128xf32, #tpu.memory_space<vmem>>, vector<64x128xf32>
    %230 = vector.broadcast %24 : vector<64x1xf32> to vector<64x128xf32>
    %231 = arith.mulf %229, %230 : vector<64x128xf32>
    %c8_181 = arith.constant 8 : index
    %c0_182 = arith.constant 0 : index
    %c0_183 = arith.constant 0 : index
    %232 = vector.load %arg8[%c8_181, %c0_182, %c0_183] : memref<9x128x1xf32, #tpu.memory_space<vmem>>, vector<1x128x1xf32>
    %233 = vector.shape_cast %232 : vector<1x128x1xf32> to vector<128x1xf32>
    %cst_184 = arith.constant dense<0.000000e+00> : vector<64x1xf32>
    %234 = tpu.matmul %231, %233, %cst_184 {dimension_numbers = #tpu.dot_dimension_numbers<[1], [0], [0], [1], [0, 0, 1, 1], [], []>} : vector<64x128xf32>, vector<128x1xf32>, vector<64x1xf32> -> vector<64x1xf32>
    %235 = arith.addf %228, %234 : vector<64x1xf32>
    %c0_185 = arith.constant 0 : index
    %c0_186 = arith.constant 0 : index
    %236 = vector.load %arg9[%c0_185, %c0_186] : memref<1x1xf32, #tpu.memory_space<vmem>>, vector<1x1xf32>
    %237 = vector.broadcast %236 : vector<1x1xf32> to vector<64x1xf32>
    %238 = arith.addf %235, %237 : vector<64x1xf32>
    %c0_187 = arith.constant 0 : index
    %c0_188 = arith.constant 0 : index
    %c0_189 = arith.constant 0 : index
    %239 = vector.load %arg10[%c0_187, %c0_188, %c0_189] : memref<1x64x1xf32, #tpu.memory_space<vmem>>, vector<1x64x1xf32>
    %240 = vector.shape_cast %239 : vector<1x64x1xf32> to vector<64x1xf32>
    %241 = vector.shape_cast %238 : vector<64x1xf32> to vector<1x64x1xf32>
    tpu.vector_store %arg10[%c0_187, %c0_188, %c0_189], %241 {strides = array<i32>} : memref<1x64x1xf32, #tpu.memory_space<vmem>>, vector<1x64x1xf32>,
    return
  }
  func.func @transform_0(%arg0: i32) -> (i32, i32, i32) {
    %c0_i32 = arith.constant 0 : i32
    %c0_i32_0 = arith.constant 0 : i32
    %c0_i32_1 = arith.constant 0 : i32
    return %arg0, %c0_i32, %c0_i32_0 : i32, i32, i32
  }
  func.func @transform_1(%arg0: i32) -> (i32, i32) {
    %c0_i32 = arith.constant 0 : i32
    %c0_i32_0 = arith.constant 0 : i32
    %c0_i32_1 = arith.constant 0 : i32
    return %c0_i32, %c0_i32_0 : i32, i32
  }
  func.func @transform_2(%arg0: i32) -> (i32, i32) {
    %c0_i32 = arith.constant 0 : i32
    %c0_i32_0 = arith.constant 0 : i32
    %c0_i32_1 = arith.constant 0 : i32
    return %c0_i32, %c0_i32_0 : i32, i32
  }
  func.func @transform_3(%arg0: i32) -> (i32, i32, i32) {
    %c0_i32 = arith.constant 0 : i32
    %c0_i32_0 = arith.constant 0 : i32
    %c0_i32_1 = arith.constant 0 : i32
    %c0_i32_2 = arith.constant 0 : i32
    return %c0_i32, %c0_i32_0, %c0_i32_1 : i32, i32, i32
  }
  func.func @transform_4(%arg0: i32) -> (i32, i32) {
    %c0_i32 = arith.constant 0 : i32
    %c0_i32_0 = arith.constant 0 : i32
    %c0_i32_1 = arith.constant 0 : i32
    return %c0_i32, %c0_i32_0 : i32, i32
  }
  func.func @transform_5(%arg0: i32) -> (i32, i32, i32) {
    %c0_i32 = arith.constant 0 : i32
    %c0_i32_0 = arith.constant 0 : i32
    %c0_i32_1 = arith.constant 0 : i32
    %c0_i32_2 = arith.constant 0 : i32
    return %c0_i32, %c0_i32_0, %c0_i32_1 : i32, i32, i32
  }
  func.func @transform_6(%arg0: i32) -> (i32, i32) {
    %c0_i32 = arith.constant 0 : i32
    %c0_i32_0 = arith.constant 0 : i32
    %c0_i32_1 = arith.constant 0 : i32
    return %c0_i32, %c0_i32_0 : i32, i32
  }
  func.func @transform_7(%arg0: i32) -> (i32, i32, i32) {
    %c0_i32 = arith.constant 0 : i32
    %c0_i32_0 = arith.constant 0 : i32
    %c0_i32_1 = arith.constant 0 : i32
    %c0_i32_2 = arith.constant 0 : i32
    return %c0_i32, %c0_i32_0, %c0_i32_1 : i32, i32, i32
  }
  func.func @transform_8(%arg0: i32) -> (i32, i32) {
    %c0_i32 = arith.constant 0 : i32
    %c0_i32_0 = arith.constant 0 : i32
    %c0_i32_1 = arith.constant 0 : i32
    return %c0_i32, %c0_i32_0 : i32, i32
  }
  func.func @transform_9(%arg0: i32) -> (i32, i32, i32) {
    %c0_i32 = arith.constant 0 : i32
    %c0_i32_0 = arith.constant 0 : i32
    %c0_i32_1 = arith.constant 0 : i32
    return %arg0, %c0_i32, %c0_i32_0 : i32, i32, i32
  }
}

</mosaic_0001>

<llo_original>
// kernel: small_patch_discriminator.1
$region0: #{small_patch_discriminator.1}
  #allocation0 [shape = 'u32[]', space=smem, size = 0x4, offset = 0x4, fixed_abs, tag = 'smem constant byte address 0x4 - core index']
  #allocation1 [shape = 'u32[144,128]{1,0:T(1,128)}', space=vmem, size = 0x12000, scoped, tag = 'internal scratch']
  #allocation2 [shape = 'f32[96,32]{1,0:T(8,128)}', space=vmem, size = 0xc000, scoped, tag = 'scratch operand']
  #allocation3 [shape = 'f32[96,64]{1,0:T(8,128)}', space=vmem, size = 0xc000, scoped, tag = 'scratch operand']
  #allocation4 [shape = 'f32[96,128]{1,0:T(8,128)}', space=vmem, size = 0xc000, scoped, tag = 'scratch operand']
  #allocation5 [shape = 'f32[1,1]{1,0:T(1,128)S(1)}', space=vmem, size = 0x200, scoped, tag = 'scoped memory for small_patch_discriminator.1']
  %s0 = inlined_call_operand.vmem [shape: f32[2,64,36], index: 0, kind: input, shape index: {}]
  %s1 = inlined_call_operand.vmem [shape: f32[36,32], index: 1, kind: input, shape index: {}]
  %s2 = inlined_call_operand.vmem [shape: f32[1,32], index: 2, kind: input, shape index: {}]
  %s3 = inlined_call_operand.vmem [shape: f32[9,32,64], index: 3, kind: input, shape index: {}]
  %s4 = inlined_call_operand.vmem [shape: f32[1,64], index: 4, kind: input, shape index: {}]
  %s5 = inlined_call_operand.vmem [shape: f32[9,64,128], index: 5, kind: input, shape index: {}]
  %s6 = inlined_call_operand.vmem [shape: f32[1,128], index: 6, kind: input, shape index: {}]
  %s7 = inlined_call_operand.vmem [shape: f32[9,128,1], index: 7, kind: input, shape index: {}]
  %s8 = inlined_call_operand.<no memory space> [shape: f32[1,1], index: 8, kind: input, shape index: {}]
  %s9 = inlined_call_operand.vmem [shape: f32[2,64,1], index: 9, kind: output, shape index: {}]
  %s10 = sld [smem:[#allocation0]]
  $region69: #{small_patch_discriminator.1} parent=0
    _
  %s12 = ssub.s32 1, %s10
  %s13 = scalar_select 0, %s12, %s10
  %v14 = vstv %s8
  %15 = vst [vmem:[#allocation5] sm:$0x1] %v14
  loop: start=0, step=1, limit=4
  $region2: #{small_patch_discriminator.1} parent=0 // loop_pre_header
    _
  $region3: #{small_patch_discriminator.1} parent=0 // loop_header
    %s17 = sphi 0, %s21
    %p18 = scmp.ge.s32.totalorder %s17, 4
    %s27 = sphi 0, %s29
    %s30 = sphi 0, %s27
    %s31 = sphi 0, %s30
    %s47 = sphi 0, %s31
    %s51 = sphi 0, %s51
    %s53 = sphi 0, %s51
    %s54 = sphi 0, %s53
    %s68 = sphi 0, %s54
    %s72 = sphi 0, %s72
    %s74 = sphi 0, %s72
    %s75 = sphi 0, %s74
    %s89 = sphi 0, %s75
    %s93 = sphi 0, %s93
    %s95 = sphi 0, %s93
    %s96 = sphi 0, %s95
    %s110 = sphi 0, %s96
    %s114 = sphi 0, %s114
    %s116 = sphi 0, %s114
    %s117 = sphi 0, %s116
    %s131 = sphi 0, %s117
    %s135 = sphi 0, %s135
    %s137 = sphi 0, %s135
    %s138 = sphi 0, %s137
    %s152 = sphi 0, %s138
    %s156 = sphi 0, %s156
    %s158 = sphi 0, %s156
    %s159 = sphi 0, %s158
    %s173 = sphi 0, %s159
    %s177 = sphi 0, %s177
    %s179 = sphi 0, %s177
    %s180 = sphi 0, %s179
    %s194 = sphi 0, %s180
    %s198 = sphi 0, %s198
    %s200 = sphi 0, %s198
    %s201 = sphi 0, %s200
    %s215 = sphi 0, %s201
    %s221 = sphi 0, %s223
    %s224 = sphi 0, %s221
    %s225 = sphi 0, %s224
    %s241 = sphi 0, %s225
  $region4: #{small_patch_discriminator.1} parent=0 // loop_header_branch
    %20 = sbr.rel (%p18) target = $region8
  $region5: #{small_patch_discriminator.1} parent=0 // loop_body
    %s22 = ssub.s32 %s17, 1
    %s23 = ssub.s32 %s17, 2
    %s24 = sadd.s32 %s17, 1
    %s25 = ssub.s32 %s17, %s24
    %p26 = scmp.eq.s32.totalorder %s25, 0
    %s28 = sadd.s32 %s27, 1
    %s29 = scalar_select %p26, %s27, %s28
    %p32 = pneg %p26
    %p33 = scmp.eq.s32.totalorder %s17, 1
    %p34 = por %p32, %p33
    %p35 = scmp.ne.s32.totalorder %s27, %s30
    %p36 = scmp.eq.s32.totalorder %s17, 0
    %p37 = por %p35, %p36
    %p38 = scmp.ne.s32.totalorder %s27, %s30
    %p39 = scmp.eq.s32.totalorder %s22, 1
    %p40 = por %p38, %p39
    %p41 = scmp.ne.s32.totalorder %s30, %s31
    %p42 = scmp.eq.s32.totalorder %s22, 0
    %p43 = por %p41, %p42
    %p44 = scmp.ne.s32.totalorder %s30, %s31
    %p45 = scmp.eq.s32.totalorder %s23, 1
    %p46 = por %p44, %p45
    %p48 = scmp.ne.s32.totalorder %s31, %s47
    %p49 = scmp.eq.s32.totalorder %s23, 0
    %p50 = por %p48, %p49
    %s52 = sadd.s32 %s51, 1
    %p55 = scmp.eq.s32.totalorder %s17, 1
    %p56 = scmp.ne.s32.totalorder %s51, %s53
    %p57 = scmp.eq.s32.totalorder %s17, 0
    %p58 = por %p56, %p57
    %p59 = scmp.ne.s32.totalorder %s51, %s53
    %p60 = scmp.eq.s32.totalorder %s22, 1
    %p61 = por %p59, %p60
    %p62 = scmp.ne.s32.totalorder %s53, %s54
    %p63 = scmp.eq.s32.totalorder %s22, 0
    %p64 = por %p62, %p63
    %p65 = scmp.ne.s32.totalorder %s53, %s54
    %p66 = scmp.eq.s32.totalorder %s23, 1
    %p67 = por %p65, %p66
    %p69 = scmp.ne.s32.totalorder %s54, %s68
    %p70 = scmp.eq.s32.totalorder %s23, 0
    %p71 = por %p69, %p70
    %s73 = sadd.s32 %s72, 1
    %p76 = scmp.eq.s32.totalorder %s17, 1
    %p77 = scmp.ne.s32.totalorder %s72, %s74
    %p78 = scmp.eq.s32.totalorder %s17, 0
    %p79 = por %p77, %p78
    %p80 = scmp.ne.s32.totalorder %s72, %s74
    %p81 = scmp.eq.s32.totalorder %s22, 1
    %p82 = por %p80, %p81
    %p83 = scmp.ne.s32.totalorder %s74, %s75
    %p84 = scmp.eq.s32.totalorder %s22, 0
    %p85 = por %p83, %p84
    %p86 = scmp.ne.s32.totalorder %s74, %s75
    %p87 = scmp.eq.s32.totalorder %s23, 1
    %p88 = por %p86, %p87
    %p90 = scmp.ne.s32.totalorder %s75, %s89
    %p91 = scmp.eq.s32.totalorder %s23, 0
    %p92 = por %p90, %p91
    %s94 = sadd.s32 %s93, 1
    %p97 = scmp.eq.s32.totalorder %s17, 1
    %p98 = scmp.ne.s32.totalorder %s93, %s95
    %p99 = scmp.eq.s32.totalorder %s17, 0
    %p100 = por %p98, %p99
    %p101 = scmp.ne.s32.totalorder %s93, %s95
    %p102 = scmp.eq.s32.totalorder %s22, 1
    %p103 = por %p101, %p102
    %p104 = scmp.ne.s32.totalorder %s95, %s96
    %p105 = scmp.eq.s32.totalorder %s22, 0
    %p106 = por %p104, %p105
    %p107 = scmp.ne.s32.totalorder %s95, %s96
    %p108 = scmp.eq.s32.totalorder %s23, 1
    %p109 = por %p107, %p108
    %p111 = scmp.ne.s32.totalorder %s96, %s110
    %p112 = scmp.eq.s32.totalorder %s23, 0
    %p113 = por %p111, %p112
    %s115 = sadd.s32 %s114, 1
    %p118 = scmp.eq.s32.totalorder %s17, 1
    %p119 = scmp.ne.s32.totalorder %s114, %s116
    %p120 = scmp.eq.s32.totalorder %s17, 0
    %p121 = por %p119, %p120
    %p122 = scmp.ne.s32.totalorder %s114, %s116
    %p123 = scmp.eq.s32.totalorder %s22, 1
    %p124 = por %p122, %p123
    %p125 = scmp.ne.s32.totalorder %s116, %s117
    %p126 = scmp.eq.s32.totalorder %s22, 0
    %p127 = por %p125, %p126
    %p128 = scmp.ne.s32.totalorder %s116, %s117
    %p129 = scmp.eq.s32.totalorder %s23, 1
    %p130 = por %p128, %p129
    %p132 = scmp.ne.s32.totalorder %s117, %s131
    %p133 = scmp.eq.s32.totalorder %s23, 0
    %p134 = por %p132, %p133
    %s136 = sadd.s32 %s135, 1
    %p139 = scmp.eq.s32.totalorder %s17, 1
    %p140 = scmp.ne.s32.totalorder %s135, %s137
    %p141 = scmp.eq.s32.totalorder %s17, 0
    %p142 = por %p140, %p141
    %p143 = scmp.ne.s32.totalorder %s135, %s137
    %p144 = scmp.eq.s32.totalorder %s22, 1
    %p145 = por %p143, %p144
    %p146 = scmp.ne.s32.totalorder %s137, %s138
    %p147 = scmp.eq.s32.totalorder %s22, 0
    %p148 = por %p146, %p147
    %p149 = scmp.ne.s32.totalorder %s137, %s138
    %p150 = scmp.eq.s32.totalorder %s23, 1
    %p151 = por %p149, %p150
    %p153 = scmp.ne.s32.totalorder %s138, %s152
    %p154 = scmp.eq.s32.totalorder %s23, 0
    %p155 = por %p153, %p154
    %s157 = sadd.s32 %s156, 1
    %p160 = scmp.eq.s32.totalorder %s17, 1
    %p161 = scmp.ne.s32.totalorder %s156, %s158
    %p162 = scmp.eq.s32.totalorder %s17, 0
    %p163 = por %p161, %p162
    %p164 = scmp.ne.s32.totalorder %s156, %s158
    %p165 = scmp.eq.s32.totalorder %s22, 1
    %p166 = por %p164, %p165
    %p167 = scmp.ne.s32.totalorder %s158, %s159
    %p168 = scmp.eq.s32.totalorder %s22, 0
    %p169 = por %p167, %p168
    %p170 = scmp.ne.s32.totalorder %s158, %s159
    %p171 = scmp.eq.s32.totalorder %s23, 1
    %p172 = por %p170, %p171
    %p174 = scmp.ne.s32.totalorder %s159, %s173
    %p175 = scmp.eq.s32.totalorder %s23, 0
    %p176 = por %p174, %p175
    %s178 = sadd.s32 %s177, 1
    %p181 = scmp.eq.s32.totalorder %s17, 1
    %p182 = scmp.ne.s32.totalorder %s177, %s179
    %p183 = scmp.eq.s32.totalorder %s17, 0
    %p184 = por %p182, %p183
    %p185 = scmp.ne.s32.totalorder %s177, %s179
    %p186 = scmp.eq.s32.totalorder %s22, 1
    %p187 = por %p185, %p186
    %p188 = scmp.ne.s32.totalorder %s179, %s180
    %p189 = scmp.eq.s32.totalorder %s22, 0
    %p190 = por %p188, %p189
    %p191 = scmp.ne.s32.totalorder %s179, %s180
    %p192 = scmp.eq.s32.totalorder %s23, 1
    %p193 = por %p191, %p192
    %p195 = scmp.ne.s32.totalorder %s180, %s194
    %p196 = scmp.eq.s32.totalorder %s23, 0
    %p197 = por %p195, %p196
    %s199 = sadd.s32 %s198, 1
    %p202 = scmp.eq.s32.totalorder %s17, 1
    %p203 = scmp.ne.s32.totalorder %s198, %s200
    %p204 = scmp.eq.s32.totalorder %s17, 0
    %p205 = por %p203, %p204
    %p206 = scmp.ne.s32.totalorder %s198, %s200
    %p207 = scmp.eq.s32.totalorder %s22, 1
    %p208 = por %p206, %p207
    %p209 = scmp.ne.s32.totalorder %s200, %s201
    %p210 = scmp.eq.s32.totalorder %s22, 0
    %p211 = por %p209, %p210
    %p212 = scmp.ne.s32.totalorder %s200, %s201
    %p213 = scmp.eq.s32.totalorder %s23, 1
    %p214 = por %p212, %p213
    %p216 = scmp.ne.s32.totalorder %s201, %s215
    %p217 = scmp.eq.s32.totalorder %s23, 0
    %p218 = por %p216, %p217
    %s219 = ssub.s32 %s17, %s24
    %p220 = scmp.eq.s32.totalorder %s219, 0
    %s222 = sadd.s32 %s221, 1
    %s223 = scalar_select %p220, %s221, %s222
    %p226 = pneg %p220
    %p227 = scmp.eq.s32.totalorder %s17, 1
    %p228 = por %p226, %p227
    %p229 = scmp.ne.s32.totalorder %s221, %s224
    %p230 = scmp.eq.s32.totalorder %s17, 0
    %p231 = por %p229, %p230
    %p232 = scmp.ne.s32.totalorder %s221, %s224
    %p233 = scmp.eq.s32.totalorder %s22, 1
    %p234 = por %p232, %p233
    %p235 = scmp.ne.s32.totalorder %s224, %s225
    %p236 = scmp.eq.s32.totalorder %s22, 0
    %p237 = por %p235, %p236
    %p238 = scmp.ne.s32.totalorder %s224, %s225
    %p239 = scmp.eq.s32.totalorder %s23, 1
    %p240 = por %p238, %p239
    %p242 = scmp.ne.s32.totalorder %s225, %s241
    %p243 = scmp.eq.s32.totalorder %s23, 0
    %p244 = por %p242, %p243
    %p245 = scmp.le.s32.totalorder 1, %s17
    %p246 = scmp.lt.s32.totalorder %s17, 3
    %p247 = pnand %p245, %p246
    %p248 = pneg %p247
    // Predicated region
    $region9: #{small_patch_discriminator.1} parent=5 // pred_check
      _
    $region10: #{small_patch_discriminator.1} parent=5 // pred_check_branch
      %250 = sbr.rel (%p247) target = $region12
    $region11: #{small_patch_discriminator.1} parent=5 // pred_region
      %s251 = ssub.s32 %s17, 1
      // Predicated region
      $region13: #{small_patch_discriminator.1} parent=11 // pred_check
        %p252 = pneg %p64
      $region14: #{small_patch_discriminator.1} parent=11 // pred_check_branch
        %254 = sbr.rel (%p252) target = $region16
      $region15: #{small_patch_discriminator.1} parent=11 // pred_region
        _
      $region16: #{small_patch_discriminator.1} parent=11 // pred_fallthru
        _
      // Predicated region
      $region17: #{small_patch_discriminator.1} parent=11 // pred_check
        %p255 = pneg %p85
      $region18: #{small_patch_discriminator.1} parent=11 // pred_check_branch
        %257 = sbr.rel (%p255) target = $region20
      $region19: #{small_patch_discriminator.1} parent=11 // pred_region
        _
      $region20: #{small_patch_discriminator.1} parent=11 // pred_fallthru
        _
      // Predicated region
      $region21: #{small_patch_discriminator.1} parent=11 // pred_check
        %p258 = pneg %p106
      $region22: #{small_patch_discriminator.1} parent=11 // pred_check_branch
        %260 = sbr.rel (%p258) target = $region24
      $region23: #{small_patch_discriminator.1} parent=11 // pred_region
        _
      $region24: #{small_patch_discriminator.1} parent=11 // pred_fallthru
        _
      // Predicated region
      $region25: #{small_patch_discriminator.1} parent=11 // pred_check
        %p261 = pneg %p127
      $region26: #{small_patch_discriminator.1} parent=11 // pred_check_branch
        %263 = sbr.rel (%p261) target = $region28
      $region27: #{small_patch_discriminator.1} parent=11 // pred_region
        _
      $region28: #{small_patch_discriminator.1} parent=11 // pred_fallthru
        _
      // Predicated region
      $region29: #{small_patch_discriminator.1} parent=11 // pred_check
        %p264 = pneg %p148
      $region30: #{small_patch_discriminator.1} parent=11 // pred_check_branch
        %266 = sbr.rel (%p264) target = $region32
      $region31: #{small_patch_discriminator.1} parent=11 // pred_region
        _
      $region32: #{small_patch_discriminator.1} parent=11 // pred_fallthru
        _
      // Predicated region
      $region33: #{small_patch_discriminator.1} parent=11 // pred_check
        %p267 = pneg %p169
      $region34: #{small_patch_discriminator.1} parent=11 // pred_check_branch
        %269 = sbr.rel (%p267) target = $region36
      $region35: #{small_patch_discriminator.1} parent=11 // pred_region
        _
      $region36: #{small_patch_discriminator.1} parent=11 // pred_fallthru
        _
      // Predicated region
      $region37: #{small_patch_discriminator.1} parent=11 // pred_check
        %p270 = pneg %p190
      $region38: #{small_patch_discriminator.1} parent=11 // pred_check_branch
        %272 = sbr.rel (%p270) target = $region40
      $region39: #{small_patch_discriminator.1} parent=11 // pred_region
        _
      $region40: #{small_patch_discriminator.1} parent=11 // pred_fallthru
        _
      // Predicated region
      $region41: #{small_patch_discriminator.1} parent=11 // pred_check
        %p273 = pneg %p211
      $region42: #{small_patch_discriminator.1} parent=11 // pred_check_branch
        %275 = sbr.rel (%p273) target = $region44
      $region43: #{small_patch_discriminator.1} parent=11 // pred_region
        _
      $region44: #{small_patch_discriminator.1} parent=11 // pred_fallthru
        _
    $region12: #{small_patch_discriminator.1} parent=5 // pred_fallthru
      _
    %p276 = scmp.lt.s32.totalorder %s17, 2
    // Predicated region
    $region45: #{small_patch_discriminator.1} parent=5 // pred_check
      %p277 = pneg %p276
    $region46: #{small_patch_discriminator.1} parent=5 // pred_check_branch
      %279 = sbr.rel (%p277) target = $region48
    $region47: #{small_patch_discriminator.1} parent=5 // pred_region
      // Predicated region
      $region49: #{small_patch_discriminator.1} parent=47 // pred_check
        %p280 = pneg %p37
      $region50: #{small_patch_discriminator.1} parent=47 // pred_check_branch
        %282 = sbr.rel (%p280) target = $region52
      $region51: #{small_patch_discriminator.1} parent=47 // pred_region
        %p283 = scmp.lt.s32.totalorder %s17, 1
        %s284 = scalar_select %p283, %s17, 1
        %s285 = smul.addr %s284, 8
        %s286 = smul.addr %s285, 8
        %s287 = scalar_lea.vmem %s0, %s286
      $region52: #{small_patch_discriminator.1} parent=47 // pred_fallthru
        _
    $region48: #{small_patch_discriminator.1} parent=5 // pred_fallthru
      _
    %p288 = scmp.le.s32.totalorder 1, %s17
    %p289 = scmp.lt.s32.totalorder %s17, 3
    %p290 = pnand %p288, %p289
    %p291 = pneg %p290
    // Predicated region
    $region53: #{small_patch_discriminator.1} parent=5 // pred_check
      _
    $region54: #{small_patch_discriminator.1} parent=5 // pred_check_branch
      %293 = sbr.rel (%p290) target = $region56
    $region55: #{small_patch_discriminator.1} parent=5 // pred_region
      %s294 = ssub.s32 %s17, 1
      %p295 = scmp.lt.s32.totalorder %s22, 1
      %s296 = scalar_select %p295, %s22, 1
      %s297 = smul.addr %s296, 8
      %s298 = smul.addr %s297, 8
      %s299 = scalar_lea.vmem %s0, %s298
      %p300 = pneg %p43
      %p301 = pneg %p40
      %p302 = pneg %p64
      %p303 = pneg %p61
      %p304 = pneg %p85
      %p305 = pneg %p82
      %p306 = pneg %p106
      %p307 = pneg %p103
      %p308 = pneg %p127
      %p309 = pneg %p124
      %p310 = pneg %p148
      %p311 = pneg %p145
      %p312 = pneg %p169
      %p313 = pneg %p166
      %p314 = pneg %p190
      %p315 = pneg %p187
      %p316 = pneg %p211
      %p317 = pneg %p208
      %p318 = pneg %p237
      %p319 = pneg %p234
      %p320 = scmp.lt.s32.totalorder %s22, 1
      %s321 = scalar_select %p320, %s22, 1
      %s322 = smul.addr %s321, 8
      %s323 = smul.addr %s322, 8
      %s324 = scalar_lea.vmem %s9, %s323
      %p325 = scmp.lt.s32.totalorder %s22, 1
      %s326 = scalar_select %p325, %s22, 1
      %s327 = smul.addr %s326, 8
      %s328 = smul.addr %s327, 8
      %s329 = scalar_lea.vmem %s0, %s328
      %p330 = scmp.lt.s32.totalorder %s22, 1
      %s331 = scalar_select %p330, %s22, 1
      %s332 = smul.addr %s331, 8
      %s333 = smul.addr %s332, 8
      %s334 = scalar_lea.vmem %s9, %s333
      %v335 = vlaneseq
      %v336 = vshrl.u32 %v335, 7
      %v337 = vadd.s32 %v336, 8
      %v338 = vadd.s32 %v336, 16
      %v339 = vadd.s32 %v336, 24
      %v340 = vadd.s32 %v336, 32
      %v341 = vadd.s32 %v336, 40
      %v342 = vadd.s32 %v336, 48
      %v343 = vadd.s32 %v336, 56
      %vm344 = vcmp.lt.s32.totalorder %v336, 0
      %v345 = vsub.s32 0, %v336
      %v346 = vsel %vm344, %v345, %v336
      %v347 = vshrl.u32 %v346, 3
      %v348 = vand.u32 %v346, 7
      %v349 = vsub.s32 0, %v348
      %v350 = vsel %vm344, %v349, %v348
      %vm351 = vcmp.lt.s32.totalorder %v337, 0
      %v352 = vsub.s32 0, %v337
      %v353 = vsel %vm351, %v352, %v337
      %v354 = vshrl.u32 %v353, 3
      %v355 = vand.u32 %v353, 7
      %v356 = vsub.s32 0, %v355
      %v357 = vsel %vm351, %v356, %v355
      %vm358 = vcmp.lt.s32.totalorder %v338, 0
      %v359 = vsub.s32 0, %v338
      %v360 = vsel %vm358, %v359, %v338
      %v361 = vshrl.u32 %v360, 3
      %v362 = vand.u32 %v360, 7
      %v363 = vsub.s32 0, %v362
      %v364 = vsel %vm358, %v363, %v362
      %vm365 = vcmp.lt.s32.totalorder %v339, 0
      %v366 = vsub.s32 0, %v339
      %v367 = vsel %vm365, %v366, %v339
      %v368 = vshrl.u32 %v367, 3
      %v369 = vand.u32 %v367, 7
      %v370 = vsub.s32 0, %v369
      %v371 = vsel %vm365, %v370, %v369
      %vm372 = vcmp.lt.s32.totalorder %v340, 0
      %v373 = vsub.s32 0, %v340
      %v374 = vsel %vm372, %v373, %v340
      %v375 = vshrl.u32 %v374, 3
      %v376 = vand.u32 %v374, 7
      %v377 = vsub.s32 0, %v376
      %v378 = vsel %vm372, %v377, %v376
      %vm379 = vcmp.lt.s32.totalorder %v341, 0
      %v380 = vsub.s32 0, %v341
      %v381 = vsel %vm379, %v380, %v341
      %v382 = vshrl.u32 %v381, 3
      %v383 = vand.u32 %v381, 7
      %v384 = vsub.s32 0, %v383
      %v385 = vsel %vm379, %v384, %v383
      %vm386 = vcmp.lt.s32.totalorder %v342, 0
      %v387 = vsub.s32 0, %v342
      %v388 = vsel %vm386, %v387, %v342
      %v389 = vshrl.u32 %v388, 3
      %v390 = vand.u32 %v388, 7
      %v391 = vsub.s32 0, %v390
      %v392 = vsel %vm386, %v391, %v390
      %vm393 = vcmp.lt.s32.totalorder %v343, 0
      %v394 = vsub.s32 0, %v343
      %v395 = vsel %vm393, %v394, %v343
      %v396 = vshrl.u32 %v395, 3
      %v397 = vand.u32 %v395, 7
      %v398 = vsub.s32 0, %v397
      %v399 = vsel %vm393, %v398, %v397
      %vm400 = vcmp.ne.s32.totalorder %v350, 0
      %vm401 = vcmp.ne.s32.totalorder %v357, 0
      %vm402 = vcmp.ne.s32.totalorder %v364, 0
      %vm403 = vcmp.ne.s32.totalorder %v371, 0
      %vm404 = vcmp.ne.s32.totalorder %v378, 0
      %vm405 = vcmp.ne.s32.totalorder %v385, 0
      %vm406 = vcmp.ne.s32.totalorder %v392, 0
      %vm407 = vcmp.ne.s32.totalorder %v399, 0
      %vm408 = vcmp.lt.s32.totalorder %v350, 0
      %vm409 = vcmp.lt.s32.totalorder %v357, 0
      %vm410 = vcmp.lt.s32.totalorder %v364, 0
      %vm411 = vcmp.lt.s32.totalorder %v371, 0
      %vm412 = vcmp.lt.s32.totalorder %v378, 0
      %vm413 = vcmp.lt.s32.totalorder %v385, 0
      %vm414 = vcmp.lt.s32.totalorder %v392, 0
      %vm415 = vcmp.lt.s32.totalorder %v399, 0
      %vm416 = vmand %vm408, %vm400
      %vm417 = vmand %vm409, %vm401
      %vm418 = vmand %vm410, %vm402
      %vm419 = vmand %vm411, %vm403
      %vm420 = vmand %vm412, %vm404
      %vm421 = vmand %vm413, %vm405
      %vm422 = vmand %vm414, %vm406
      %vm423 = vmand %vm415, %vm407
      %v424 = vadd.s32 %v350, 8
      %v425 = vadd.s32 %v357, 8
      %v426 = vadd.s32 %v364, 8
      %v427 = vadd.s32 %v371, 8
      %v428 = vadd.s32 %v378, 8
      %v429 = vadd.s32 %v385, 8
      %v430 = vadd.s32 %v392, 8
      %v431 = vadd.s32 %v399, 8
      %v432 = vsel %vm416, %v424, %v350
      %v433 = vsel %vm417, %v425, %v357
      %v434 = vsel %vm418, %v426, %v364
      %v435 = vsel %vm419, %v427, %v371
      %v436 = vsel %vm420, %v428, %v378
      %v437 = vsel %vm421, %v429, %v385
      %v438 = vsel %vm422, %v430, %v392
      %v439 = vsel %vm423, %v431, %v399
      %vm440 = vcmp.ne.s32.totalorder %v432, 0
      %vm441 = vcmp.ne.s32.totalorder %v433, 0
      %vm442 = vcmp.ne.s32.totalorder %v434, 0
      %vm443 = vcmp.ne.s32.totalorder %v435, 0
      %vm444 = vcmp.ne.s32.totalorder %v436, 0
      %vm445 = vcmp.ne.s32.totalorder %v437, 0
      %vm446 = vcmp.ne.s32.totalorder %v438, 0
      %vm447 = vcmp.ne.s32.totalorder %v439, 0
      %v448 = vsel %vm440, 1, 0
      %v449 = vsel %vm441, 1, 0
      %v450 = vsel %vm442, 1, 0
      %v451 = vsel %vm443, 1, 0
      %v452 = vsel %vm444, 1, 0
      %v453 = vsel %vm445, 1, 0
      %v454 = vsel %vm446, 1, 0
      %v455 = vsel %vm447, 1, 0
      %v456 = vcvt.s32.f32 %v448
      %v457 = vcvt.s32.f32 %v449
      %v458 = vcvt.s32.f32 %v450
      %v459 = vcvt.s32.f32 %v451
      %v460 = vcvt.s32.f32 %v452
      %v461 = vcvt.s32.f32 %v453
      %v462 = vcvt.s32.f32 %v454
      %v463 = vcvt.s32.f32 %v455
      %vm464 = vcmp.ne.s32.totalorder %v432, 7
      %vm465 = vcmp.ne.s32.totalorder %v433, 7
      %vm466 = vcmp.ne.s32.totalorder %v434, 7
      %vm467 = vcmp.ne.s32.totalorder %v435, 7
      %vm468 = vcmp.ne.s32.totalorder %v436, 7
      %vm469 = vcmp.ne.s32.totalorder %v437, 7
      %vm470 = vcmp.ne.s32.totalorder %v438, 7
      %vm471 = vcmp.ne.s32.totalorder %v439, 7
      %v472 = vsel %vm464, 1, 0
      %v473 = vsel %vm465, 1, 0
      %v474 = vsel %vm466, 1, 0
      %v475 = vsel %vm467, 1, 0
      %v476 = vsel %vm468, 1, 0
      %v477 = vsel %vm469, 1, 0
      %v478 = vsel %vm470, 1, 0
      %v479 = vsel %vm471, 1, 0
      %v480 = vcvt.s32.f32 %v472
      %v481 = vcvt.s32.f32 %v473
      %v482 = vcvt.s32.f32 %v474
      %v483 = vcvt.s32.f32 %v475
      %v484 = vcvt.s32.f32 %v476
      %v485 = vcvt.s32.f32 %v477
      %v486 = vcvt.s32.f32 %v478
      %v487 = vcvt.s32.f32 %v479
      %v488 = vld [vmem:[%s329] sm:$0xff]
      %v489 = vld [vmem:[%s329 + $0x8] sm:$0xff]
      %v490 = vld [vmem:[%s329 + $0x10] sm:$0xff]
      %v491 = vld [vmem:[%s329 + $0x18] sm:$0xff]
      %v492 = vld [vmem:[%s329 + $0x20] sm:$0xff]
      %v493 = vld [vmem:[%s329 + $0x28] sm:$0xff]
      %v494 = vld [vmem:[%s329 + $0x30] sm:$0xff]
      %v495 = vld [vmem:[%s329 + $0x38] sm:$0xff]
      %v496 = vld [vmem:[%s1] sm:$0xff]
      %v497 = vld [vmem:[%s1 + $0x8] sm:$0xff]
      %v498 = vld [vmem:[%s1 + $0x10] sm:$0xff]
      %v499 = vld [vmem:[%s1 + $0x18] sm:$0xff]
      %v500 = vld [vmem:[%s1 + $0x20] sm:$0xf]
      %v501 = vld [vmem:[%s2] sm:$0x1]
      %v503 = vlaneseq
      %v504 = vshrl.u32 %v503, 7
      %v505 = vsub.s32 0, %v504
      %v506 = vrot.slane %v501, %v505
      %vm508 = vcmask 293888
      %v510 = vsel %vm508, %v488, 0
      %v513 = vsel %vm508, %v489, 0
      %v516 = vsel %vm508, %v490, 0
      %v519 = vsel %vm508, %v491, 0
      %v522 = vsel %vm508, %v492, 0
      %v525 = vsel %vm508, %v493, 0
      %v528 = vsel %vm508, %v494, 0
      %v531 = vsel %vm508, %v495, 0
      %vm533 = vcmask 1043456
      %v535 = vsel %vm533, %v500, 0
      %537 = vmatprep.subr.mxu0 0.0
      %538 = vmatpush1.msra.mxu0 0.0
      %539 = vmatprep.subr.mxu0 0.0
      %540 = vmatpush1.msra.mxu0 0.0
      %541 = vmatprep.subr.mxu0 0.0
      %542 = vmatpush1.msra.mxu0 0.0
      %543 = vmatprep.subr.mxu0 0.0
      %544 = vmatpush1.msra.mxu0 0.0
      %545 = vmatprep.subr.mxu0 0.0
      %546 = vmatpush1.msra.mxu0 0.0
      %547 = vmatprep.subr.mxu0 0.0
      %548 = vmatpush1.msra.mxu0 0.0
      %549 = vmatprep.subr.mxu0 0.0
      %550 = vmatpush1.msra.mxu0 0.0
      %551 = vmatprep.subr.mxu0 0.0
      %552 = vmatpush1.msra.mxu0 0.0
      %553 = vmatprep.subr.mxu0 0.0
      %554 = vmatpush1.msra.mxu0 0.0
      %555 = vmatprep.subr.mxu0 0.0
      %556 = vmatpush1.msra.mxu0 0.0
      %557 = vmatprep.subr.mxu0 0.0
      %558 = vmatpush1.msra.mxu0 0.0
      %559 = vmatprep.subr.mxu0 0.0
      %560 = vmatpush1.msra.mxu0 %v535
      %561 = vmatprep.subr.mxu0 0.0
      %562 = vmatpush1.msra.mxu0 %v499
      %563 = vmatprep.subr.mxu0 0.0
      %564 = vmatpush1.msra.mxu0 %v498
      %565 = vmatprep.subr.mxu0 0.0
      %566 = vmatpush1.msra.mxu0 %v497
      %567 = vmatprep.subr.mxu0 0.0
      %568 = vmatpush1.msra.mxu0 %v496
      %569 = vmatprep.subr.mxu0 0.0
      %570 = vmatpush2.msra.mxu0 0.0
      %571 = vmatprep.subr.mxu0 0.0
      %572 = vmatpush2.msra.mxu0 0.0
      %573 = vmatprep.subr.mxu0 0.0
      %574 = vmatpush2.msra.mxu0 0.0
      %575 = vmatprep.subr.mxu0 0.0
      %576 = vmatpush2.msra.mxu0 0.0
      %577 = vmatprep.subr.mxu0 0.0
      %578 = vmatpush2.msra.mxu0 0.0
      %579 = vmatprep.subr.mxu0 0.0
      %580 = vmatpush2.msra.mxu0 0.0
      %581 = vmatprep.subr.mxu0 0.0
      %582 = vmatpush2.msra.mxu0 0.0
      %583 = vmatprep.subr.mxu0 0.0
      %584 = vmatpush2.msra.mxu0 0.0
      %585 = vmatprep.subr.mxu0 0.0
      %586 = vmatpush2.msra.mxu0 0.0
      %587 = vmatprep.subr.mxu0 0.0
      %588 = vmatpush2.msra.mxu0 0.0
      %589 = vmatprep.subr.mxu0 0.0
      %590 = vmatpush2.msra.mxu0 0.0
      %591 = vmatprep.subr.mxu0 0.0
      %592 = vmatpush2.msra.mxu0 0.0
      %593 = vmatprep.subr.mxu0 0.0
      %594 = vmatpush2.msra.mxu0 0.0
      %595 = vmatprep.subr.mxu0 0.0
      %596 = vmatpush2.msra.mxu0 0.0
      %597 = vmatprep.subr.mxu0 0.0
      %598 = vmatpush2.msra.mxu0 0.0
      %599 = vmatprep.subr.mxu0 0.0
      %600 = vmatpush2.msra.mxu0 0.0
      %601 = vmatprep.mubr.f32.mxu0 0.0
      %602 = vmatmul.mubr.f32.gmra.mxu0 %v510
      %v603 = vpop.f32.mrf.mxu0
      %v604 = vadd.f32 %v506, %v603
      %v605 = vpop.f32.mrf.mxu0
      %606 = vmatprep.mubr.f32.mxu0 0.0
      %607 = vmatmul.mubr.f32.gmra.mxu0 %v513
      %v608 = vpop.f32.mrf.mxu0
      %v609 = vadd.f32 %v506, %v608
      %v610 = vpop.f32.mrf.mxu0
      %611 = vmatprep.mubr.f32.mxu0 0.0
      %612 = vmatmul.mubr.f32.gmra.mxu0 %v516
      %v613 = vpop.f32.mrf.mxu0
      %v614 = vadd.f32 %v506, %v613
      %v615 = vpop.f32.mrf.mxu0
      %616 = vmatprep.mubr.f32.mxu0 0.0
      %617 = vmatmul.mubr.f32.gmra.mxu0 %v519
      %v618 = vpop.f32.mrf.mxu0
      %v619 = vadd.f32 %v506, %v618
      %v620 = vpop.f32.mrf.mxu0
      %621 = vmatprep.mubr.f32.mxu0 0.0
      %622 = vmatmul.mubr.f32.gmra.mxu0 %v522
      %v623 = vpop.f32.mrf.mxu0
      %v624 = vadd.f32 %v506, %v623
      %v625 = vpop.f32.mrf.mxu0
      %626 = vmatprep.mubr.f32.mxu0 0.0
      %627 = vmatmul.mubr.f32.gmra.mxu0 %v525
      %v628 = vpop.f32.mrf.mxu0
      %v629 = vadd.f32 %v506, %v628
      %v630 = vpop.f32.mrf.mxu0
      %631 = vmatprep.mubr.f32.mxu0 0.0
      %632 = vmatmul.mubr.f32.gmra.mxu0 %v528
      %v633 = vpop.f32.mrf.mxu0
      %v634 = vadd.f32 %v506, %v633
      %v635 = vpop.f32.mrf.mxu0
      %636 = vmatprep.mubr.f32.mxu0 0.0
      %637 = vmatmul.mubr.f32.gmra.mxu0 %v531
      %v638 = vpop.f32.mrf.mxu0
      %v639 = vadd.f32 %v506, %v638
      %v640 = vpop.f32.mrf.mxu0
      %641 = vdwg.mxu0
      %vm642 = vcmp.gt.f32.partialorder %v604, 0.0
      %vm643 = vcmp.gt.f32.partialorder %v609, 0.0
      %vm644 = vcmp.gt.f32.partialorder %v614, 0.0
      %vm645 = vcmp.gt.f32.partialorder %v619, 0.0
      %vm646 = vcmp.gt.f32.partialorder %v624, 0.0
      %vm647 = vcmp.gt.f32.partialorder %v629, 0.0
      %vm648 = vcmp.gt.f32.partialorder %v634, 0.0
      %vm649 = vcmp.gt.f32.partialorder %v639, 0.0
      %v650 = vmul.f32 %v604, 0.2
      %v651 = vmul.f32 %v609, 0.2
      %v652 = vmul.f32 %v614, 0.2
      %v653 = vmul.f32 %v619, 0.2
      %v654 = vmul.f32 %v624, 0.2
      %v655 = vmul.f32 %v629, 0.2
      %v656 = vmul.f32 %v634, 0.2
      %v657 = vmul.f32 %v639, 0.2
      %v658 = vsel %vm642, %v604, %v650
      %v659 = vsel %vm643, %v609, %v651
      %v660 = vsel %vm644, %v614, %v652
      %v661 = vsel %vm645, %v619, %v653
      %v662 = vsel %vm646, %v624, %v654
      %v663 = vsel %vm647, %v629, %v655
      %v664 = vsel %vm648, %v634, %v656
      %v665 = vsel %vm649, %v639, %v657
      %vm666 = vcmask 261120
      %667 = vst.msk [vmem:[#allocation2] sm:$0xff] %vm666, 0.0
      %668 = vst.msk [vmem:[#allocation2 + $0x8] sm:$0xff] %vm666, 0.0
      %669 = vst.msk [vmem:[#allocation2 + $0x10] sm:$0xff] %vm666, 0.0
      %670 = vst.msk [vmem:[#allocation2 + $0x18] sm:$0xff] %vm666, 0.0
      %671 = vst.msk [vmem:[#allocation2 + $0x20] sm:$0xff] %vm666, 0.0
      %672 = vst.msk [vmem:[#allocation2 + $0x28] sm:$0xff] %vm666, 0.0
      %673 = vst.msk [vmem:[#allocation2 + $0x30] sm:$0xff] %vm666, 0.0
      %674 = vst.msk [vmem:[#allocation2 + $0x38] sm:$0xff] %vm666, 0.0
      %675 = vst.msk [vmem:[#allocation2 + $0x40] sm:$0xff] %vm666, 0.0
      %676 = vst.msk [vmem:[#allocation2 + $0x48] sm:$0xff] %vm666, 0.0
      %677 = vst.msk [vmem:[#allocation2 + $0x50] sm:$0xff] %vm666, 0.0
      %678 = vst.msk [vmem:[#allocation2 + $0x58] sm:$0xff] %vm666, 0.0
      %679 = vst.msk [vmem:[#allocation2 + $0x10] sm:$0xff] %vm666, %v658
      %680 = vst.msk [vmem:[#allocation2 + $0x18] sm:$0xff] %vm666, %v659
      %681 = vst.msk [vmem:[#allocation2 + $0x20] sm:$0xff] %vm666, %v660
      %682 = vst.msk [vmem:[#allocation2 + $0x28] sm:$0xff] %vm666, %v661
      %683 = vst.msk [vmem:[#allocation2 + $0x30] sm:$0xff] %vm666, %v662
      %684 = vst.msk [vmem:[#allocation2 + $0x38] sm:$0xff] %vm666, %v663
      %685 = vst.msk [vmem:[#allocation2 + $0x40] sm:$0xff] %vm666, %v664
      %686 = vst.msk [vmem:[#allocation2 + $0x48] sm:$0xff] %vm666, %v665
      %v687 = vld [vmem:[#allocation2 + $0x7] sm:$0xff]
      %v688 = vld [vmem:[#allocation2 + $0xf] sm:$0xff]
      %v689 = vld [vmem:[#allocation2 + $0x17] sm:$0xff]
      %v690 = vld [vmem:[#allocation2 + $0x1f] sm:$0xff]
      %v691 = vld [vmem:[#allocation2 + $0x27] sm:$0xff]
      %v692 = vld [vmem:[#allocation2 + $0x2f] sm:$0xff]
      %v693 = vld [vmem:[#allocation2 + $0x37] sm:$0xff]
      %v694 = vld [vmem:[#allocation2 + $0x3f] sm:$0xff]
      %v695 = vmul.f32 %v687, %v456
      %v696 = vmul.f32 %v688, %v457
      %v697 = vmul.f32 %v689, %v458
      %v698 = vmul.f32 %v690, %v459
      %v699 = vmul.f32 %v691, %v460
      %v700 = vmul.f32 %v692, %v461
      %v701 = vmul.f32 %v693, %v462
      %v702 = vmul.f32 %v694, %v463
      %v703 = vld [vmem:[%s3] sm:$0xff]
      %v704 = vld [vmem:[%s3 + $0x8] sm:$0xff]
      %v705 = vld [vmem:[%s3 + $0x10] sm:$0xff]
      %v706 = vld [vmem:[%s3 + $0x18] sm:$0xff]
      %v707 = vld [vmem:[#allocation2 + $0x8] sm:$0xff]
      %v708 = vld [vmem:[#allocation2 + $0x10] sm:$0xff]
      %v709 = vld [vmem:[#allocation2 + $0x18] sm:$0xff]
      %v710 = vld [vmem:[#allocation2 + $0x20] sm:$0xff]
      %v711 = vld [vmem:[#allocation2 + $0x28] sm:$0xff]
      %v712 = vld [vmem:[#allocation2 + $0x30] sm:$0xff]
      %v713 = vld [vmem:[#allocation2 + $0x38] sm:$0xff]
      %v714 = vld [vmem:[#allocation2 + $0x40] sm:$0xff]
      %s715 = scalar_lea.vmem %s3, 32
      %v716 = vld [vmem:[%s715] sm:$0xff]
      %v717 = vld [vmem:[%s715 + $0x8] sm:$0xff]
      %v718 = vld [vmem:[%s715 + $0x10] sm:$0xff]
      %v719 = vld [vmem:[%s715 + $0x18] sm:$0xff]
      %v721 = vsel %vm666, %v707, 0
      %v724 = vsel %vm666, %v708, 0
      %v727 = vsel %vm666, %v709, 0
      %v730 = vsel %vm666, %v710, 0
      %v733 = vsel %vm666, %v711, 0
      %v736 = vsel %vm666, %v712, 0
      %v739 = vsel %vm666, %v713, 0
      %v742 = vsel %vm666, %v714, 0
      %744 = vmatprep.subr.mxu0 0.0
      %745 = vmatpush1.msra.mxu0 0.0
      %746 = vmatprep.subr.mxu0 0.0
      %747 = vmatpush1.msra.mxu0 0.0
      %748 = vmatprep.subr.mxu0 0.0
      %749 = vmatpush1.msra.mxu0 0.0
      %750 = vmatprep.subr.mxu0 0.0
      %751 = vmatpush1.msra.mxu0 0.0
      %752 = vmatprep.subr.mxu0 0.0
      %753 = vmatpush1.msra.mxu0 0.0
      %754 = vmatprep.subr.mxu0 0.0
      %755 = vmatpush1.msra.mxu0 0.0
      %756 = vmatprep.subr.mxu0 0.0
      %757 = vmatpush1.msra.mxu0 0.0
      %758 = vmatprep.subr.mxu0 0.0
      %759 = vmatpush1.msra.mxu0 0.0
      %760 = vmatprep.subr.mxu0 0.0
      %761 = vmatpush1.msra.mxu0 0.0
      %762 = vmatprep.subr.mxu0 0.0
      %763 = vmatpush1.msra.mxu0 0.0
      %764 = vmatprep.subr.mxu0 0.0
      %765 = vmatpush1.msra.mxu0 0.0
      %766 = vmatprep.subr.mxu0 0.0
      %767 = vmatpush1.msra.mxu0 0.0
      %768 = vmatprep.subr.mxu0 0.0
      %769 = vmatpush1.msra.mxu0 %v719
      %770 = vmatprep.subr.mxu0 0.0
      %771 = vmatpush1.msra.mxu0 %v718
      %772 = vmatprep.subr.mxu0 0.0
      %773 = vmatpush1.msra.mxu0 %v717
      %774 = vmatprep.subr.mxu0 0.0
      %775 = vmatpush1.msra.mxu0 %v716
      %776 = vmatprep.subr.mxu0 0.0
      %777 = vmatpush2.msra.mxu0 0.0
      %778 = vmatprep.subr.mxu0 0.0
      %779 = vmatpush2.msra.mxu0 0.0
      %780 = vmatprep.subr.mxu0 0.0
      %781 = vmatpush2.msra.mxu0 0.0
      %782 = vmatprep.subr.mxu0 0.0
      %783 = vmatpush2.msra.mxu0 0.0
      %784 = vmatprep.subr.mxu0 0.0
      %785 = vmatpush2.msra.mxu0 0.0
      %786 = vmatprep.subr.mxu0 0.0
      %787 = vmatpush2.msra.mxu0 0.0
      %788 = vmatprep.subr.mxu0 0.0
      %789 = vmatpush2.msra.mxu0 0.0
      %790 = vmatprep.subr.mxu0 0.0
      %791 = vmatpush2.msra.mxu0 0.0
      %792 = vmatprep.subr.mxu0 0.0
      %793 = vmatpush2.msra.mxu0 0.0
      %794 = vmatprep.subr.mxu0 0.0
      %795 = vmatpush2.msra.mxu0 0.0
      %796 = vmatprep.subr.mxu0 0.0
      %797 = vmatpush2.msra.mxu0 0.0
      %798 = vmatprep.subr.mxu0 0.0
      %799 = vmatpush2.msra.mxu0 0.0
      %800 = vmatprep.subr.mxu0 0.0
      %801 = vmatpush2.msra.mxu0 0.0
      %802 = vmatprep.subr.mxu0 0.0
      %803 = vmatpush2.msra.mxu0 0.0
      %804 = vmatprep.subr.mxu0 0.0
      %805 = vmatpush2.msra.mxu0 0.0
      %806 = vmatprep.subr.mxu0 0.0
      %807 = vmatpush2.msra.mxu0 0.0
      %808 = vmatprep.mubr.f32.mxu0 0.0
      %809 = vmatmul.mubr.f32.gmra.mxu0 %v721
      %v810 = vpop.f32.mrf.mxu0
      %v811 = vadd.f32 0.0, %v810
      %v812 = vpop.f32.mrf.mxu0
      %813 = vmatprep.mubr.f32.mxu0 0.0
      %814 = vmatmul.mubr.f32.gmra.mxu0 %v724
      %v815 = vpop.f32.mrf.mxu0
      %v816 = vadd.f32 0.0, %v815
      %v817 = vpop.f32.mrf.mxu0
      %818 = vmatprep.mubr.f32.mxu0 0.0
      %819 = vmatmul.mubr.f32.gmra.mxu0 %v727
      %v820 = vpop.f32.mrf.mxu0
      %v821 = vadd.f32 0.0, %v820
      %v822 = vpop.f32.mrf.mxu0
      %823 = vmatprep.mubr.f32.mxu0 0.0
      %824 = vmatmul.mubr.f32.gmra.mxu0 %v730
      %v825 = vpop.f32.mrf.mxu0
      %v826 = vadd.f32 0.0, %v825
      %v827 = vpop.f32.mrf.mxu0
      %828 = vmatprep.mubr.f32.mxu0 0.0
      %829 = vmatmul.mubr.f32.gmra.mxu0 %v733
      %v830 = vpop.f32.mrf.mxu0
      %v831 = vadd.f32 0.0, %v830
      %v832 = vpop.f32.mrf.mxu0
      %833 = vmatprep.mubr.f32.mxu0 0.0
      %834 = vmatmul.mubr.f32.gmra.mxu0 %v736
      %v835 = vpop.f32.mrf.mxu0
      %v836 = vadd.f32 0.0, %v835
      %v837 = vpop.f32.mrf.mxu0
      %838 = vmatprep.mubr.f32.mxu0 0.0
      %839 = vmatmul.mubr.f32.gmra.mxu0 %v739
      %v840 = vpop.f32.mrf.mxu0
      %v841 = vadd.f32 0.0, %v840
      %v842 = vpop.f32.mrf.mxu0
      %843 = vmatprep.mubr.f32.mxu0 0.0
      %844 = vmatmul.mubr.f32.gmra.mxu0 %v742
      %v845 = vpop.f32.mrf.mxu0
      %v846 = vadd.f32 0.0, %v845
      %v847 = vpop.f32.mrf.mxu0
      %848 = vdwg.mxu0
      %v850 = vsel %vm666, %v695, 0
      %v853 = vsel %vm666, %v696, 0
      %v856 = vsel %vm666, %v697, 0
      %v859 = vsel %vm666, %v698, 0
      %v862 = vsel %vm666, %v699, 0
      %v865 = vsel %vm666, %v700, 0
      %v868 = vsel %vm666, %v701, 0
      %v871 = vsel %vm666, %v702, 0
      %873 = vmatprep.subr.mxu0 0.0
      %874 = vmatpush1.msra.mxu0 0.0
      %875 = vmatprep.subr.mxu0 0.0
      %876 = vmatpush1.msra.mxu0 0.0
      %877 = vmatprep.subr.mxu0 0.0
      %878 = vmatpush1.msra.mxu0 0.0
      %879 = vmatprep.subr.mxu0 0.0
      %880 = vmatpush1.msra.mxu0 0.0
      %881 = vmatprep.subr.mxu0 0.0
      %882 = vmatpush1.msra.mxu0 0.0
      %883 = vmatprep.subr.mxu0 0.0
      %884 = vmatpush1.msra.mxu0 0.0
      %885 = vmatprep.subr.mxu0 0.0
      %886 = vmatpush1.msra.mxu0 0.0
      %887 = vmatprep.subr.mxu0 0.0
      %888 = vmatpush1.msra.mxu0 0.0
      %889 = vmatprep.subr.mxu0 0.0
      %890 = vmatpush1.msra.mxu0 0.0
      %891 = vmatprep.subr.mxu0 0.0
      %892 = vmatpush1.msra.mxu0 0.0
      %893 = vmatprep.subr.mxu0 0.0
      %894 = vmatpush1.msra.mxu0 0.0
      %895 = vmatprep.subr.mxu0 0.0
      %896 = vmatpush1.msra.mxu0 0.0
      %897 = vmatprep.subr.mxu0 0.0
      %898 = vmatpush1.msra.mxu0 %v706
      %899 = vmatprep.subr.mxu0 0.0
      %900 = vmatpush1.msra.mxu0 %v705
      %901 = vmatprep.subr.mxu0 0.0
      %902 = vmatpush1.msra.mxu0 %v704
      %903 = vmatprep.subr.mxu0 0.0
      %904 = vmatpush1.msra.mxu0 %v703
      %905 = vmatprep.subr.mxu0 0.0
      %906 = vmatpush2.msra.mxu0 0.0
      %907 = vmatprep.subr.mxu0 0.0
      %908 = vmatpush2.msra.mxu0 0.0
      %909 = vmatprep.subr.mxu0 0.0
      %910 = vmatpush2.msra.mxu0 0.0
      %911 = vmatprep.subr.mxu0 0.0
      %912 = vmatpush2.msra.mxu0 0.0
      %913 = vmatprep.subr.mxu0 0.0
      %914 = vmatpush2.msra.mxu0 0.0
      %915 = vmatprep.subr.mxu0 0.0
      %916 = vmatpush2.msra.mxu0 0.0
      %917 = vmatprep.subr.mxu0 0.0
      %918 = vmatpush2.msra.mxu0 0.0
      %919 = vmatprep.subr.mxu0 0.0
      %920 = vmatpush2.msra.mxu0 0.0
      %921 = vmatprep.subr.mxu0 0.0
      %922 = vmatpush2.msra.mxu0 0.0
      %923 = vmatprep.subr.mxu0 0.0
      %924 = vmatpush2.msra.mxu0 0.0
      %925 = vmatprep.subr.mxu0 0.0
      %926 = vmatpush2.msra.mxu0 0.0
      %927 = vmatprep.subr.mxu0 0.0
      %928 = vmatpush2.msra.mxu0 0.0
      %929 = vmatprep.subr.mxu0 0.0
      %930 = vmatpush2.msra.mxu0 0.0
      %931 = vmatprep.subr.mxu0 0.0
      %932 = vmatpush2.msra.mxu0 0.0
      %933 = vmatprep.subr.mxu0 0.0
      %934 = vmatpush2.msra.mxu0 0.0
      %935 = vmatprep.subr.mxu0 0.0
      %936 = vmatpush2.msra.mxu0 0.0
      %937 = vmatprep.mubr.f32.mxu0 0.0
      %938 = vmatmul.mubr.f32.gmra.mxu0 %v850
      %v939 = vpop.f32.mrf.mxu0
      %v940 = vadd.f32 %v811, %v939
      %v941 = vpop.f32.mrf.mxu0
      %942 = vmatprep.mubr.f32.mxu0 0.0
      %943 = vmatmul.mubr.f32.gmra.mxu0 %v853
      %v944 = vpop.f32.mrf.mxu0
      %v945 = vadd.f32 %v816, %v944
      %v946 = vpop.f32.mrf.mxu0
      %947 = vmatprep.mubr.f32.mxu0 0.0
      %948 = vmatmul.mubr.f32.gmra.mxu0 %v856
      %v949 = vpop.f32.mrf.mxu0
      %v950 = vadd.f32 %v821, %v949
      %v951 = vpop.f32.mrf.mxu0
      %952 = vmatprep.mubr.f32.mxu0 0.0
      %953 = vmatmul.mubr.f32.gmra.mxu0 %v859
      %v954 = vpop.f32.mrf.mxu0
      %v955 = vadd.f32 %v826, %v954
      %v956 = vpop.f32.mrf.mxu0
      %957 = vmatprep.mubr.f32.mxu0 0.0
      %958 = vmatmul.mubr.f32.gmra.mxu0 %v862
      %v959 = vpop.f32.mrf.mxu0
      %v960 = vadd.f32 %v831, %v959
      %v961 = vpop.f32.mrf.mxu0
      %962 = vmatprep.mubr.f32.mxu0 0.0
      %963 = vmatmul.mubr.f32.gmra.mxu0 %v865
      %v964 = vpop.f32.mrf.mxu0
      %v965 = vadd.f32 %v836, %v964
      %v966 = vpop.f32.mrf.mxu0
      %967 = vmatprep.mubr.f32.mxu0 0.0
      %968 = vmatmul.mubr.f32.gmra.mxu0 %v868
      %v969 = vpop.f32.mrf.mxu0
      %v970 = vadd.f32 %v841, %v969
      %v971 = vpop.f32.mrf.mxu0
      %972 = vmatprep.mubr.f32.mxu0 0.0
      %973 = vmatmul.mubr.f32.gmra.mxu0 %v871
      %v974 = vpop.f32.mrf.mxu0
      %v975 = vadd.f32 %v846, %v974
      %v976 = vpop.f32.mrf.mxu0
      %977 = vdwg.mxu0
      %v978 = vld [vmem:[#allocation2 + $0x9] sm:$0xff]
      %v979 = vld [vmem:[#allocation2 + $0x11] sm:$0xff]
      %v980 = vld [vmem:[#allocation2 + $0x19] sm:$0xff]
      %v981 = vld [vmem:[#allocation2 + $0x21] sm:$0xff]
      %v982 = vld [vmem:[#allocation2 + $0x29] sm:$0xff]
      %v983 = vld [vmem:[#allocation2 + $0x31] sm:$0xff]
      %v984 = vld [vmem:[#allocation2 + $0x39] sm:$0xff]
      %v985 = vld [vmem:[#allocation2 + $0x41] sm:$0xff]
      %v986 = vmul.f32 %v978, %v480
      %v987 = vmul.f32 %v979, %v481
      %v988 = vmul.f32 %v980, %v482
      %v989 = vmul.f32 %v981, %v483
      %v990 = vmul.f32 %v982, %v484
      %v991 = vmul.f32 %v983, %v485
      %v992 = vmul.f32 %v984, %v486
      %v993 = vmul.f32 %v985, %v487
      %s994 = scalar_lea.vmem %s3, 64
      %v995 = vld [vmem:[%s994] sm:$0xff]
      %v996 = vld [vmem:[%s994 + $0x8] sm:$0xff]
      %v997 = vld [vmem:[%s994 + $0x10] sm:$0xff]
      %v998 = vld [vmem:[%s994 + $0x18] sm:$0xff]
      %v1000 = vsel %vm666, %v986, 0
      %v1003 = vsel %vm666, %v987, 0
      %v1006 = vsel %vm666, %v988, 0
      %v1009 = vsel %vm666, %v989, 0
      %v1012 = vsel %vm666, %v990, 0
      %v1015 = vsel %vm666, %v991, 0
      %v1018 = vsel %vm666, %v992, 0
      %v1021 = vsel %vm666, %v993, 0
      %1023 = vmatprep.subr.mxu0 0.0
      %1024 = vmatpush1.msra.mxu0 0.0
      %1025 = vmatprep.subr.mxu0 0.0
      %1026 = vmatpush1.msra.mxu0 0.0
      %1027 = vmatprep.subr.mxu0 0.0
      %1028 = vmatpush1.msra.mxu0 0.0
      %1029 = vmatprep.subr.mxu0 0.0
      %1030 = vmatpush1.msra.mxu0 0.0
      %1031 = vmatprep.subr.mxu0 0.0
      %1032 = vmatpush1.msra.mxu0 0.0
      %1033 = vmatprep.subr.mxu0 0.0
      %1034 = vmatpush1.msra.mxu0 0.0
      %1035 = vmatprep.subr.mxu0 0.0
      %1036 = vmatpush1.msra.mxu0 0.0
      %1037 = vmatprep.subr.mxu0 0.0
      %1038 = vmatpush1.msra.mxu0 0.0
      %1039 = vmatprep.subr.mxu0 0.0
      %1040 = vmatpush1.msra.mxu0 0.0
      %1041 = vmatprep.subr.mxu0 0.0
      %1042 = vmatpush1.msra.mxu0 0.0
      %1043 = vmatprep.subr.mxu0 0.0
      %1044 = vmatpush1.msra.mxu0 0.0
      %1045 = vmatprep.subr.mxu0 0.0
      %1046 = vmatpush1.msra.mxu0 0.0
      %1047 = vmatprep.subr.mxu0 0.0
      %1048 = vmatpush1.msra.mxu0 %v998
      %1049 = vmatprep.subr.mxu0 0.0
      %1050 = vmatpush1.msra.mxu0 %v997
      %1051 = vmatprep.subr.mxu0 0.0
      %1052 = vmatpush1.msra.mxu0 %v996
      %1053 = vmatprep.subr.mxu0 0.0
      %1054 = vmatpush1.msra.mxu0 %v995
      %1055 = vmatprep.subr.mxu0 0.0
      %1056 = vmatpush2.msra.mxu0 0.0
      %1057 = vmatprep.subr.mxu0 0.0
      %1058 = vmatpush2.msra.mxu0 0.0
      %1059 = vmatprep.subr.mxu0 0.0
      %1060 = vmatpush2.msra.mxu0 0.0
      %1061 = vmatprep.subr.mxu0 0.0
      %1062 = vmatpush2.msra.mxu0 0.0
      %1063 = vmatprep.subr.mxu0 0.0
      %1064 = vmatpush2.msra.mxu0 0.0
      %1065 = vmatprep.subr.mxu0 0.0
      %1066 = vmatpush2.msra.mxu0 0.0
      %1067 = vmatprep.subr.mxu0 0.0
      %1068 = vmatpush2.msra.mxu0 0.0
      %1069 = vmatprep.subr.mxu0 0.0
      %1070 = vmatpush2.msra.mxu0 0.0
      %1071 = vmatprep.subr.mxu0 0.0
      %1072 = vmatpush2.msra.mxu0 0.0
      %1073 = vmatprep.subr.mxu0 0.0
      %1074 = vmatpush2.msra.mxu0 0.0
      %1075 = vmatprep.subr.mxu0 0.0
      %1076 = vmatpush2.msra.mxu0 0.0
      %1077 = vmatprep.subr.mxu0 0.0
      %1078 = vmatpush2.msra.mxu0 0.0
      %1079 = vmatprep.subr.mxu0 0.0
      %1080 = vmatpush2.msra.mxu0 0.0
      %1081 = vmatprep.subr.mxu0 0.0
      %1082 = vmatpush2.msra.mxu0 0.0
      %1083 = vmatprep.subr.mxu0 0.0
      %1084 = vmatpush2.msra.mxu0 0.0
      %1085 = vmatprep.subr.mxu0 0.0
      %1086 = vmatpush2.msra.mxu0 0.0
      %1087 = vmatprep.mubr.f32.mxu0 0.0
      %1088 = vmatmul.mubr.f32.gmra.mxu0 %v1000
      %v1089 = vpop.f32.mrf.mxu0
      %v1090 = vadd.f32 0.0, %v1089
      %v1091 = vpop.f32.mrf.mxu0
      %1092 = vmatprep.mubr.f32.mxu0 0.0
      %1093 = vmatmul.mubr.f32.gmra.mxu0 %v1003
      %v1094 = vpop.f32.mrf.mxu0
      %v1095 = vadd.f32 0.0, %v1094
      %v1096 = vpop.f32.mrf.mxu0
      %1097 = vmatprep.mubr.f32.mxu0 0.0
      %1098 = vmatmul.mubr.f32.gmra.mxu0 %v1006
      %v1099 = vpop.f32.mrf.mxu0
      %v1100 = vadd.f32 0.0, %v1099
      %v1101 = vpop.f32.mrf.mxu0
      %1102 = vmatprep.mubr.f32.mxu0 0.0
      %1103 = vmatmul.mubr.f32.gmra.mxu0 %v1009
      %v1104 = vpop.f32.mrf.mxu0
      %v1105 = vadd.f32 0.0, %v1104
      %v1106 = vpop.f32.mrf.mxu0
      %1107 = vmatprep.mubr.f32.mxu0 0.0
      %1108 = vmatmul.mubr.f32.gmra.mxu0 %v1012
      %v1109 = vpop.f32.mrf.mxu0
      %v1110 = vadd.f32 0.0, %v1109
      %v1111 = vpop.f32.mrf.mxu0
      %1112 = vmatprep.mubr.f32.mxu0 0.0
      %1113 = vmatmul.mubr.f32.gmra.mxu0 %v1015
      %v1114 = vpop.f32.mrf.mxu0
      %v1115 = vadd.f32 0.0, %v1114
      %v1116 = vpop.f32.mrf.mxu0
      %1117 = vmatprep.mubr.f32.mxu0 0.0
      %1118 = vmatmul.mubr.f32.gmra.mxu0 %v1018
      %v1119 = vpop.f32.mrf.mxu0
      %v1120 = vadd.f32 0.0, %v1119
      %v1121 = vpop.f32.mrf.mxu0
      %1122 = vmatprep.mubr.f32.mxu0 0.0
      %1123 = vmatmul.mubr.f32.gmra.mxu0 %v1021
      %v1124 = vpop.f32.mrf.mxu0
      %v1125 = vadd.f32 0.0, %v1124
      %v1126 = vpop.f32.mrf.mxu0
      %1127 = vdwg.mxu0
      %v1128 = vadd.f32 %v940, %v1090
      %v1129 = vadd.f32 %v945, %v1095
      %v1130 = vadd.f32 %v950, %v1100
      %v1131 = vadd.f32 %v955, %v1105
      %v1132 = vadd.f32 %v960, %v1110
      %v1133 = vadd.f32 %v965, %v1115
      %v1134 = vadd.f32 %v970, %v1120
      %v1135 = vadd.f32 %v975, %v1125
      %v1136 = vld [vmem:[#allocation2 + $0xf] sm:$0xff]
      %v1137 = vld [vmem:[#allocation2 + $0x17] sm:$0xff]
      %v1138 = vld [vmem:[#allocation2 + $0x1f] sm:$0xff]
      %v1139 = vld [vmem:[#allocation2 + $0x27] sm:$0xff]
      %v1140 = vld [vmem:[#allocation2 + $0x2f] sm:$0xff]
      %v1141 = vld [vmem:[#allocation2 + $0x37] sm:$0xff]
      %v1142 = vld [vmem:[#allocation2 + $0x3f] sm:$0xff]
      %v1143 = vld [vmem:[#allocation2 + $0x47] sm:$0xff]
      %v1144 = vmul.f32 %v1136, %v456
      %v1145 = vmul.f32 %v1137, %v457
      %v1146 = vmul.f32 %v1138, %v458
      %v1147 = vmul.f32 %v1139, %v459
      %v1148 = vmul.f32 %v1140, %v460
      %v1149 = vmul.f32 %v1141, %v461
      %v1150 = vmul.f32 %v1142, %v462
      %v1151 = vmul.f32 %v1143, %v463
      %s1152 = scalar_lea.vmem %s3, 96
      %v1153 = vld [vmem:[%s1152] sm:$0xff]
      %v1154 = vld [vmem:[%s1152 + $0x8] sm:$0xff]
      %v1155 = vld [vmem:[%s1152 + $0x10] sm:$0xff]
      %v1156 = vld [vmem:[%s1152 + $0x18] sm:$0xff]
      %v1158 = vsel %vm666, %v1144, 0
      %v1161 = vsel %vm666, %v1145, 0
      %v1164 = vsel %vm666, %v1146, 0
      %v1167 = vsel %vm666, %v1147, 0
      %v1170 = vsel %vm666, %v1148, 0
      %v1173 = vsel %vm666, %v1149, 0
      %v1176 = vsel %vm666, %v1150, 0
      %v1179 = vsel %vm666, %v1151, 0
      %1181 = vmatprep.subr.mxu0 0.0
      %1182 = vmatpush1.msra.mxu0 0.0
      %1183 = vmatprep.subr.mxu0 0.0
      %1184 = vmatpush1.msra.mxu0 0.0
      %1185 = vmatprep.subr.mxu0 0.0
      %1186 = vmatpush1.msra.mxu0 0.0
      %1187 = vmatprep.subr.mxu0 0.0
      %1188 = vmatpush1.msra.mxu0 0.0
      %1189 = vmatprep.subr.mxu0 0.0
      %1190 = vmatpush1.msra.mxu0 0.0
      %1191 = vmatprep.subr.mxu0 0.0
      %1192 = vmatpush1.msra.mxu0 0.0
      %1193 = vmatprep.subr.mxu0 0.0
      %1194 = vmatpush1.msra.mxu0 0.0
      %1195 = vmatprep.subr.mxu0 0.0
      %1196 = vmatpush1.msra.mxu0 0.0
      %1197 = vmatprep.subr.mxu0 0.0
      %1198 = vmatpush1.msra.mxu0 0.0
      %1199 = vmatprep.subr.mxu0 0.0
      %1200 = vmatpush1.msra.mxu0 0.0
      %1201 = vmatprep.subr.mxu0 0.0
      %1202 = vmatpush1.msra.mxu0 0.0
      %1203 = vmatprep.subr.mxu0 0.0
      %1204 = vmatpush1.msra.mxu0 0.0
      %1205 = vmatprep.subr.mxu0 0.0
      %1206 = vmatpush1.msra.mxu0 %v1156
      %1207 = vmatprep.subr.mxu0 0.0
      %1208 = vmatpush1.msra.mxu0 %v1155
      %1209 = vmatprep.subr.mxu0 0.0
      %1210 = vmatpush1.msra.mxu0 %v1154
      %1211 = vmatprep.subr.mxu0 0.0
      %1212 = vmatpush1.msra.mxu0 %v1153
      %1213 = vmatprep.subr.mxu0 0.0
      %1214 = vmatpush2.msra.mxu0 0.0
      %1215 = vmatprep.subr.mxu0 0.0
      %1216 = vmatpush2.msra.mxu0 0.0
      %1217 = vmatprep.subr.mxu0 0.0
      %1218 = vmatpush2.msra.mxu0 0.0
      %1219 = vmatprep.subr.mxu0 0.0
      %1220 = vmatpush2.msra.mxu0 0.0
      %1221 = vmatprep.subr.mxu0 0.0
      %1222 = vmatpush2.msra.mxu0 0.0
      %1223 = vmatprep.subr.mxu0 0.0
      %1224 = vmatpush2.msra.mxu0 0.0
      %1225 = vmatprep.subr.mxu0 0.0
      %1226 = vmatpush2.msra.mxu0 0.0
      %1227 = vmatprep.subr.mxu0 0.0
      %1228 = vmatpush2.msra.mxu0 0.0
      %1229 = vmatprep.subr.mxu0 0.0
      %1230 = vmatpush2.msra.mxu0 0.0
      %1231 = vmatprep.subr.mxu0 0.0
      %1232 = vmatpush2.msra.mxu0 0.0
      %1233 = vmatprep.subr.mxu0 0.0
      %1234 = vmatpush2.msra.mxu0 0.0
      %1235 = vmatprep.subr.mxu0 0.0
      %1236 = vmatpush2.msra.mxu0 0.0
      %1237 = vmatprep.subr.mxu0 0.0
      %1238 = vmatpush2.msra.mxu0 0.0
      %1239 = vmatprep.subr.mxu0 0.0
      %1240 = vmatpush2.msra.mxu0 0.0
      %1241 = vmatprep.subr.mxu0 0.0
      %1242 = vmatpush2.msra.mxu0 0.0
      %1243 = vmatprep.subr.mxu0 0.0
      %1244 = vmatpush2.msra.mxu0 0.0
      %1245 = vmatprep.mubr.f32.mxu0 0.0
      %1246 = vmatmul.mubr.f32.gmra.mxu0 %v1158
      %v1247 = vpop.f32.mrf.mxu0
      %v1248 = vadd.f32 0.0, %v1247
      %v1249 = vpop.f32.mrf.mxu0
      %1250 = vmatprep.mubr.f32.mxu0 0.0
      %1251 = vmatmul.mubr.f32.gmra.mxu0 %v1161
      %v1252 = vpop.f32.mrf.mxu0
      %v1253 = vadd.f32 0.0, %v1252
      %v1254 = vpop.f32.mrf.mxu0
      %1255 = vmatprep.mubr.f32.mxu0 0.0
      %1256 = vmatmul.mubr.f32.gmra.mxu0 %v1164
      %v1257 = vpop.f32.mrf.mxu0
      %v1258 = vadd.f32 0.0, %v1257
      %v1259 = vpop.f32.mrf.mxu0
      %1260 = vmatprep.mubr.f32.mxu0 0.0
      %1261 = vmatmul.mubr.f32.gmra.mxu0 %v1167
      %v1262 = vpop.f32.mrf.mxu0
      %v1263 = vadd.f32 0.0, %v1262
      %v1264 = vpop.f32.mrf.mxu0
      %1265 = vmatprep.mubr.f32.mxu0 0.0
      %1266 = vmatmul.mubr.f32.gmra.mxu0 %v1170
      %v1267 = vpop.f32.mrf.mxu0
      %v1268 = vadd.f32 0.0, %v1267
      %v1269 = vpop.f32.mrf.mxu0
      %1270 = vmatprep.mubr.f32.mxu0 0.0
      %1271 = vmatmul.mubr.f32.gmra.mxu0 %v1173
      %v1272 = vpop.f32.mrf.mxu0
      %v1273 = vadd.f32 0.0, %v1272
      %v1274 = vpop.f32.mrf.mxu0
      %1275 = vmatprep.mubr.f32.mxu0 0.0
      %1276 = vmatmul.mubr.f32.gmra.mxu0 %v1176
      %v1277 = vpop.f32.mrf.mxu0
      %v1278 = vadd.f32 0.0, %v1277
      %v1279 = vpop.f32.mrf.mxu0
      %1280 = vmatprep.mubr.f32.mxu0 0.0
      %1281 = vmatmul.mubr.f32.gmra.mxu0 %v1179
      %v1282 = vpop.f32.mrf.mxu0
      %v1283 = vadd.f32 0.0, %v1282
      %v1284 = vpop.f32.mrf.mxu0
      %1285 = vdwg.mxu0
      %v1286 = vadd.f32 %v1128, %v1248
      %v1287 = vadd.f32 %v1129, %v1253
      %v1288 = vadd.f32 %v1130, %v1258
      %v1289 = vadd.f32 %v1131, %v1263
      %v1290 = vadd.f32 %v1132, %v1268
      %v1291 = vadd.f32 %v1133, %v1273
      %v1292 = vadd.f32 %v1134, %v1278
      %v1293 = vadd.f32 %v1135, %v1283
      %v1294 = vld [vmem:[#allocation2 + $0x10] sm:$0xff]
      %v1295 = vld [vmem:[#allocation2 + $0x18] sm:$0xff]
      %v1296 = vld [vmem:[#allocation2 + $0x20] sm:$0xff]
      %v1297 = vld [vmem:[#allocation2 + $0x28] sm:$0xff]
      %v1298 = vld [vmem:[#allocation2 + $0x30] sm:$0xff]
      %v1299 = vld [vmem:[#allocation2 + $0x38] sm:$0xff]
      %v1300 = vld [vmem:[#allocation2 + $0x40] sm:$0xff]
      %v1301 = vld [vmem:[#allocation2 + $0x48] sm:$0xff]
      %s1302 = scalar_lea.vmem %s3, 128
      %v1303 = vld [vmem:[%s1302] sm:$0xff]
      %v1304 = vld [vmem:[%s1302 + $0x8] sm:$0xff]
      %v1305 = vld [vmem:[%s1302 + $0x10] sm:$0xff]
      %v1306 = vld [vmem:[%s1302 + $0x18] sm:$0xff]
      %v1308 = vsel %vm666, %v1294, 0
      %v1311 = vsel %vm666, %v1295, 0
      %v1314 = vsel %vm666, %v1296, 0
      %v1317 = vsel %vm666, %v1297, 0
      %v1320 = vsel %vm666, %v1298, 0
      %v1323 = vsel %vm666, %v1299, 0
      %v1326 = vsel %vm666, %v1300, 0
      %v1329 = vsel %vm666, %v1301, 0
      %1331 = vmatprep.subr.mxu0 0.0
      %1332 = vmatpush1.msra.mxu0 0.0
      %1333 = vmatprep.subr.mxu0 0.0
      %1334 = vmatpush1.msra.mxu0 0.0
      %1335 = vmatprep.subr.mxu0 0.0
      %1336 = vmatpush1.msra.mxu0 0.0
      %1337 = vmatprep.subr.mxu0 0.0
      %1338 = vmatpush1.msra.mxu0 0.0
      %1339 = vmatprep.subr.mxu0 0.0
      %1340 = vmatpush1.msra.mxu0 0.0
      %1341 = vmatprep.subr.mxu0 0.0
      %1342 = vmatpush1.msra.mxu0 0.0
      %1343 = vmatprep.subr.mxu0 0.0
      %1344 = vmatpush1.msra.mxu0 0.0
      %1345 = vmatprep.subr.mxu0 0.0
      %1346 = vmatpush1.msra.mxu0 0.0
      %1347 = vmatprep.subr.mxu0 0.0
      %1348 = vmatpush1.msra.mxu0 0.0
      %1349 = vmatprep.subr.mxu0 0.0
      %1350 = vmatpush1.msra.mxu0 0.0
      %1351 = vmatprep.subr.mxu0 0.0
      %1352 = vmatpush1.msra.mxu0 0.0
      %1353 = vmatprep.subr.mxu0 0.0
      %1354 = vmatpush1.msra.mxu0 0.0
      %1355 = vmatprep.subr.mxu0 0.0
      %1356 = vmatpush1.msra.mxu0 %v1306
      %1357 = vmatprep.subr.mxu0 0.0
      %1358 = vmatpush1.msra.mxu0 %v1305
      %1359 = vmatprep.subr.mxu0 0.0
      %1360 = vmatpush1.msra.mxu0 %v1304
      %1361 = vmatprep.subr.mxu0 0.0
      %1362 = vmatpush1.msra.mxu0 %v1303
      %1363 = vmatprep.subr.mxu0 0.0
      %1364 = vmatpush2.msra.mxu0 0.0
      %1365 = vmatprep.subr.mxu0 0.0
      %1366 = vmatpush2.msra.mxu0 0.0
      %1367 = vmatprep.subr.mxu0 0.0
      %1368 = vmatpush2.msra.mxu0 0.0
      %1369 = vmatprep.subr.mxu0 0.0
      %1370 = vmatpush2.msra.mxu0 0.0
      %1371 = vmatprep.subr.mxu0 0.0
      %1372 = vmatpush2.msra.mxu0 0.0
      %1373 = vmatprep.subr.mxu0 0.0
      %1374 = vmatpush2.msra.mxu0 0.0
      %1375 = vmatprep.subr.mxu0 0.0
      %1376 = vmatpush2.msra.mxu0 0.0
      %1377 = vmatprep.subr.mxu0 0.0
      %1378 = vmatpush2.msra.mxu0 0.0
      %1379 = vmatprep.subr.mxu0 0.0
      %1380 = vmatpush2.msra.mxu0 0.0
      %1381 = vmatprep.subr.mxu0 0.0
      %1382 = vmatpush2.msra.mxu0 0.0
      %1383 = vmatprep.subr.mxu0 0.0
      %1384 = vmatpush2.msra.mxu0 0.0
      %1385 = vmatprep.subr.mxu0 0.0
      %1386 = vmatpush2.msra.mxu0 0.0
      %1387 = vmatprep.subr.mxu0 0.0
      %1388 = vmatpush2.msra.mxu0 0.0
      %1389 = vmatprep.subr.mxu0 0.0
      %1390 = vmatpush2.msra.mxu0 0.0
      %1391 = vmatprep.subr.mxu0 0.0
      %1392 = vmatpush2.msra.mxu0 0.0
      %1393 = vmatprep.subr.mxu0 0.0
      %1394 = vmatpush2.msra.mxu0 0.0
      %1395 = vmatprep.mubr.f32.mxu0 0.0
      %1396 = vmatmul.mubr.f32.gmra.mxu0 %v1308
      %v1397 = vpop.f32.mrf.mxu0
      %v1398 = vadd.f32 0.0, %v1397
      %v1399 = vpop.f32.mrf.mxu0
      %1400 = vmatprep.mubr.f32.mxu0 0.0
      %1401 = vmatmul.mubr.f32.gmra.mxu0 %v1311
      %v1402 = vpop.f32.mrf.mxu0
      %v1403 = vadd.f32 0.0, %v1402
      %v1404 = vpop.f32.mrf.mxu0
      %1405 = vmatprep.mubr.f32.mxu0 0.0
      %1406 = vmatmul.mubr.f32.gmra.mxu0 %v1314
      %v1407 = vpop.f32.mrf.mxu0
      %v1408 = vadd.f32 0.0, %v1407
      %v1409 = vpop.f32.mrf.mxu0
      %1410 = vmatprep.mubr.f32.mxu0 0.0
      %1411 = vmatmul.mubr.f32.gmra.mxu0 %v1317
      %v1412 = vpop.f32.mrf.mxu0
      %v1413 = vadd.f32 0.0, %v1412
      %v1414 = vpop.f32.mrf.mxu0
      %1415 = vmatprep.mubr.f32.mxu0 0.0
      %1416 = vmatmul.mubr.f32.gmra.mxu0 %v1320
      %v1417 = vpop.f32.mrf.mxu0
      %v1418 = vadd.f32 0.0, %v1417
      %v1419 = vpop.f32.mrf.mxu0
      %1420 = vmatprep.mubr.f32.mxu0 0.0
      %1421 = vmatmul.mubr.f32.gmra.mxu0 %v1323
      %v1422 = vpop.f32.mrf.mxu0
      %v1423 = vadd.f32 0.0, %v1422
      %v1424 = vpop.f32.mrf.mxu0
      %1425 = vmatprep.mubr.f32.mxu0 0.0
      %1426 = vmatmul.mubr.f32.gmra.mxu0 %v1326
      %v1427 = vpop.f32.mrf.mxu0
      %v1428 = vadd.f32 0.0, %v1427
      %v1429 = vpop.f32.mrf.mxu0
      %1430 = vmatprep.mubr.f32.mxu0 0.0
      %1431 = vmatmul.mubr.f32.gmra.mxu0 %v1329
      %v1432 = vpop.f32.mrf.mxu0
      %v1433 = vadd.f32 0.0, %v1432
      %v1434 = vpop.f32.mrf.mxu0
      %1435 = vdwg.mxu0
      %v1436 = vadd.f32 %v1286, %v1398
      %v1437 = vadd.f32 %v1287, %v1403
      %v1438 = vadd.f32 %v1288, %v1408
      %v1439 = vadd.f32 %v1289, %v1413
      %v1440 = vadd.f32 %v1290, %v1418
      %v1441 = vadd.f32 %v1291, %v1423
      %v1442 = vadd.f32 %v1292, %v1428
      %v1443 = vadd.f32 %v1293, %v1433
      %v1444 = vld [vmem:[#allocation2 + $0x11] sm:$0xff]
      %v1445 = vld [vmem:[#allocation2 + $0x19] sm:$0xff]
      %v1446 = vld [vmem:[#allocation2 + $0x21] sm:$0xff]
      %v1447 = vld [vmem:[#allocation2 + $0x29] sm:$0xff]
      %v1448 = vld [vmem:[#allocation2 + $0x31] sm:$0xff]
      %v1449 = vld [vmem:[#allocation2 + $0x39] sm:$0xff]
      %v1450 = vld [vmem:[#allocation2 + $0x41] sm:$0xff]
      %v1451 = vld [vmem:[#allocation2 + $0x49] sm:$0xff]
      %v1452 = vmul.f32 %v1444, %v480
      %v1453 = vmul.f32 %v1445, %v481
      %v1454 = vmul.f32 %v1446, %v482
      %v1455 = vmul.f32 %v1447, %v483
      %v1456 = vmul.f32 %v1448, %v484
      %v1457 = vmul.f32 %v1449, %v485
      %v1458 = vmul.f32 %v1450, %v486
      %v1459 = vmul.f32 %v1451, %v487
      %s1460 = scalar_lea.vmem %s3, 160
      %v1461 = vld [vmem:[%s1460] sm:$0xff]
      %v1462 = vld [vmem:[%s1460 + $0x8] sm:$0xff]
      %v1463 = vld [vmem:[%s1460 + $0x10] sm:$0xff]
      %v1464 = vld [vmem:[%s1460 + $0x18] sm:$0xff]
      %v1466 = vsel %vm666, %v1452, 0
      %v1469 = vsel %vm666, %v1453, 0
      %v1472 = vsel %vm666, %v1454, 0
      %v1475 = vsel %vm666, %v1455, 0
      %v1478 = vsel %vm666, %v1456, 0
      %v1481 = vsel %vm666, %v1457, 0
      %v1484 = vsel %vm666, %v1458, 0
      %v1487 = vsel %vm666, %v1459, 0
      %1489 = vmatprep.subr.mxu0 0.0
      %1490 = vmatpush1.msra.mxu0 0.0
      %1491 = vmatprep.subr.mxu0 0.0
      %1492 = vmatpush1.msra.mxu0 0.0
      %1493 = vmatprep.subr.mxu0 0.0
      %1494 = vmatpush1.msra.mxu0 0.0
      %1495 = vmatprep.subr.mxu0 0.0
      %1496 = vmatpush1.msra.mxu0 0.0
      %1497 = vmatprep.subr.mxu0 0.0
      %1498 = vmatpush1.msra.mxu0 0.0
      %1499 = vmatprep.subr.mxu0 0.0
      %1500 = vmatpush1.msra.mxu0 0.0
      %1501 = vmatprep.subr.mxu0 0.0
      %1502 = vmatpush1.msra.mxu0 0.0
      %1503 = vmatprep.subr.mxu0 0.0
      %1504 = vmatpush1.msra.mxu0 0.0
      %1505 = vmatprep.subr.mxu0 0.0
      %1506 = vmatpush1.msra.mxu0 0.0
      %1507 = vmatprep.subr.mxu0 0.0
      %1508 = vmatpush1.msra.mxu0 0.0
      %1509 = vmatprep.subr.mxu0 0.0
      %1510 = vmatpush1.msra.mxu0 0.0
      %1511 = vmatprep.subr.mxu0 0.0
      %1512 = vmatpush1.msra.mxu0 0.0
      %1513 = vmatprep.subr.mxu0 0.0
      %1514 = vmatpush1.msra.mxu0 %v1464
      %1515 = vmatprep.subr.mxu0 0.0
      %1516 = vmatpush1.msra.mxu0 %v1463
      %1517 = vmatprep.subr.mxu0 0.0
      %1518 = vmatpush1.msra.mxu0 %v1462
      %1519 = vmatprep.subr.mxu0 0.0
      %1520 = vmatpush1.msra.mxu0 %v1461
      %1521 = vmatprep.subr.mxu0 0.0
      %1522 = vmatpush2.msra.mxu0 0.0
      %1523 = vmatprep.subr.mxu0 0.0
      %1524 = vmatpush2.msra.mxu0 0.0
      %1525 = vmatprep.subr.mxu0 0.0
      %1526 = vmatpush2.msra.mxu0 0.0
      %1527 = vmatprep.subr.mxu0 0.0
      %1528 = vmatpush2.msra.mxu0 0.0
      %1529 = vmatprep.subr.mxu0 0.0
      %1530 = vmatpush2.msra.mxu0 0.0
      %1531 = vmatprep.subr.mxu0 0.0
      %1532 = vmatpush2.msra.mxu0 0.0
      %1533 = vmatprep.subr.mxu0 0.0
      %1534 = vmatpush2.msra.mxu0 0.0
      %1535 = vmatprep.subr.mxu0 0.0
      %1536 = vmatpush2.msra.mxu0 0.0
      %1537 = vmatprep.subr.mxu0 0.0
      %1538 = vmatpush2.msra.mxu0 0.0
      %1539 = vmatprep.subr.mxu0 0.0
      %1540 = vmatpush2.msra.mxu0 0.0
      %1541 = vmatprep.subr.mxu0 0.0
      %1542 = vmatpush2.msra.mxu0 0.0
      %1543 = vmatprep.subr.mxu0 0.0
      %1544 = vmatpush2.msra.mxu0 0.0
      %1545 = vmatprep.subr.mxu0 0.0
      %1546 = vmatpush2.msra.mxu0 0.0
      %1547 = vmatprep.subr.mxu0 0.0
      %1548 = vmatpush2.msra.mxu0 0.0
      %1549 = vmatprep.subr.mxu0 0.0
      %1550 = vmatpush2.msra.mxu0 0.0
      %1551 = vmatprep.subr.mxu0 0.0
      %1552 = vmatpush2.msra.mxu0 0.0
      %1553 = vmatprep.mubr.f32.mxu0 0.0
      %1554 = vmatmul.mubr.f32.gmra.mxu0 %v1466
      %v1555 = vpop.f32.mrf.mxu0
      %v1556 = vadd.f32 0.0, %v1555
      %v1557 = vpop.f32.mrf.mxu0
      %1558 = vmatprep.mubr.f32.mxu0 0.0
      %1559 = vmatmul.mubr.f32.gmra.mxu0 %v1469
      %v1560 = vpop.f32.mrf.mxu0
      %v1561 = vadd.f32 0.0, %v1560
      %v1562 = vpop.f32.mrf.mxu0
      %1563 = vmatprep.mubr.f32.mxu0 0.0
      %1564 = vmatmul.mubr.f32.gmra.mxu0 %v1472
      %v1565 = vpop.f32.mrf.mxu0
      %v1566 = vadd.f32 0.0, %v1565
      %v1567 = vpop.f32.mrf.mxu0
      %1568 = vmatprep.mubr.f32.mxu0 0.0
      %1569 = vmatmul.mubr.f32.gmra.mxu0 %v1475
      %v1570 = vpop.f32.mrf.mxu0
      %v1571 = vadd.f32 0.0, %v1570
      %v1572 = vpop.f32.mrf.mxu0
      %1573 = vmatprep.mubr.f32.mxu0 0.0
      %1574 = vmatmul.mubr.f32.gmra.mxu0 %v1478
      %v1575 = vpop.f32.mrf.mxu0
      %v1576 = vadd.f32 0.0, %v1575
      %v1577 = vpop.f32.mrf.mxu0
      %1578 = vmatprep.mubr.f32.mxu0 0.0
      %1579 = vmatmul.mubr.f32.gmra.mxu0 %v1481
      %v1580 = vpop.f32.mrf.mxu0
      %v1581 = vadd.f32 0.0, %v1580
      %v1582 = vpop.f32.mrf.mxu0
      %1583 = vmatprep.mubr.f32.mxu0 0.0
      %1584 = vmatmul.mubr.f32.gmra.mxu0 %v1484
      %v1585 = vpop.f32.mrf.mxu0
      %v1586 = vadd.f32 0.0, %v1585
      %v1587 = vpop.f32.mrf.mxu0
      %1588 = vmatprep.mubr.f32.mxu0 0.0
      %1589 = vmatmul.mubr.f32.gmra.mxu0 %v1487
      %v1590 = vpop.f32.mrf.mxu0
      %v1591 = vadd.f32 0.0, %v1590
      %v1592 = vpop.f32.mrf.mxu0
      %1593 = vdwg.mxu0
      %v1594 = vadd.f32 %v1436, %v1556
      %v1595 = vadd.f32 %v1437, %v1561
      %v1596 = vadd.f32 %v1438, %v1566
      %v1597 = vadd.f32 %v1439, %v1571
      %v1598 = vadd.f32 %v1440, %v1576
      %v1599 = vadd.f32 %v1441, %v1581
      %v1600 = vadd.f32 %v1442, %v1586
      %v1601 = vadd.f32 %v1443, %v1591
      %v1602 = vld [vmem:[#allocation2 + $0x17] sm:$0xff]
      %v1603 = vld [vmem:[#allocation2 + $0x1f] sm:$0xff]
      %v1604 = vld [vmem:[#allocation2 + $0x27] sm:$0xff]
      %v1605 = vld [vmem:[#allocation2 + $0x2f] sm:$0xff]
      %v1606 = vld [vmem:[#allocation2 + $0x37] sm:$0xff]
      %v1607 = vld [vmem:[#allocation2 + $0x3f] sm:$0xff]
      %v1608 = vld [vmem:[#allocation2 + $0x47] sm:$0xff]
      %v1609 = vld [vmem:[#allocation2 + $0x4f] sm:$0xff]
      %v1610 = vmul.f32 %v1602, %v456
      %v1611 = vmul.f32 %v1603, %v457
      %v1612 = vmul.f32 %v1604, %v458
      %v1613 = vmul.f32 %v1605, %v459
      %v1614 = vmul.f32 %v1606, %v460
      %v1615 = vmul.f32 %v1607, %v461
      %v1616 = vmul.f32 %v1608, %v462
      %v1617 = vmul.f32 %v1609, %v463
      %s1618 = scalar_lea.vmem %s3, 192
      %v1619 = vld [vmem:[%s1618] sm:$0xff]
      %v1620 = vld [vmem:[%s1618 + $0x8] sm:$0xff]
      %v1621 = vld [vmem:[%s1618 + $0x10] sm:$0xff]
      %v1622 = vld [vmem:[%s1618 + $0x18] sm:$0xff]
      %v1624 = vsel %vm666, %v1610, 0
      %v1627 = vsel %vm666, %v1611, 0
      %v1630 = vsel %vm666, %v1612, 0
      %v1633 = vsel %vm666, %v1613, 0
      %v1636 = vsel %vm666, %v1614, 0
      %v1639 = vsel %vm666, %v1615, 0
      %v1642 = vsel %vm666, %v1616, 0
      %v1645 = vsel %vm666, %v1617, 0
      %1647 = vmatprep.subr.mxu0 0.0
      %1648 = vmatpush1.msra.mxu0 0.0
      %1649 = vmatprep.subr.mxu0 0.0
      %1650 = vmatpush1.msra.mxu0 0.0
      %1651 = vmatprep.subr.mxu0 0.0
      %1652 = vmatpush1.msra.mxu0 0.0
      %1653 = vmatprep.subr.mxu0 0.0
      %1654 = vmatpush1.msra.mxu0 0.0
      %1655 = vmatprep.subr.mxu0 0.0
      %1656 = vmatpush1.msra.mxu0 0.0
      %1657 = vmatprep.subr.mxu0 0.0
      %1658 = vmatpush1.msra.mxu0 0.0
      %1659 = vmatprep.subr.mxu0 0.0
      %1660 = vmatpush1.msra.mxu0 0.0
      %1661 = vmatprep.subr.mxu0 0.0
      %1662 = vmatpush1.msra.mxu0 0.0
      %1663 = vmatprep.subr.mxu0 0.0
      %1664 = vmatpush1.msra.mxu0 0.0
      %1665 = vmatprep.subr.mxu0 0.0
      %1666 = vmatpush1.msra.mxu0 0.0
      %1667 = vmatprep.subr.mxu0 0.0
      %1668 = vmatpush1.msra.mxu0 0.0
      %1669 = vmatprep.subr.mxu0 0.0
      %1670 = vmatpush1.msra.mxu0 0.0
      %1671 = vmatprep.subr.mxu0 0.0
      %1672 = vmatpush1.msra.mxu0 %v1622
      %1673 = vmatprep.subr.mxu0 0.0
      %1674 = vmatpush1.msra.mxu0 %v1621
      %1675 = vmatprep.subr.mxu0 0.0
      %1676 = vmatpush1.msra.mxu0 %v1620
      %1677 = vmatprep.subr.mxu0 0.0
      %1678 = vmatpush1.msra.mxu0 %v1619
      %1679 = vmatprep.subr.mxu0 0.0
      %1680 = vmatpush2.msra.mxu0 0.0
      %1681 = vmatprep.subr.mxu0 0.0
      %1682 = vmatpush2.msra.mxu0 0.0
      %1683 = vmatprep.subr.mxu0 0.0
      %1684 = vmatpush2.msra.mxu0 0.0
      %1685 = vmatprep.subr.mxu0 0.0
      %1686 = vmatpush2.msra.mxu0 0.0
      %1687 = vmatprep.subr.mxu0 0.0
      %1688 = vmatpush2.msra.mxu0 0.0
      %1689 = vmatprep.subr.mxu0 0.0
      %1690 = vmatpush2.msra.mxu0 0.0
      %1691 = vmatprep.subr.mxu0 0.0
      %1692 = vmatpush2.msra.mxu0 0.0
      %1693 = vmatprep.subr.mxu0 0.0
      %1694 = vmatpush2.msra.mxu0 0.0
      %1695 = vmatprep.subr.mxu0 0.0
      %1696 = vmatpush2.msra.mxu0 0.0
      %1697 = vmatprep.subr.mxu0 0.0
      %1698 = vmatpush2.msra.mxu0 0.0
      %1699 = vmatprep.subr.mxu0 0.0
      %1700 = vmatpush2.msra.mxu0 0.0
      %1701 = vmatprep.subr.mxu0 0.0
      %1702 = vmatpush2.msra.mxu0 0.0
      %1703 = vmatprep.subr.mxu0 0.0
      %1704 = vmatpush2.msra.mxu0 0.0
      %1705 = vmatprep.subr.mxu0 0.0
      %1706 = vmatpush2.msra.mxu0 0.0
      %1707 = vmatprep.subr.mxu0 0.0
      %1708 = vmatpush2.msra.mxu0 0.0
      %1709 = vmatprep.subr.mxu0 0.0
      %1710 = vmatpush2.msra.mxu0 0.0
      %1711 = vmatprep.mubr.f32.mxu0 0.0
      %1712 = vmatmul.mubr.f32.gmra.mxu0 %v1624
      %v1713 = vpop.f32.mrf.mxu0
      %v1714 = vadd.f32 0.0, %v1713
      %v1715 = vpop.f32.mrf.mxu0
      %1716 = vmatprep.mubr.f32.mxu0 0.0
      %1717 = vmatmul.mubr.f32.gmra.mxu0 %v1627
      %v1718 = vpop.f32.mrf.mxu0
      %v1719 = vadd.f32 0.0, %v1718
      %v1720 = vpop.f32.mrf.mxu0
      %1721 = vmatprep.mubr.f32.mxu0 0.0
      %1722 = vmatmul.mubr.f32.gmra.mxu0 %v1630
      %v1723 = vpop.f32.mrf.mxu0
      %v1724 = vadd.f32 0.0, %v1723
      %v1725 = vpop.f32.mrf.mxu0
      %1726 = vmatprep.mubr.f32.mxu0 0.0
      %1727 = vmatmul.mubr.f32.gmra.mxu0 %v1633
      %v1728 = vpop.f32.mrf.mxu0
      %v1729 = vadd.f32 0.0, %v1728
      %v1730 = vpop.f32.mrf.mxu0
      %1731 = vmatprep.mubr.f32.mxu0 0.0
      %1732 = vmatmul.mubr.f32.gmra.mxu0 %v1636
      %v1733 = vpop.f32.mrf.mxu0
      %v1734 = vadd.f32 0.0, %v1733
      %v1735 = vpop.f32.mrf.mxu0
      %1736 = vmatprep.mubr.f32.mxu0 0.0
      %1737 = vmatmul.mubr.f32.gmra.mxu0 %v1639
      %v1738 = vpop.f32.mrf.mxu0
      %v1739 = vadd.f32 0.0, %v1738
      %v1740 = vpop.f32.mrf.mxu0
      %1741 = vmatprep.mubr.f32.mxu0 0.0
      %1742 = vmatmul.mubr.f32.gmra.mxu0 %v1642
      %v1743 = vpop.f32.mrf.mxu0
      %v1744 = vadd.f32 0.0, %v1743
      %v1745 = vpop.f32.mrf.mxu0
      %1746 = vmatprep.mubr.f32.mxu0 0.0
      %1747 = vmatmul.mubr.f32.gmra.mxu0 %v1645
      %v1748 = vpop.f32.mrf.mxu0
      %v1749 = vadd.f32 0.0, %v1748
      %v1750 = vpop.f32.mrf.mxu0
      %1751 = vdwg.mxu0
      %v1752 = vadd.f32 %v1594, %v1714
      %v1753 = vadd.f32 %v1595, %v1719
      %v1754 = vadd.f32 %v1596, %v1724
      %v1755 = vadd.f32 %v1597, %v1729
      %v1756 = vadd.f32 %v1598, %v1734
      %v1757 = vadd.f32 %v1599, %v1739
      %v1758 = vadd.f32 %v1600, %v1744
      %v1759 = vadd.f32 %v1601, %v1749
      %v1760 = vld [vmem:[#allocation2 + $0x18] sm:$0xff]
      %v1761 = vld [vmem:[#allocation2 + $0x20] sm:$0xff]
      %v1762 = vld [vmem:[#allocation2 + $0x28] sm:$0xff]
      %v1763 = vld [vmem:[#allocation2 + $0x30] sm:$0xff]
      %v1764 = vld [vmem:[#allocation2 + $0x38] sm:$0xff]
      %v1765 = vld [vmem:[#allocation2 + $0x40] sm:$0xff]
      %v1766 = vld [vmem:[#allocation2 + $0x48] sm:$0xff]
      %v1767 = vld [vmem:[#allocation2 + $0x50] sm:$0xff]
      %s1768 = scalar_lea.vmem %s3, 224
      %v1769 = vld [vmem:[%s1768] sm:$0xff]
      %v1770 = vld [vmem:[%s1768 + $0x8] sm:$0xff]
      %v1771 = vld [vmem:[%s1768 + $0x10] sm:$0xff]
      %v1772 = vld [vmem:[%s1768 + $0x18] sm:$0xff]
      %v1774 = vsel %vm666, %v1760, 0
      %v1777 = vsel %vm666, %v1761, 0
      %v1780 = vsel %vm666, %v1762, 0
      %v1783 = vsel %vm666, %v1763, 0
      %v1786 = vsel %vm666, %v1764, 0
      %v1789 = vsel %vm666, %v1765, 0
      %v1792 = vsel %vm666, %v1766, 0
      %v1795 = vsel %vm666, %v1767, 0
      %1797 = vmatprep.subr.mxu0 0.0
      %1798 = vmatpush1.msra.mxu0 0.0
      %1799 = vmatprep.subr.mxu0 0.0
      %1800 = vmatpush1.msra.mxu0 0.0
      %1801 = vmatprep.subr.mxu0 0.0
      %1802 = vmatpush1.msra.mxu0 0.0
      %1803 = vmatprep.subr.mxu0 0.0
      %1804 = vmatpush1.msra.mxu0 0.0
      %1805 = vmatprep.subr.mxu0 0.0
      %1806 = vmatpush1.msra.mxu0 0.0
      %1807 = vmatprep.subr.mxu0 0.0
      %1808 = vmatpush1.msra.mxu0 0.0
      %1809 = vmatprep.subr.mxu0 0.0
      %1810 = vmatpush1.msra.mxu0 0.0
      %1811 = vmatprep.subr.mxu0 0.0
      %1812 = vmatpush1.msra.mxu0 0.0
      %1813 = vmatprep.subr.mxu0 0.0
      %1814 = vmatpush1.msra.mxu0 0.0
      %1815 = vmatprep.subr.mxu0 0.0
      %1816 = vmatpush1.msra.mxu0 0.0
      %1817 = vmatprep.subr.mxu0 0.0
      %1818 = vmatpush1.msra.mxu0 0.0
      %1819 = vmatprep.subr.mxu0 0.0
      %1820 = vmatpush1.msra.mxu0 0.0
      %1821 = vmatprep.subr.mxu0 0.0
      %1822 = vmatpush1.msra.mxu0 %v1772
      %1823 = vmatprep.subr.mxu0 0.0
      %1824 = vmatpush1.msra.mxu0 %v1771
      %1825 = vmatprep.subr.mxu0 0.0
      %1826 = vmatpush1.msra.mxu0 %v1770
      %1827 = vmatprep.subr.mxu0 0.0
      %1828 = vmatpush1.msra.mxu0 %v1769
      %1829 = vmatprep.subr.mxu0 0.0
      %1830 = vmatpush2.msra.mxu0 0.0
      %1831 = vmatprep.subr.mxu0 0.0
      %1832 = vmatpush2.msra.mxu0 0.0
      %1833 = vmatprep.subr.mxu0 0.0
      %1834 = vmatpush2.msra.mxu0 0.0
      %1835 = vmatprep.subr.mxu0 0.0
      %1836 = vmatpush2.msra.mxu0 0.0
      %1837 = vmatprep.subr.mxu0 0.0
      %1838 = vmatpush2.msra.mxu0 0.0
      %1839 = vmatprep.subr.mxu0 0.0
      %1840 = vmatpush2.msra.mxu0 0.0
      %1841 = vmatprep.subr.mxu0 0.0
      %1842 = vmatpush2.msra.mxu0 0.0
      %1843 = vmatprep.subr.mxu0 0.0
      %1844 = vmatpush2.msra.mxu0 0.0
      %1845 = vmatprep.subr.mxu0 0.0
      %1846 = vmatpush2.msra.mxu0 0.0
      %1847 = vmatprep.subr.mxu0 0.0
      %1848 = vmatpush2.msra.mxu0 0.0
      %1849 = vmatprep.subr.mxu0 0.0
      %1850 = vmatpush2.msra.mxu0 0.0
      %1851 = vmatprep.subr.mxu0 0.0
      %1852 = vmatpush2.msra.mxu0 0.0
      %1853 = vmatprep.subr.mxu0 0.0
      %1854 = vmatpush2.msra.mxu0 0.0
      %1855 = vmatprep.subr.mxu0 0.0
      %1856 = vmatpush2.msra.mxu0 0.0
      %1857 = vmatprep.subr.mxu0 0.0
      %1858 = vmatpush2.msra.mxu0 0.0
      %1859 = vmatprep.subr.mxu0 0.0
      %1860 = vmatpush2.msra.mxu0 0.0
      %1861 = vmatprep.mubr.f32.mxu0 0.0
      %1862 = vmatmul.mubr.f32.gmra.mxu0 %v1774
      %v1863 = vpop.f32.mrf.mxu0
      %v1864 = vadd.f32 0.0, %v1863
      %v1865 = vpop.f32.mrf.mxu0
      %1866 = vmatprep.mubr.f32.mxu0 0.0
      %1867 = vmatmul.mubr.f32.gmra.mxu0 %v1777
      %v1868 = vpop.f32.mrf.mxu0
      %v1869 = vadd.f32 0.0, %v1868
      %v1870 = vpop.f32.mrf.mxu0
      %1871 = vmatprep.mubr.f32.mxu0 0.0
      %1872 = vmatmul.mubr.f32.gmra.mxu0 %v1780
      %v1873 = vpop.f32.mrf.mxu0
      %v1874 = vadd.f32 0.0, %v1873
      %v1875 = vpop.f32.mrf.mxu0
      %1876 = vmatprep.mubr.f32.mxu0 0.0
      %1877 = vmatmul.mubr.f32.gmra.mxu0 %v1783
      %v1878 = vpop.f32.mrf.mxu0
      %v1879 = vadd.f32 0.0, %v1878
      %v1880 = vpop.f32.mrf.mxu0
      %1881 = vmatprep.mubr.f32.mxu0 0.0
      %1882 = vmatmul.mubr.f32.gmra.mxu0 %v1786
      %v1883 = vpop.f32.mrf.mxu0
      %v1884 = vadd.f32 0.0, %v1883
      %v1885 = vpop.f32.mrf.mxu0
      %1886 = vmatprep.mubr.f32.mxu0 0.0
      %1887 = vmatmul.mubr.f32.gmra.mxu0 %v1789
      %v1888 = vpop.f32.mrf.mxu0
      %v1889 = vadd.f32 0.0, %v1888
      %v1890 = vpop.f32.mrf.mxu0
      %1891 = vmatprep.mubr.f32.mxu0 0.0
      %1892 = vmatmul.mubr.f32.gmra.mxu0 %v1792
      %v1893 = vpop.f32.mrf.mxu0
      %v1894 = vadd.f32 0.0, %v1893
      %v1895 = vpop.f32.mrf.mxu0
      %1896 = vmatprep.mubr.f32.mxu0 0.0
      %1897 = vmatmul.mubr.f32.gmra.mxu0 %v1795
      %v1898 = vpop.f32.mrf.mxu0
      %v1899 = vadd.f32 0.0, %v1898
      %v1900 = vpop.f32.mrf.mxu0
      %1901 = vdwg.mxu0
      %v1902 = vadd.f32 %v1752, %v1864
      %v1903 = vadd.f32 %v1753, %v1869
      %v1904 = vadd.f32 %v1754, %v1874
      %v1905 = vadd.f32 %v1755, %v1879
      %v1906 = vadd.f32 %v1756, %v1884
      %v1907 = vadd.f32 %v1757, %v1889
      %v1908 = vadd.f32 %v1758, %v1894
      %v1909 = vadd.f32 %v1759, %v1899
      %v1910 = vld [vmem:[#allocation2 + $0x19] sm:$0xff]
      %v1911 = vld [vmem:[#allocation2 + $0x21] sm:$0xff]
      %v1912 = vld [vmem:[#allocation2 + $0x29] sm:$0xff]
      %v1913 = vld [vmem:[#allocation2 + $0x31] sm:$0xff]
      %v1914 = vld [vmem:[#allocation2 + $0x39] sm:$0xff]
      %v1915 = vld [vmem:[#allocation2 + $0x41] sm:$0xff]
      %v1916 = vld [vmem:[#allocation2 + $0x49] sm:$0xff]
      %v1917 = vld [vmem:[#allocation2 + $0x51] sm:$0xff]
      %v1918 = vmul.f32 %v1910, %v480
      %v1919 = vmul.f32 %v1911, %v481
      %v1920 = vmul.f32 %v1912, %v482
      %v1921 = vmul.f32 %v1913, %v483
      %v1922 = vmul.f32 %v1914, %v484
      %v1923 = vmul.f32 %v1915, %v485
      %v1924 = vmul.f32 %v1916, %v486
      %v1925 = vmul.f32 %v1917, %v487
      %s1926 = scalar_lea.vmem %s3, 256
      %v1927 = vld [vmem:[%s1926] sm:$0xff]
      %v1928 = vld [vmem:[%s1926 + $0x8] sm:$0xff]
      %v1929 = vld [vmem:[%s1926 + $0x10] sm:$0xff]
      %v1930 = vld [vmem:[%s1926 + $0x18] sm:$0xff]
      %v1932 = vsel %vm666, %v1918, 0
      %v1935 = vsel %vm666, %v1919, 0
      %v1938 = vsel %vm666, %v1920, 0
      %v1941 = vsel %vm666, %v1921, 0
      %v1944 = vsel %vm666, %v1922, 0
      %v1947 = vsel %vm666, %v1923, 0
      %v1950 = vsel %vm666, %v1924, 0
      %v1953 = vsel %vm666, %v1925, 0
      %1955 = vmatprep.subr.mxu0 0.0
      %1956 = vmatpush1.msra.mxu0 0.0
      %1957 = vmatprep.subr.mxu0 0.0
      %1958 = vmatpush1.msra.mxu0 0.0
      %1959 = vmatprep.subr.mxu0 0.0
      %1960 = vmatpush1.msra.mxu0 0.0
      %1961 = vmatprep.subr.mxu0 0.0
      %1962 = vmatpush1.msra.mxu0 0.0
      %1963 = vmatprep.subr.mxu0 0.0
      %1964 = vmatpush1.msra.mxu0 0.0
      %1965 = vmatprep.subr.mxu0 0.0
      %1966 = vmatpush1.msra.mxu0 0.0
      %1967 = vmatprep.subr.mxu0 0.0
      %1968 = vmatpush1.msra.mxu0 0.0
      %1969 = vmatprep.subr.mxu0 0.0
      %1970 = vmatpush1.msra.mxu0 0.0
      %1971 = vmatprep.subr.mxu0 0.0
      %1972 = vmatpush1.msra.mxu0 0.0
      %1973 = vmatprep.subr.mxu0 0.0
      %1974 = vmatpush1.msra.mxu0 0.0
      %1975 = vmatprep.subr.mxu0 0.0
      %1976 = vmatpush1.msra.mxu0 0.0
      %1977 = vmatprep.subr.mxu0 0.0
      %1978 = vmatpush1.msra.mxu0 0.0
      %1979 = vmatprep.subr.mxu0 0.0
      %1980 = vmatpush1.msra.mxu0 %v1930
      %1981 = vmatprep.subr.mxu0 0.0
      %1982 = vmatpush1.msra.mxu0 %v1929
      %1983 = vmatprep.subr.mxu0 0.0
      %1984 = vmatpush1.msra.mxu0 %v1928
      %1985 = vmatprep.subr.mxu0 0.0
      %1986 = vmatpush1.msra.mxu0 %v1927
      %1987 = vmatprep.subr.mxu0 0.0
      %1988 = vmatpush2.msra.mxu0 0.0
      %1989 = vmatprep.subr.mxu0 0.0
      %1990 = vmatpush2.msra.mxu0 0.0
      %1991 = vmatprep.subr.mxu0 0.0
      %1992 = vmatpush2.msra.mxu0 0.0
      %1993 = vmatprep.subr.mxu0 0.0
      %1994 = vmatpush2.msra.mxu0 0.0
      %1995 = vmatprep.subr.mxu0 0.0
      %1996 = vmatpush2.msra.mxu0 0.0
      %1997 = vmatprep.subr.mxu0 0.0
      %1998 = vmatpush2.msra.mxu0 0.0
      %1999 = vmatprep.subr.mxu0 0.0
      %2000 = vmatpush2.msra.mxu0 0.0
      %2001 = vmatprep.subr.mxu0 0.0
      %2002 = vmatpush2.msra.mxu0 0.0
      %2003 = vmatprep.subr.mxu0 0.0
      %2004 = vmatpush2.msra.mxu0 0.0
      %2005 = vmatprep.subr.mxu0 0.0
      %2006 = vmatpush2.msra.mxu0 0.0
      %2007 = vmatprep.subr.mxu0 0.0
      %2008 = vmatpush2.msra.mxu0 0.0
      %2009 = vmatprep.subr.mxu0 0.0
      %2010 = vmatpush2.msra.mxu0 0.0
      %2011 = vmatprep.subr.mxu0 0.0
      %2012 = vmatpush2.msra.mxu0 0.0
      %2013 = vmatprep.subr.mxu0 0.0
      %2014 = vmatpush2.msra.mxu0 0.0
      %2015 = vmatprep.subr.mxu0 0.0
      %2016 = vmatpush2.msra.mxu0 0.0
      %2017 = vmatprep.subr.mxu0 0.0
      %2018 = vmatpush2.msra.mxu0 0.0
      %2019 = vmatprep.mubr.f32.mxu0 0.0
      %2020 = vmatmul.mubr.f32.gmra.mxu0 %v1932
      %v2021 = vpop.f32.mrf.mxu0
      %v2022 = vadd.f32 0.0, %v2021
      %v2023 = vpop.f32.mrf.mxu0
      %2024 = vmatprep.mubr.f32.mxu0 0.0
      %2025 = vmatmul.mubr.f32.gmra.mxu0 %v1935
      %v2026 = vpop.f32.mrf.mxu0
      %v2027 = vadd.f32 0.0, %v2026
      %v2028 = vpop.f32.mrf.mxu0
      %2029 = vmatprep.mubr.f32.mxu0 0.0
      %2030 = vmatmul.mubr.f32.gmra.mxu0 %v1938
      %v2031 = vpop.f32.mrf.mxu0
      %v2032 = vadd.f32 0.0, %v2031
      %v2033 = vpop.f32.mrf.mxu0
      %2034 = vmatprep.mubr.f32.mxu0 0.0
      %2035 = vmatmul.mubr.f32.gmra.mxu0 %v1941
      %v2036 = vpop.f32.mrf.mxu0
      %v2037 = vadd.f32 0.0, %v2036
      %v2038 = vpop.f32.mrf.mxu0
      %2039 = vmatprep.mubr.f32.mxu0 0.0
      %2040 = vmatmul.mubr.f32.gmra.mxu0 %v1944
      %v2041 = vpop.f32.mrf.mxu0
      %v2042 = vadd.f32 0.0, %v2041
      %v2043 = vpop.f32.mrf.mxu0
      %2044 = vmatprep.mubr.f32.mxu0 0.0
      %2045 = vmatmul.mubr.f32.gmra.mxu0 %v1947
      %v2046 = vpop.f32.mrf.mxu0
      %v2047 = vadd.f32 0.0, %v2046
      %v2048 = vpop.f32.mrf.mxu0
      %2049 = vmatprep.mubr.f32.mxu0 0.0
      %2050 = vmatmul.mubr.f32.gmra.mxu0 %v1950
      %v2051 = vpop.f32.mrf.mxu0
      %v2052 = vadd.f32 0.0, %v2051
      %v2053 = vpop.f32.mrf.mxu0
      %2054 = vmatprep.mubr.f32.mxu0 0.0
      %2055 = vmatmul.mubr.f32.gmra.mxu0 %v1953
      %v2056 = vpop.f32.mrf.mxu0
      %v2057 = vadd.f32 0.0, %v2056
      %v2058 = vpop.f32.mrf.mxu0
      %2059 = vdwg.mxu0
      %v2060 = vadd.f32 %v1902, %v2022
      %v2061 = vadd.f32 %v1903, %v2027
      %v2062 = vadd.f32 %v1904, %v2032
      %v2063 = vadd.f32 %v1905, %v2037
      %v2064 = vadd.f32 %v1906, %v2042
      %v2065 = vadd.f32 %v1907, %v2047
      %v2066 = vadd.f32 %v1908, %v2052
      %v2067 = vadd.f32 %v1909, %v2057
      %v2068 = vld [vmem:[%s4] sm:$0x1]
      %v2070 = vlaneseq
      %v2071 = vshrl.u32 %v2070, 7
      %v2072 = vsub.s32 0, %v2071
      %v2073 = vrot.slane %v2068, %v2072
      %v2075 = vadd.f32 %v2060, %v2073
      %v2076 = vadd.f32 %v2061, %v2073
      %v2077 = vadd.f32 %v2062, %v2073
      %v2078 = vadd.f32 %v2063, %v2073
      %v2079 = vadd.f32 %v2064, %v2073
      %v2080 = vadd.f32 %v2065, %v2073
      %v2081 = vadd.f32 %v2066, %v2073
      %v2082 = vadd.f32 %v2067, %v2073
      %vm2083 = vcmp.gt.f32.partialorder %v2075, 0.0
      %vm2084 = vcmp.gt.f32.partialorder %v2076, 0.0
      %vm2085 = vcmp.gt.f32.partialorder %v2077, 0.0
      %vm2086 = vcmp.gt.f32.partialorder %v2078, 0.0
      %vm2087 = vcmp.gt.f32.partialorder %v2079, 0.0
      %vm2088 = vcmp.gt.f32.partialorder %v2080, 0.0
      %vm2089 = vcmp.gt.f32.partialorder %v2081, 0.0
      %vm2090 = vcmp.gt.f32.partialorder %v2082, 0.0
      %v2091 = vmul.f32 %v2075, 0.2
      %v2092 = vmul.f32 %v2076, 0.2
      %v2093 = vmul.f32 %v2077, 0.2
      %v2094 = vmul.f32 %v2078, 0.2
      %v2095 = vmul.f32 %v2079, 0.2
      %v2096 = vmul.f32 %v2080, 0.2
      %v2097 = vmul.f32 %v2081, 0.2
      %v2098 = vmul.f32 %v2082, 0.2
      %v2099 = vsel %vm2083, %v2075, %v2091
      %v2100 = vsel %vm2084, %v2076, %v2092
      %v2101 = vsel %vm2085, %v2077, %v2093
      %v2102 = vsel %vm2086, %v2078, %v2094
      %v2103 = vsel %vm2087, %v2079, %v2095
      %v2104 = vsel %vm2088, %v2080, %v2096
      %v2105 = vsel %vm2089, %v2081, %v2097
      %v2106 = vsel %vm2090, %v2082, %v2098
      %vm2107 = vcmask 523264
      %2108 = vst.msk [vmem:[#allocation3] sm:$0xff] %vm2107, 0.0
      %2109 = vst.msk [vmem:[#allocation3 + $0x8] sm:$0xff] %vm2107, 0.0
      %2110 = vst.msk [vmem:[#allocation3 + $0x10] sm:$0xff] %vm2107, 0.0
      %2111 = vst.msk [vmem:[#allocation3 + $0x18] sm:$0xff] %vm2107, 0.0
      %2112 = vst.msk [vmem:[#allocation3 + $0x20] sm:$0xff] %vm2107, 0.0
      %2113 = vst.msk [vmem:[#allocation3 + $0x28] sm:$0xff] %vm2107, 0.0
      %2114 = vst.msk [vmem:[#allocation3 + $0x30] sm:$0xff] %vm2107, 0.0
      %2115 = vst.msk [vmem:[#allocation3 + $0x38] sm:$0xff] %vm2107, 0.0
      %2116 = vst.msk [vmem:[#allocation3 + $0x40] sm:$0xff] %vm2107, 0.0
      %2117 = vst.msk [vmem:[#allocation3 + $0x48] sm:$0xff] %vm2107, 0.0
      %2118 = vst.msk [vmem:[#allocation3 + $0x50] sm:$0xff] %vm2107, 0.0
      %2119 = vst.msk [vmem:[#allocation3 + $0x58] sm:$0xff] %vm2107, 0.0
      %2120 = vst.msk [vmem:[#allocation3 + $0x10] sm:$0xff] %vm2107, %v2099
      %2121 = vst.msk [vmem:[#allocation3 + $0x18] sm:$0xff] %vm2107, %v2100
      %2122 = vst.msk [vmem:[#allocation3 + $0x20] sm:$0xff] %vm2107, %v2101
      %2123 = vst.msk [vmem:[#allocation3 + $0x28] sm:$0xff] %vm2107, %v2102
      %2124 = vst.msk [vmem:[#allocation3 + $0x30] sm:$0xff] %vm2107, %v2103
      %2125 = vst.msk [vmem:[#allocation3 + $0x38] sm:$0xff] %vm2107, %v2104
      %2126 = vst.msk [vmem:[#allocation3 + $0x40] sm:$0xff] %vm2107, %v2105
      %2127 = vst.msk [vmem:[#allocation3 + $0x48] sm:$0xff] %vm2107, %v2106
      %v2128 = vld [vmem:[#allocation3 + $0x7] sm:$0xff]
      %v2129 = vld [vmem:[#allocation3 + $0xf] sm:$0xff]
      %v2130 = vld [vmem:[#allocation3 + $0x17] sm:$0xff]
      %v2131 = vld [vmem:[#allocation3 + $0x1f] sm:$0xff]
      %v2132 = vld [vmem:[#allocation3 + $0x27] sm:$0xff]
      %v2133 = vld [vmem:[#allocation3 + $0x2f] sm:$0xff]
      %v2134 = vld [vmem:[#allocation3 + $0x37] sm:$0xff]
      %v2135 = vld [vmem:[#allocation3 + $0x3f] sm:$0xff]
      %v2136 = vmul.f32 %v2128, %v456
      %v2137 = vmul.f32 %v2129, %v457
      %v2138 = vmul.f32 %v2130, %v458
      %v2139 = vmul.f32 %v2131, %v459
      %v2140 = vmul.f32 %v2132, %v460
      %v2141 = vmul.f32 %v2133, %v461
      %v2142 = vmul.f32 %v2134, %v462
      %v2143 = vmul.f32 %v2135, %v463
      %v2144 = vld [vmem:[%s5] sm:$0xff]
      %v2145 = vld [vmem:[%s5 + $0x8] sm:$0xff]
      %v2146 = vld [vmem:[%s5 + $0x10] sm:$0xff]
      %v2147 = vld [vmem:[%s5 + $0x18] sm:$0xff]
      %v2148 = vld [vmem:[%s5 + $0x20] sm:$0xff]
      %v2149 = vld [vmem:[%s5 + $0x28] sm:$0xff]
      %v2150 = vld [vmem:[%s5 + $0x30] sm:$0xff]
      %v2151 = vld [vmem:[%s5 + $0x38] sm:$0xff]
      %v2152 = vld [vmem:[#allocation3 + $0x8] sm:$0xff]
      %v2153 = vld [vmem:[#allocation3 + $0x10] sm:$0xff]
      %v2154 = vld [vmem:[#allocation3 + $0x18] sm:$0xff]
      %v2155 = vld [vmem:[#allocation3 + $0x20] sm:$0xff]
      %v2156 = vld [vmem:[#allocation3 + $0x28] sm:$0xff]
      %v2157 = vld [vmem:[#allocation3 + $0x30] sm:$0xff]
      %v2158 = vld [vmem:[#allocation3 + $0x38] sm:$0xff]
      %v2159 = vld [vmem:[#allocation3 + $0x40] sm:$0xff]
      %s2160 = scalar_lea.vmem %s5, 64
      %v2161 = vld [vmem:[%s2160] sm:$0xff]
      %v2162 = vld [vmem:[%s2160 + $0x8] sm:$0xff]
      %v2163 = vld [vmem:[%s2160 + $0x10] sm:$0xff]
      %v2164 = vld [vmem:[%s2160 + $0x18] sm:$0xff]
      %v2165 = vld [vmem:[%s2160 + $0x20] sm:$0xff]
      %v2166 = vld [vmem:[%s2160 + $0x28] sm:$0xff]
      %v2167 = vld [vmem:[%s2160 + $0x30] sm:$0xff]
      %v2168 = vld [vmem:[%s2160 + $0x38] sm:$0xff]
      %v2170 = vsel %vm2107, %v2152, 0
      %v2173 = vsel %vm2107, %v2153, 0
      %v2176 = vsel %vm2107, %v2154, 0
      %v2179 = vsel %vm2107, %v2155, 0
      %v2182 = vsel %vm2107, %v2156, 0
      %v2185 = vsel %vm2107, %v2157, 0
      %v2188 = vsel %vm2107, %v2158, 0
      %v2191 = vsel %vm2107, %v2159, 0
      %2193 = vmatprep.subr.mxu0 0.0
      %2194 = vmatpush1.msra.mxu0 0.0
      %2195 = vmatprep.subr.mxu0 0.0
      %2196 = vmatpush1.msra.mxu0 0.0
      %2197 = vmatprep.subr.mxu0 0.0
      %2198 = vmatpush1.msra.mxu0 0.0
      %2199 = vmatprep.subr.mxu0 0.0
      %2200 = vmatpush1.msra.mxu0 0.0
      %2201 = vmatprep.subr.mxu0 0.0
      %2202 = vmatpush1.msra.mxu0 0.0
      %2203 = vmatprep.subr.mxu0 0.0
      %2204 = vmatpush1.msra.mxu0 0.0
      %2205 = vmatprep.subr.mxu0 0.0
      %2206 = vmatpush1.msra.mxu0 0.0
      %2207 = vmatprep.subr.mxu0 0.0
      %2208 = vmatpush1.msra.mxu0 0.0
      %2209 = vmatprep.subr.mxu0 0.0
      %2210 = vmatpush1.msra.mxu0 %v2168
      %2211 = vmatprep.subr.mxu0 0.0
      %2212 = vmatpush1.msra.mxu0 %v2167
      %2213 = vmatprep.subr.mxu0 0.0
      %2214 = vmatpush1.msra.mxu0 %v2166
      %2215 = vmatprep.subr.mxu0 0.0
      %2216 = vmatpush1.msra.mxu0 %v2165
      %2217 = vmatprep.subr.mxu0 0.0
      %2218 = vmatpush1.msra.mxu0 %v2164
      %2219 = vmatprep.subr.mxu0 0.0
      %2220 = vmatpush1.msra.mxu0 %v2163
      %2221 = vmatprep.subr.mxu0 0.0
      %2222 = vmatpush1.msra.mxu0 %v2162
      %2223 = vmatprep.subr.mxu0 0.0
      %2224 = vmatpush1.msra.mxu0 %v2161
      %2225 = vmatprep.subr.mxu0 0.0
      %2226 = vmatpush2.msra.mxu0 0.0
      %2227 = vmatprep.subr.mxu0 0.0
      %2228 = vmatpush2.msra.mxu0 0.0
      %2229 = vmatprep.subr.mxu0 0.0
      %2230 = vmatpush2.msra.mxu0 0.0
      %2231 = vmatprep.subr.mxu0 0.0
      %2232 = vmatpush2.msra.mxu0 0.0
      %2233 = vmatprep.subr.mxu0 0.0
      %2234 = vmatpush2.msra.mxu0 0.0
      %2235 = vmatprep.subr.mxu0 0.0
      %2236 = vmatpush2.msra.mxu0 0.0
      %2237 = vmatprep.subr.mxu0 0.0
      %2238 = vmatpush2.msra.mxu0 0.0
      %2239 = vmatprep.subr.mxu0 0.0
      %2240 = vmatpush2.msra.mxu0 0.0
      %2241 = vmatprep.subr.mxu0 0.0
      %2242 = vmatpush2.msra.mxu0 0.0
      %2243 = vmatprep.subr.mxu0 0.0
      %2244 = vmatpush2.msra.mxu0 0.0
      %2245 = vmatprep.subr.mxu0 0.0
      %2246 = vmatpush2.msra.mxu0 0.0
      %2247 = vmatprep.subr.mxu0 0.0
      %2248 = vmatpush2.msra.mxu0 0.0
      %2249 = vmatprep.subr.mxu0 0.0
      %2250 = vmatpush2.msra.mxu0 0.0
      %2251 = vmatprep.subr.mxu0 0.0
      %2252 = vmatpush2.msra.mxu0 0.0
      %2253 = vmatprep.subr.mxu0 0.0
      %2254 = vmatpush2.msra.mxu0 0.0
      %2255 = vmatprep.subr.mxu0 0.0
      %2256 = vmatpush2.msra.mxu0 0.0
      %2257 = vmatprep.mubr.f32.mxu0 0.0
      %2258 = vmatmul.mubr.f32.gmra.mxu0 %v2170
      %v2259 = vpop.f32.mrf.mxu0
      %v2260 = vadd.f32 0.0, %v2259
      %v2261 = vpop.f32.mrf.mxu0
      %2262 = vmatprep.mubr.f32.mxu0 0.0
      %2263 = vmatmul.mubr.f32.gmra.mxu0 %v2173
      %v2264 = vpop.f32.mrf.mxu0
      %v2265 = vadd.f32 0.0, %v2264
      %v2266 = vpop.f32.mrf.mxu0
      %2267 = vmatprep.mubr.f32.mxu0 0.0
      %2268 = vmatmul.mubr.f32.gmra.mxu0 %v2176
      %v2269 = vpop.f32.mrf.mxu0
      %v2270 = vadd.f32 0.0, %v2269
      %v2271 = vpop.f32.mrf.mxu0
      %2272 = vmatprep.mubr.f32.mxu0 0.0
      %2273 = vmatmul.mubr.f32.gmra.mxu0 %v2179
      %v2274 = vpop.f32.mrf.mxu0
      %v2275 = vadd.f32 0.0, %v2274
      %v2276 = vpop.f32.mrf.mxu0
      %2277 = vmatprep.mubr.f32.mxu0 0.0
      %2278 = vmatmul.mubr.f32.gmra.mxu0 %v2182
      %v2279 = vpop.f32.mrf.mxu0
      %v2280 = vadd.f32 0.0, %v2279
      %v2281 = vpop.f32.mrf.mxu0
      %2282 = vmatprep.mubr.f32.mxu0 0.0
      %2283 = vmatmul.mubr.f32.gmra.mxu0 %v2185
      %v2284 = vpop.f32.mrf.mxu0
      %v2285 = vadd.f32 0.0, %v2284
      %v2286 = vpop.f32.mrf.mxu0
      %2287 = vmatprep.mubr.f32.mxu0 0.0
      %2288 = vmatmul.mubr.f32.gmra.mxu0 %v2188
      %v2289 = vpop.f32.mrf.mxu0
      %v2290 = vadd.f32 0.0, %v2289
      %v2291 = vpop.f32.mrf.mxu0
      %2292 = vmatprep.mubr.f32.mxu0 0.0
      %2293 = vmatmul.mubr.f32.gmra.mxu0 %v2191
      %v2294 = vpop.f32.mrf.mxu0
      %v2295 = vadd.f32 0.0, %v2294
      %v2296 = vpop.f32.mrf.mxu0
      %2297 = vdwg.mxu0
      %v2299 = vsel %vm2107, %v2136, 0
      %v2302 = vsel %vm2107, %v2137, 0
      %v2305 = vsel %vm2107, %v2138, 0
      %v2308 = vsel %vm2107, %v2139, 0
      %v2311 = vsel %vm2107, %v2140, 0
      %v2314 = vsel %vm2107, %v2141, 0
      %v2317 = vsel %vm2107, %v2142, 0
      %v2320 = vsel %vm2107, %v2143, 0
      %2322 = vmatprep.subr.mxu0 0.0
      %2323 = vmatpush1.msra.mxu0 0.0
      %2324 = vmatprep.subr.mxu0 0.0
      %2325 = vmatpush1.msra.mxu0 0.0
      %2326 = vmatprep.subr.mxu0 0.0
      %2327 = vmatpush1.msra.mxu0 0.0
      %2328 = vmatprep.subr.mxu0 0.0
      %2329 = vmatpush1.msra.mxu0 0.0
      %2330 = vmatprep.subr.mxu0 0.0
      %2331 = vmatpush1.msra.mxu0 0.0
      %2332 = vmatprep.subr.mxu0 0.0
      %2333 = vmatpush1.msra.mxu0 0.0
      %2334 = vmatprep.subr.mxu0 0.0
      %2335 = vmatpush1.msra.mxu0 0.0
      %2336 = vmatprep.subr.mxu0 0.0
      %2337 = vmatpush1.msra.mxu0 0.0
      %2338 = vmatprep.subr.mxu0 0.0
      %2339 = vmatpush1.msra.mxu0 %v2151
      %2340 = vmatprep.subr.mxu0 0.0
      %2341 = vmatpush1.msra.mxu0 %v2150
      %2342 = vmatprep.subr.mxu0 0.0
      %2343 = vmatpush1.msra.mxu0 %v2149
      %2344 = vmatprep.subr.mxu0 0.0
      %2345 = vmatpush1.msra.mxu0 %v2148
      %2346 = vmatprep.subr.mxu0 0.0
      %2347 = vmatpush1.msra.mxu0 %v2147
      %2348 = vmatprep.subr.mxu0 0.0
      %2349 = vmatpush1.msra.mxu0 %v2146
      %2350 = vmatprep.subr.mxu0 0.0
      %2351 = vmatpush1.msra.mxu0 %v2145
      %2352 = vmatprep.subr.mxu0 0.0
      %2353 = vmatpush1.msra.mxu0 %v2144
      %2354 = vmatprep.subr.mxu0 0.0
      %2355 = vmatpush2.msra.mxu0 0.0
      %2356 = vmatprep.subr.mxu0 0.0
      %2357 = vmatpush2.msra.mxu0 0.0
      %2358 = vmatprep.subr.mxu0 0.0
      %2359 = vmatpush2.msra.mxu0 0.0
      %2360 = vmatprep.subr.mxu0 0.0
      %2361 = vmatpush2.msra.mxu0 0.0
      %2362 = vmatprep.subr.mxu0 0.0
      %2363 = vmatpush2.msra.mxu0 0.0
      %2364 = vmatprep.subr.mxu0 0.0
      %2365 = vmatpush2.msra.mxu0 0.0
      %2366 = vmatprep.subr.mxu0 0.0
      %2367 = vmatpush2.msra.mxu0 0.0
      %2368 = vmatprep.subr.mxu0 0.0
      %2369 = vmatpush2.msra.mxu0 0.0
      %2370 = vmatprep.subr.mxu0 0.0
      %2371 = vmatpush2.msra.mxu0 0.0
      %2372 = vmatprep.subr.mxu0 0.0
      %2373 = vmatpush2.msra.mxu0 0.0
      %2374 = vmatprep.subr.mxu0 0.0
      %2375 = vmatpush2.msra.mxu0 0.0
      %2376 = vmatprep.subr.mxu0 0.0
      %2377 = vmatpush2.msra.mxu0 0.0
      %2378 = vmatprep.subr.mxu0 0.0
      %2379 = vmatpush2.msra.mxu0 0.0
      %2380 = vmatprep.subr.mxu0 0.0
      %2381 = vmatpush2.msra.mxu0 0.0
      %2382 = vmatprep.subr.mxu0 0.0
      %2383 = vmatpush2.msra.mxu0 0.0
      %2384 = vmatprep.subr.mxu0 0.0
      %2385 = vmatpush2.msra.mxu0 0.0
      %2386 = vmatprep.mubr.f32.mxu0 0.0
      %2387 = vmatmul.mubr.f32.gmra.mxu0 %v2299
      %v2388 = vpop.f32.mrf.mxu0
      %v2389 = vadd.f32 %v2260, %v2388
      %v2390 = vpop.f32.mrf.mxu0
      %2391 = vmatprep.mubr.f32.mxu0 0.0
      %2392 = vmatmul.mubr.f32.gmra.mxu0 %v2302
      %v2393 = vpop.f32.mrf.mxu0
      %v2394 = vadd.f32 %v2265, %v2393
      %v2395 = vpop.f32.mrf.mxu0
      %2396 = vmatprep.mubr.f32.mxu0 0.0
      %2397 = vmatmul.mubr.f32.gmra.mxu0 %v2305
      %v2398 = vpop.f32.mrf.mxu0
      %v2399 = vadd.f32 %v2270, %v2398
      %v2400 = vpop.f32.mrf.mxu0
      %2401 = vmatprep.mubr.f32.mxu0 0.0
      %2402 = vmatmul.mubr.f32.gmra.mxu0 %v2308
      %v2403 = vpop.f32.mrf.mxu0
      %v2404 = vadd.f32 %v2275, %v2403
      %v2405 = vpop.f32.mrf.mxu0
      %2406 = vmatprep.mubr.f32.mxu0 0.0
      %2407 = vmatmul.mubr.f32.gmra.mxu0 %v2311
      %v2408 = vpop.f32.mrf.mxu0
      %v2409 = vadd.f32 %v2280, %v2408
      %v2410 = vpop.f32.mrf.mxu0
      %2411 = vmatprep.mubr.f32.mxu0 0.0
      %2412 = vmatmul.mubr.f32.gmra.mxu0 %v2314
      %v2413 = vpop.f32.mrf.mxu0
      %v2414 = vadd.f32 %v2285, %v2413
      %v2415 = vpop.f32.mrf.mxu0
      %2416 = vmatprep.mubr.f32.mxu0 0.0
      %2417 = vmatmul.mubr.f32.gmra.mxu0 %v2317
      %v2418 = vpop.f32.mrf.mxu0
      %v2419 = vadd.f32 %v2290, %v2418
      %v2420 = vpop.f32.mrf.mxu0
      %2421 = vmatprep.mubr.f32.mxu0 0.0
      %2422 = vmatmul.mubr.f32.gmra.mxu0 %v2320
      %v2423 = vpop.f32.mrf.mxu0
      %v2424 = vadd.f32 %v2295, %v2423
      %v2425 = vpop.f32.mrf.mxu0
      %2426 = vdwg.mxu0
      %v2427 = vld [vmem:[#allocation3 + $0x9] sm:$0xff]
      %v2428 = vld [vmem:[#allocation3 + $0x11] sm:$0xff]
      %v2429 = vld [vmem:[#allocation3 + $0x19] sm:$0xff]
      %v2430 = vld [vmem:[#allocation3 + $0x21] sm:$0xff]
      %v2431 = vld [vmem:[#allocation3 + $0x29] sm:$0xff]
      %v2432 = vld [vmem:[#allocation3 + $0x31] sm:$0xff]
      %v2433 = vld [vmem:[#allocation3 + $0x39] sm:$0xff]
      %v2434 = vld [vmem:[#allocation3 + $0x41] sm:$0xff]
      %v2435 = vmul.f32 %v2427, %v480
      %v2436 = vmul.f32 %v2428, %v481
      %v2437 = vmul.f32 %v2429, %v482
      %v2438 = vmul.f32 %v2430, %v483
      %v2439 = vmul.f32 %v2431, %v484
      %v2440 = vmul.f32 %v2432, %v485
      %v2441 = vmul.f32 %v2433, %v486
      %v2442 = vmul.f32 %v2434, %v487
      %s2443 = scalar_lea.vmem %s5, 128
      %v2444 = vld [vmem:[%s2443] sm:$0xff]
      %v2445 = vld [vmem:[%s2443 + $0x8] sm:$0xff]
      %v2446 = vld [vmem:[%s2443 + $0x10] sm:$0xff]
      %v2447 = vld [vmem:[%s2443 + $0x18] sm:$0xff]
      %v2448 = vld [vmem:[%s2443 + $0x20] sm:$0xff]
      %v2449 = vld [vmem:[%s2443 + $0x28] sm:$0xff]
      %v2450 = vld [vmem:[%s2443 + $0x30] sm:$0xff]
      %v2451 = vld [vmem:[%s2443 + $0x38] sm:$0xff]
      %v2453 = vsel %vm2107, %v2435, 0
      %v2456 = vsel %vm2107, %v2436, 0
      %v2459 = vsel %vm2107, %v2437, 0
      %v2462 = vsel %vm2107, %v2438, 0
      %v2465 = vsel %vm2107, %v2439, 0
      %v2468 = vsel %vm2107, %v2440, 0
      %v2471 = vsel %vm2107, %v2441, 0
      %v2474 = vsel %vm2107, %v2442, 0
      %2476 = vmatprep.subr.mxu0 0.0
      %2477 = vmatpush1.msra.mxu0 0.0
      %2478 = vmatprep.subr.mxu0 0.0
      %2479 = vmatpush1.msra.mxu0 0.0
      %2480 = vmatprep.subr.mxu0 0.0
      %2481 = vmatpush1.msra.mxu0 0.0
      %2482 = vmatprep.subr.mxu0 0.0
      %2483 = vmatpush1.msra.mxu0 0.0
      %2484 = vmatprep.subr.mxu0 0.0
      %2485 = vmatpush1.msra.mxu0 0.0
      %2486 = vmatprep.subr.mxu0 0.0
      %2487 = vmatpush1.msra.mxu0 0.0
      %2488 = vmatprep.subr.mxu0 0.0
      %2489 = vmatpush1.msra.mxu0 0.0
      %2490 = vmatprep.subr.mxu0 0.0
      %2491 = vmatpush1.msra.mxu0 0.0
      %2492 = vmatprep.subr.mxu0 0.0
      %2493 = vmatpush1.msra.mxu0 %v2451
      %2494 = vmatprep.subr.mxu0 0.0
      %2495 = vmatpush1.msra.mxu0 %v2450
      %2496 = vmatprep.subr.mxu0 0.0
      %2497 = vmatpush1.msra.mxu0 %v2449
      %2498 = vmatprep.subr.mxu0 0.0
      %2499 = vmatpush1.msra.mxu0 %v2448
      %2500 = vmatprep.subr.mxu0 0.0
      %2501 = vmatpush1.msra.mxu0 %v2447
      %2502 = vmatprep.subr.mxu0 0.0
      %2503 = vmatpush1.msra.mxu0 %v2446
      %2504 = vmatprep.subr.mxu0 0.0
      %2505 = vmatpush1.msra.mxu0 %v2445
      %2506 = vmatprep.subr.mxu0 0.0
      %2507 = vmatpush1.msra.mxu0 %v2444
      %2508 = vmatprep.subr.mxu0 0.0
      %2509 = vmatpush2.msra.mxu0 0.0
      %2510 = vmatprep.subr.mxu0 0.0
      %2511 = vmatpush2.msra.mxu0 0.0
      %2512 = vmatprep.subr.mxu0 0.0
      %2513 = vmatpush2.msra.mxu0 0.0
      %2514 = vmatprep.subr.mxu0 0.0
      %2515 = vmatpush2.msra.mxu0 0.0
      %2516 = vmatprep.subr.mxu0 0.0
      %2517 = vmatpush2.msra.mxu0 0.0
      %2518 = vmatprep.subr.mxu0 0.0
      %2519 = vmatpush2.msra.mxu0 0.0
      %2520 = vmatprep.subr.mxu0 0.0
      %2521 = vmatpush2.msra.mxu0 0.0
      %2522 = vmatprep.subr.mxu0 0.0
      %2523 = vmatpush2.msra.mxu0 0.0
      %2524 = vmatprep.subr.mxu0 0.0
      %2525 = vmatpush2.msra.mxu0 0.0
      %2526 = vmatprep.subr.mxu0 0.0
      %2527 = vmatpush2.msra.mxu0 0.0
      %2528 = vmatprep.subr.mxu0 0.0
      %2529 = vmatpush2.msra.mxu0 0.0
      %2530 = vmatprep.subr.mxu0 0.0
      %2531 = vmatpush2.msra.mxu0 0.0
      %2532 = vmatprep.subr.mxu0 0.0
      %2533 = vmatpush2.msra.mxu0 0.0
      %2534 = vmatprep.subr.mxu0 0.0
      %2535 = vmatpush2.msra.mxu0 0.0
      %2536 = vmatprep.subr.mxu0 0.0
      %2537 = vmatpush2.msra.mxu0 0.0
      %2538 = vmatprep.subr.mxu0 0.0
      %2539 = vmatpush2.msra.mxu0 0.0
      %2540 = vmatprep.mubr.f32.mxu0 0.0
      %2541 = vmatmul.mubr.f32.gmra.mxu0 %v2453
      %v2542 = vpop.f32.mrf.mxu0
      %v2543 = vadd.f32 0.0, %v2542
      %v2544 = vpop.f32.mrf.mxu0
      %2545 = vmatprep.mubr.f32.mxu0 0.0
      %2546 = vmatmul.mubr.f32.gmra.mxu0 %v2456
      %v2547 = vpop.f32.mrf.mxu0
      %v2548 = vadd.f32 0.0, %v2547
      %v2549 = vpop.f32.mrf.mxu0
      %2550 = vmatprep.mubr.f32.mxu0 0.0
      %2551 = vmatmul.mubr.f32.gmra.mxu0 %v2459
      %v2552 = vpop.f32.mrf.mxu0
      %v2553 = vadd.f32 0.0, %v2552
      %v2554 = vpop.f32.mrf.mxu0
      %2555 = vmatprep.mubr.f32.mxu0 0.0
      %2556 = vmatmul.mubr.f32.gmra.mxu0 %v2462
      %v2557 = vpop.f32.mrf.mxu0
      %v2558 = vadd.f32 0.0, %v2557
      %v2559 = vpop.f32.mrf.mxu0
      %2560 = vmatprep.mubr.f32.mxu0 0.0
      %2561 = vmatmul.mubr.f32.gmra.mxu0 %v2465
      %v2562 = vpop.f32.mrf.mxu0
      %v2563 = vadd.f32 0.0, %v2562
      %v2564 = vpop.f32.mrf.mxu0
      %2565 = vmatprep.mubr.f32.mxu0 0.0
      %2566 = vmatmul.mubr.f32.gmra.mxu0 %v2468
      %v2567 = vpop.f32.mrf.mxu0
      %v2568 = vadd.f32 0.0, %v2567
      %v2569 = vpop.f32.mrf.mxu0
      %2570 = vmatprep.mubr.f32.mxu0 0.0
      %2571 = vmatmul.mubr.f32.gmra.mxu0 %v2471
      %v2572 = vpop.f32.mrf.mxu0
      %v2573 = vadd.f32 0.0, %v2572
      %v2574 = vpop.f32.mrf.mxu0
      %2575 = vmatprep.mubr.f32.mxu0 0.0
      %2576 = vmatmul.mubr.f32.gmra.mxu0 %v2474
      %v2577 = vpop.f32.mrf.mxu0
      %v2578 = vadd.f32 0.0, %v2577
      %v2579 = vpop.f32.mrf.mxu0
      %2580 = vdwg.mxu0
      %v2581 = vadd.f32 %v2389, %v2543
      %v2582 = vadd.f32 %v2394, %v2548
      %v2583 = vadd.f32 %v2399, %v2553
      %v2584 = vadd.f32 %v2404, %v2558
      %v2585 = vadd.f32 %v2409, %v2563
      %v2586 = vadd.f32 %v2414, %v2568
      %v2587 = vadd.f32 %v2419, %v2573
      %v2588 = vadd.f32 %v2424, %v2578
      %v2589 = vld [vmem:[#allocation3 + $0xf] sm:$0xff]
      %v2590 = vld [vmem:[#allocation3 + $0x17] sm:$0xff]
      %v2591 = vld [vmem:[#allocation3 + $0x1f] sm:$0xff]
      %v2592 = vld [vmem:[#allocation3 + $0x27] sm:$0xff]
      %v2593 = vld [vmem:[#allocation3 + $0x2f] sm:$0xff]
      %v2594 = vld [vmem:[#allocation3 + $0x37] sm:$0xff]
      %v2595 = vld [vmem:[#allocation3 + $0x3f] sm:$0xff]
      %v2596 = vld [vmem:[#allocation3 + $0x47] sm:$0xff]
      %v2597 = vmul.f32 %v2589, %v456
      %v2598 = vmul.f32 %v2590, %v457
      %v2599 = vmul.f32 %v2591, %v458
      %v2600 = vmul.f32 %v2592, %v459
      %v2601 = vmul.f32 %v2593, %v460
      %v2602 = vmul.f32 %v2594, %v461
      %v2603 = vmul.f32 %v2595, %v462
      %v2604 = vmul.f32 %v2596, %v463
      %s2605 = scalar_lea.vmem %s5, 192
      %v2606 = vld [vmem:[%s2605] sm:$0xff]
      %v2607 = vld [vmem:[%s2605 + $0x8] sm:$0xff]
      %v2608 = vld [vmem:[%s2605 + $0x10] sm:$0xff]
      %v2609 = vld [vmem:[%s2605 + $0x18] sm:$0xff]
      %v2610 = vld [vmem:[%s2605 + $0x20] sm:$0xff]
      %v2611 = vld [vmem:[%s2605 + $0x28] sm:$0xff]
      %v2612 = vld [vmem:[%s2605 + $0x30] sm:$0xff]
      %v2613 = vld [vmem:[%s2605 + $0x38] sm:$0xff]
      %v2615 = vsel %vm2107, %v2597, 0
      %v2618 = vsel %vm2107, %v2598, 0
      %v2621 = vsel %vm2107, %v2599, 0
      %v2624 = vsel %vm2107, %v2600, 0
      %v2627 = vsel %vm2107, %v2601, 0
      %v2630 = vsel %vm2107, %v2602, 0
      %v2633 = vsel %vm2107, %v2603, 0
      %v2636 = vsel %vm2107, %v2604, 0
      %2638 = vmatprep.subr.mxu0 0.0
      %2639 = vmatpush1.msra.mxu0 0.0
      %2640 = vmatprep.subr.mxu0 0.0
      %2641 = vmatpush1.msra.mxu0 0.0
      %2642 = vmatprep.subr.mxu0 0.0
      %2643 = vmatpush1.msra.mxu0 0.0
      %2644 = vmatprep.subr.mxu0 0.0
      %2645 = vmatpush1.msra.mxu0 0.0
      %2646 = vmatprep.subr.mxu0 0.0
      %2647 = vmatpush1.msra.mxu0 0.0
      %2648 = vmatprep.subr.mxu0 0.0
      %2649 = vmatpush1.msra.mxu0 0.0
      %2650 = vmatprep.subr.mxu0 0.0
      %2651 = vmatpush1.msra.mxu0 0.0
      %2652 = vmatprep.subr.mxu0 0.0
      %2653 = vmatpush1.msra.mxu0 0.0
      %2654 = vmatprep.subr.mxu0 0.0
      %2655 = vmatpush1.msra.mxu0 %v2613
      %2656 = vmatprep.subr.mxu0 0.0
      %2657 = vmatpush1.msra.mxu0 %v2612
      %2658 = vmatprep.subr.mxu0 0.0
      %2659 = vmatpush1.msra.mxu0 %v2611
      %2660 = vmatprep.subr.mxu0 0.0
      %2661 = vmatpush1.msra.mxu0 %v2610
      %2662 = vmatprep.subr.mxu0 0.0
      %2663 = vmatpush1.msra.mxu0 %v2609
      %2664 = vmatprep.subr.mxu0 0.0
      %2665 = vmatpush1.msra.mxu0 %v2608
      %2666 = vmatprep.subr.mxu0 0.0
      %2667 = vmatpush1.msra.mxu0 %v2607
      %2668 = vmatprep.subr.mxu0 0.0
      %2669 = vmatpush1.msra.mxu0 %v2606
      %2670 = vmatprep.subr.mxu0 0.0
      %2671 = vmatpush2.msra.mxu0 0.0
      %2672 = vmatprep.subr.mxu0 0.0
      %2673 = vmatpush2.msra.mxu0 0.0
      %2674 = vmatprep.subr.mxu0 0.0
      %2675 = vmatpush2.msra.mxu0 0.0
      %2676 = vmatprep.subr.mxu0 0.0
      %2677 = vmatpush2.msra.mxu0 0.0
      %2678 = vmatprep.subr.mxu0 0.0
      %2679 = vmatpush2.msra.mxu0 0.0
      %2680 = vmatprep.subr.mxu0 0.0
      %2681 = vmatpush2.msra.mxu0 0.0
      %2682 = vmatprep.subr.mxu0 0.0
      %2683 = vmatpush2.msra.mxu0 0.0
      %2684 = vmatprep.subr.mxu0 0.0
      %2685 = vmatpush2.msra.mxu0 0.0
      %2686 = vmatprep.subr.mxu0 0.0
      %2687 = vmatpush2.msra.mxu0 0.0
      %2688 = vmatprep.subr.mxu0 0.0
      %2689 = vmatpush2.msra.mxu0 0.0
      %2690 = vmatprep.subr.mxu0 0.0
      %2691 = vmatpush2.msra.mxu0 0.0
      %2692 = vmatprep.subr.mxu0 0.0
      %2693 = vmatpush2.msra.mxu0 0.0
      %2694 = vmatprep.subr.mxu0 0.0
      %2695 = vmatpush2.msra.mxu0 0.0
      %2696 = vmatprep.subr.mxu0 0.0
      %2697 = vmatpush2.msra.mxu0 0.0
      %2698 = vmatprep.subr.mxu0 0.0
      %2699 = vmatpush2.msra.mxu0 0.0
      %2700 = vmatprep.subr.mxu0 0.0
      %2701 = vmatpush2.msra.mxu0 0.0
      %2702 = vmatprep.mubr.f32.mxu0 0.0
      %2703 = vmatmul.mubr.f32.gmra.mxu0 %v2615
      %v2704 = vpop.f32.mrf.mxu0
      %v2705 = vadd.f32 0.0, %v2704
      %v2706 = vpop.f32.mrf.mxu0
      %2707 = vmatprep.mubr.f32.mxu0 0.0
      %2708 = vmatmul.mubr.f32.gmra.mxu0 %v2618
      %v2709 = vpop.f32.mrf.mxu0
      %v2710 = vadd.f32 0.0, %v2709
      %v2711 = vpop.f32.mrf.mxu0
      %2712 = vmatprep.mubr.f32.mxu0 0.0
      %2713 = vmatmul.mubr.f32.gmra.mxu0 %v2621
      %v2714 = vpop.f32.mrf.mxu0
      %v2715 = vadd.f32 0.0, %v2714
      %v2716 = vpop.f32.mrf.mxu0
      %2717 = vmatprep.mubr.f32.mxu0 0.0
      %2718 = vmatmul.mubr.f32.gmra.mxu0 %v2624
      %v2719 = vpop.f32.mrf.mxu0
      %v2720 = vadd.f32 0.0, %v2719
      %v2721 = vpop.f32.mrf.mxu0
      %2722 = vmatprep.mubr.f32.mxu0 0.0
      %2723 = vmatmul.mubr.f32.gmra.mxu0 %v2627
      %v2724 = vpop.f32.mrf.mxu0
      %v2725 = vadd.f32 0.0, %v2724
      %v2726 = vpop.f32.mrf.mxu0
      %2727 = vmatprep.mubr.f32.mxu0 0.0
      %2728 = vmatmul.mubr.f32.gmra.mxu0 %v2630
      %v2729 = vpop.f32.mrf.mxu0
      %v2730 = vadd.f32 0.0, %v2729
      %v2731 = vpop.f32.mrf.mxu0
      %2732 = vmatprep.mubr.f32.mxu0 0.0
      %2733 = vmatmul.mubr.f32.gmra.mxu0 %v2633
      %v2734 = vpop.f32.mrf.mxu0
      %v2735 = vadd.f32 0.0, %v2734
      %v2736 = vpop.f32.mrf.mxu0
      %2737 = vmatprep.mubr.f32.mxu0 0.0
      %2738 = vmatmul.mubr.f32.gmra.mxu0 %v2636
      %v2739 = vpop.f32.mrf.mxu0
      %v2740 = vadd.f32 0.0, %v2739
      %v2741 = vpop.f32.mrf.mxu0
      %2742 = vdwg.mxu0
      %v2743 = vadd.f32 %v2581, %v2705
      %v2744 = vadd.f32 %v2582, %v2710
      %v2745 = vadd.f32 %v2583, %v2715
      %v2746 = vadd.f32 %v2584, %v2720
      %v2747 = vadd.f32 %v2585, %v2725
      %v2748 = vadd.f32 %v2586, %v2730
      %v2749 = vadd.f32 %v2587, %v2735
      %v2750 = vadd.f32 %v2588, %v2740
      %v2751 = vld [vmem:[#allocation3 + $0x10] sm:$0xff]
      %v2752 = vld [vmem:[#allocation3 + $0x18] sm:$0xff]
      %v2753 = vld [vmem:[#allocation3 + $0x20] sm:$0xff]
      %v2754 = vld [vmem:[#allocation3 + $0x28] sm:$0xff]
      %v2755 = vld [vmem:[#allocation3 + $0x30] sm:$0xff]
      %v2756 = vld [vmem:[#allocation3 + $0x38] sm:$0xff]
      %v2757 = vld [vmem:[#allocation3 + $0x40] sm:$0xff]
      %v2758 = vld [vmem:[#allocation3 + $0x48] sm:$0xff]
      %s2759 = scalar_lea.vmem %s5, 256
      %v2760 = vld [vmem:[%s2759] sm:$0xff]
      %v2761 = vld [vmem:[%s2759 + $0x8] sm:$0xff]
      %v2762 = vld [vmem:[%s2759 + $0x10] sm:$0xff]
      %v2763 = vld [vmem:[%s2759 + $0x18] sm:$0xff]
      %v2764 = vld [vmem:[%s2759 + $0x20] sm:$0xff]
      %v2765 = vld [vmem:[%s2759 + $0x28] sm:$0xff]
      %v2766 = vld [vmem:[%s2759 + $0x30] sm:$0xff]
      %v2767 = vld [vmem:[%s2759 + $0x38] sm:$0xff]
      %v2769 = vsel %vm2107, %v2751, 0
      %v2772 = vsel %vm2107, %v2752, 0
      %v2775 = vsel %vm2107, %v2753, 0
      %v2778 = vsel %vm2107, %v2754, 0
      %v2781 = vsel %vm2107, %v2755, 0
      %v2784 = vsel %vm2107, %v2756, 0
      %v2787 = vsel %vm2107, %v2757, 0
      %v2790 = vsel %vm2107, %v2758, 0
      %2792 = vmatprep.subr.mxu0 0.0
      %2793 = vmatpush1.msra.mxu0 0.0
      %2794 = vmatprep.subr.mxu0 0.0
      %2795 = vmatpush1.msra.mxu0 0.0
      %2796 = vmatprep.subr.mxu0 0.0
      %2797 = vmatpush1.msra.mxu0 0.0
      %2798 = vmatprep.subr.mxu0 0.0
      %2799 = vmatpush1.msra.mxu0 0.0
      %2800 = vmatprep.subr.mxu0 0.0
      %2801 = vmatpush1.msra.mxu0 0.0
      %2802 = vmatprep.subr.mxu0 0.0
      %2803 = vmatpush1.msra.mxu0 0.0
      %2804 = vmatprep.subr.mxu0 0.0
      %2805 = vmatpush1.msra.mxu0 0.0
      %2806 = vmatprep.subr.mxu0 0.0
      %2807 = vmatpush1.msra.mxu0 0.0
      %2808 = vmatprep.subr.mxu0 0.0
      %2809 = vmatpush1.msra.mxu0 %v2767
      %2810 = vmatprep.subr.mxu0 0.0
      %2811 = vmatpush1.msra.mxu0 %v2766
      %2812 = vmatprep.subr.mxu0 0.0
      %2813 = vmatpush1.msra.mxu0 %v2765
      %2814 = vmatprep.subr.mxu0 0.0
      %2815 = vmatpush1.msra.mxu0 %v2764
      %2816 = vmatprep.subr.mxu0 0.0
      %2817 = vmatpush1.msra.mxu0 %v2763
      %2818 = vmatprep.subr.mxu0 0.0
      %2819 = vmatpush1.msra.mxu0 %v2762
      %2820 = vmatprep.subr.mxu0 0.0
      %2821 = vmatpush1.msra.mxu0 %v2761
      %2822 = vmatprep.subr.mxu0 0.0
      %2823 = vmatpush1.msra.mxu0 %v2760
      %2824 = vmatprep.subr.mxu0 0.0
      %2825 = vmatpush2.msra.mxu0 0.0
      %2826 = vmatprep.subr.mxu0 0.0
      %2827 = vmatpush2.msra.mxu0 0.0
      %2828 = vmatprep.subr.mxu0 0.0
      %2829 = vmatpush2.msra.mxu0 0.0
      %2830 = vmatprep.subr.mxu0 0.0
      %2831 = vmatpush2.msra.mxu0 0.0
      %2832 = vmatprep.subr.mxu0 0.0
      %2833 = vmatpush2.msra.mxu0 0.0
      %2834 = vmatprep.subr.mxu0 0.0
      %2835 = vmatpush2.msra.mxu0 0.0
      %2836 = vmatprep.subr.mxu0 0.0
      %2837 = vmatpush2.msra.mxu0 0.0
      %2838 = vmatprep.subr.mxu0 0.0
      %2839 = vmatpush2.msra.mxu0 0.0
      %2840 = vmatprep.subr.mxu0 0.0
      %2841 = vmatpush2.msra.mxu0 0.0
      %2842 = vmatprep.subr.mxu0 0.0
      %2843 = vmatpush2.msra.mxu0 0.0
      %2844 = vmatprep.subr.mxu0 0.0
      %2845 = vmatpush2.msra.mxu0 0.0
      %2846 = vmatprep.subr.mxu0 0.0
      %2847 = vmatpush2.msra.mxu0 0.0
      %2848 = vmatprep.subr.mxu0 0.0
      %2849 = vmatpush2.msra.mxu0 0.0
      %2850 = vmatprep.subr.mxu0 0.0
      %2851 = vmatpush2.msra.mxu0 0.0
      %2852 = vmatprep.subr.mxu0 0.0
      %2853 = vmatpush2.msra.mxu0 0.0
      %2854 = vmatprep.subr.mxu0 0.0
      %2855 = vmatpush2.msra.mxu0 0.0
      %2856 = vmatprep.mubr.f32.mxu0 0.0
      %2857 = vmatmul.mubr.f32.gmra.mxu0 %v2769
      %v2858 = vpop.f32.mrf.mxu0
      %v2859 = vadd.f32 0.0, %v2858
      %v2860 = vpop.f32.mrf.mxu0
      %2861 = vmatprep.mubr.f32.mxu0 0.0
      %2862 = vmatmul.mubr.f32.gmra.mxu0 %v2772
      %v2863 = vpop.f32.mrf.mxu0
      %v2864 = vadd.f32 0.0, %v2863
      %v2865 = vpop.f32.mrf.mxu0
      %2866 = vmatprep.mubr.f32.mxu0 0.0
      %2867 = vmatmul.mubr.f32.gmra.mxu0 %v2775
      %v2868 = vpop.f32.mrf.mxu0
      %v2869 = vadd.f32 0.0, %v2868
      %v2870 = vpop.f32.mrf.mxu0
      %2871 = vmatprep.mubr.f32.mxu0 0.0
      %2872 = vmatmul.mubr.f32.gmra.mxu0 %v2778
      %v2873 = vpop.f32.mrf.mxu0
      %v2874 = vadd.f32 0.0, %v2873
      %v2875 = vpop.f32.mrf.mxu0
      %2876 = vmatprep.mubr.f32.mxu0 0.0
      %2877 = vmatmul.mubr.f32.gmra.mxu0 %v2781
      %v2878 = vpop.f32.mrf.mxu0
      %v2879 = vadd.f32 0.0, %v2878
      %v2880 = vpop.f32.mrf.mxu0
      %2881 = vmatprep.mubr.f32.mxu0 0.0
      %2882 = vmatmul.mubr.f32.gmra.mxu0 %v2784
      %v2883 = vpop.f32.mrf.mxu0
      %v2884 = vadd.f32 0.0, %v2883
      %v2885 = vpop.f32.mrf.mxu0
      %2886 = vmatprep.mubr.f32.mxu0 0.0
      %2887 = vmatmul.mubr.f32.gmra.mxu0 %v2787
      %v2888 = vpop.f32.mrf.mxu0
      %v2889 = vadd.f32 0.0, %v2888
      %v2890 = vpop.f32.mrf.mxu0
      %2891 = vmatprep.mubr.f32.mxu0 0.0
      %2892 = vmatmul.mubr.f32.gmra.mxu0 %v2790
      %v2893 = vpop.f32.mrf.mxu0
      %v2894 = vadd.f32 0.0, %v2893
      %v2895 = vpop.f32.mrf.mxu0
      %2896 = vdwg.mxu0
      %v2897 = vadd.f32 %v2743, %v2859
      %v2898 = vadd.f32 %v2744, %v2864
      %v2899 = vadd.f32 %v2745, %v2869
      %v2900 = vadd.f32 %v2746, %v2874
      %v2901 = vadd.f32 %v2747, %v2879
      %v2902 = vadd.f32 %v2748, %v2884
      %v2903 = vadd.f32 %v2749, %v2889
      %v2904 = vadd.f32 %v2750, %v2894
      %v2905 = vld [vmem:[#allocation3 + $0x11] sm:$0xff]
      %v2906 = vld [vmem:[#allocation3 + $0x19] sm:$0xff]
      %v2907 = vld [vmem:[#allocation3 + $0x21] sm:$0xff]
      %v2908 = vld [vmem:[#allocation3 + $0x29] sm:$0xff]
      %v2909 = vld [vmem:[#allocation3 + $0x31] sm:$0xff]
      %v2910 = vld [vmem:[#allocation3 + $0x39] sm:$0xff]
      %v2911 = vld [vmem:[#allocation3 + $0x41] sm:$0xff]
      %v2912 = vld [vmem:[#allocation3 + $0x49] sm:$0xff]
      %v2913 = vmul.f32 %v2905, %v480
      %v2914 = vmul.f32 %v2906, %v481
      %v2915 = vmul.f32 %v2907, %v482
      %v2916 = vmul.f32 %v2908, %v483
      %v2917 = vmul.f32 %v2909, %v484
      %v2918 = vmul.f32 %v2910, %v485
      %v2919 = vmul.f32 %v2911, %v486
      %v2920 = vmul.f32 %v2912, %v487
      %s2921 = scalar_lea.vmem %s5, 320
      %v2922 = vld [vmem:[%s2921] sm:$0xff]
      %v2923 = vld [vmem:[%s2921 + $0x8] sm:$0xff]
      %v2924 = vld [vmem:[%s2921 + $0x10] sm:$0xff]
      %v2925 = vld [vmem:[%s2921 + $0x18] sm:$0xff]
      %v2926 = vld [vmem:[%s2921 + $0x20] sm:$0xff]
      %v2927 = vld [vmem:[%s2921 + $0x28] sm:$0xff]
      %v2928 = vld [vmem:[%s2921 + $0x30] sm:$0xff]
      %v2929 = vld [vmem:[%s2921 + $0x38] sm:$0xff]
      %v2931 = vsel %vm2107, %v2913, 0
      %v2934 = vsel %vm2107, %v2914, 0
      %v2937 = vsel %vm2107, %v2915, 0
      %v2940 = vsel %vm2107, %v2916, 0
      %v2943 = vsel %vm2107, %v2917, 0
      %v2946 = vsel %vm2107, %v2918, 0
      %v2949 = vsel %vm2107, %v2919, 0
      %v2952 = vsel %vm2107, %v2920, 0
      %2954 = vmatprep.subr.mxu0 0.0
      %2955 = vmatpush1.msra.mxu0 0.0
      %2956 = vmatprep.subr.mxu0 0.0
      %2957 = vmatpush1.msra.mxu0 0.0
      %2958 = vmatprep.subr.mxu0 0.0
      %2959 = vmatpush1.msra.mxu0 0.0
      %2960 = vmatprep.subr.mxu0 0.0
      %2961 = vmatpush1.msra.mxu0 0.0
      %2962 = vmatprep.subr.mxu0 0.0
      %2963 = vmatpush1.msra.mxu0 0.0
      %2964 = vmatprep.subr.mxu0 0.0
      %2965 = vmatpush1.msra.mxu0 0.0
      %2966 = vmatprep.subr.mxu0 0.0
      %2967 = vmatpush1.msra.mxu0 0.0
      %2968 = vmatprep.subr.mxu0 0.0
      %2969 = vmatpush1.msra.mxu0 0.0
      %2970 = vmatprep.subr.mxu0 0.0
      %2971 = vmatpush1.msra.mxu0 %v2929
      %2972 = vmatprep.subr.mxu0 0.0
      %2973 = vmatpush1.msra.mxu0 %v2928
      %2974 = vmatprep.subr.mxu0 0.0
      %2975 = vmatpush1.msra.mxu0 %v2927
      %2976 = vmatprep.subr.mxu0 0.0
      %2977 = vmatpush1.msra.mxu0 %v2926
      %2978 = vmatprep.subr.mxu0 0.0
      %2979 = vmatpush1.msra.mxu0 %v2925
      %2980 = vmatprep.subr.mxu0 0.0
      %2981 = vmatpush1.msra.mxu0 %v2924
      %2982 = vmatprep.subr.mxu0 0.0
      %2983 = vmatpush1.msra.mxu0 %v2923
      %2984 = vmatprep.subr.mxu0 0.0
      %2985 = vmatpush1.msra.mxu0 %v2922
      %2986 = vmatprep.subr.mxu0 0.0
      %2987 = vmatpush2.msra.mxu0 0.0
      %2988 = vmatprep.subr.mxu0 0.0
      %2989 = vmatpush2.msra.mxu0 0.0
      %2990 = vmatprep.subr.mxu0 0.0
      %2991 = vmatpush2.msra.mxu0 0.0
      %2992 = vmatprep.subr.mxu0 0.0
      %2993 = vmatpush2.msra.mxu0 0.0
      %2994 = vmatprep.subr.mxu0 0.0
      %2995 = vmatpush2.msra.mxu0 0.0
      %2996 = vmatprep.subr.mxu0 0.0
      %2997 = vmatpush2.msra.mxu0 0.0
      %2998 = vmatprep.subr.mxu0 0.0
      %2999 = vmatpush2.msra.mxu0 0.0
      %3000 = vmatprep.subr.mxu0 0.0
      %3001 = vmatpush2.msra.mxu0 0.0
      %3002 = vmatprep.subr.mxu0 0.0
      %3003 = vmatpush2.msra.mxu0 0.0
      %3004 = vmatprep.subr.mxu0 0.0
      %3005 = vmatpush2.msra.mxu0 0.0
      %3006 = vmatprep.subr.mxu0 0.0
      %3007 = vmatpush2.msra.mxu0 0.0
      %3008 = vmatprep.subr.mxu0 0.0
      %3009 = vmatpush2.msra.mxu0 0.0
      %3010 = vmatprep.subr.mxu0 0.0
      %3011 = vmatpush2.msra.mxu0 0.0
      %3012 = vmatprep.subr.mxu0 0.0
      %3013 = vmatpush2.msra.mxu0 0.0
      %3014 = vmatprep.subr.mxu0 0.0
      %3015 = vmatpush2.msra.mxu0 0.0
      %3016 = vmatprep.subr.mxu0 0.0
      %3017 = vmatpush2.msra.mxu0 0.0
      %3018 = vmatprep.mubr.f32.mxu0 0.0
      %3019 = vmatmul.mubr.f32.gmra.mxu0 %v2931
      %v3020 = vpop.f32.mrf.mxu0
      %v3021 = vadd.f32 0.0, %v3020
      %v3022 = vpop.f32.mrf.mxu0
      %3023 = vmatprep.mubr.f32.mxu0 0.0
      %3024 = vmatmul.mubr.f32.gmra.mxu0 %v2934
      %v3025 = vpop.f32.mrf.mxu0
      %v3026 = vadd.f32 0.0, %v3025
      %v3027 = vpop.f32.mrf.mxu0
      %3028 = vmatprep.mubr.f32.mxu0 0.0
      %3029 = vmatmul.mubr.f32.gmra.mxu0 %v2937
      %v3030 = vpop.f32.mrf.mxu0
      %v3031 = vadd.f32 0.0, %v3030
      %v3032 = vpop.f32.mrf.mxu0
      %3033 = vmatprep.mubr.f32.mxu0 0.0
      %3034 = vmatmul.mubr.f32.gmra.mxu0 %v2940
      %v3035 = vpop.f32.mrf.mxu0
      %v3036 = vadd.f32 0.0, %v3035
      %v3037 = vpop.f32.mrf.mxu0
      %3038 = vmatprep.mubr.f32.mxu0 0.0
      %3039 = vmatmul.mubr.f32.gmra.mxu0 %v2943
      %v3040 = vpop.f32.mrf.mxu0
      %v3041 = vadd.f32 0.0, %v3040
      %v3042 = vpop.f32.mrf.mxu0
      %3043 = vmatprep.mubr.f32.mxu0 0.0
      %3044 = vmatmul.mubr.f32.gmra.mxu0 %v2946
      %v3045 = vpop.f32.mrf.mxu0
      %v3046 = vadd.f32 0.0, %v3045
      %v3047 = vpop.f32.mrf.mxu0
      %3048 = vmatprep.mubr.f32.mxu0 0.0
      %3049 = vmatmul.mubr.f32.gmra.mxu0 %v2949
      %v3050 = vpop.f32.mrf.mxu0
      %v3051 = vadd.f32 0.0, %v3050
      %v3052 = vpop.f32.mrf.mxu0
      %3053 = vmatprep.mubr.f32.mxu0 0.0
      %3054 = vmatmul.mubr.f32.gmra.mxu0 %v2952
      %v3055 = vpop.f32.mrf.mxu0
      %v3056 = vadd.f32 0.0, %v3055
      %v3057 = vpop.f32.mrf.mxu0
      %3058 = vdwg.mxu0
      %v3059 = vadd.f32 %v2897, %v3021
      %v3060 = vadd.f32 %v2898, %v3026
      %v3061 = vadd.f32 %v2899, %v3031
      %v3062 = vadd.f32 %v2900, %v3036
      %v3063 = vadd.f32 %v2901, %v3041
      %v3064 = vadd.f32 %v2902, %v3046
      %v3065 = vadd.f32 %v2903, %v3051
      %v3066 = vadd.f32 %v2904, %v3056
      %v3067 = vld [vmem:[#allocation3 + $0x17] sm:$0xff]
      %v3068 = vld [vmem:[#allocation3 + $0x1f] sm:$0xff]
      %v3069 = vld [vmem:[#allocation3 + $0x27] sm:$0xff]
      %v3070 = vld [vmem:[#allocation3 + $0x2f] sm:$0xff]
      %v3071 = vld [vmem:[#allocation3 + $0x37] sm:$0xff]
      %v3072 = vld [vmem:[#allocation3 + $0x3f] sm:$0xff]
      %v3073 = vld [vmem:[#allocation3 + $0x47] sm:$0xff]
      %v3074 = vld [vmem:[#allocation3 + $0x4f] sm:$0xff]
      %v3075 = vmul.f32 %v3067, %v456
      %v3076 = vmul.f32 %v3068, %v457
      %v3077 = vmul.f32 %v3069, %v458
      %v3078 = vmul.f32 %v3070, %v459
      %v3079 = vmul.f32 %v3071, %v460
      %v3080 = vmul.f32 %v3072, %v461
      %v3081 = vmul.f32 %v3073, %v462
      %v3082 = vmul.f32 %v3074, %v463
      %s3083 = scalar_lea.vmem %s5, 384
      %v3084 = vld [vmem:[%s3083] sm:$0xff]
      %v3085 = vld [vmem:[%s3083 + $0x8] sm:$0xff]
      %v3086 = vld [vmem:[%s3083 + $0x10] sm:$0xff]
      %v3087 = vld [vmem:[%s3083 + $0x18] sm:$0xff]
      %v3088 = vld [vmem:[%s3083 + $0x20] sm:$0xff]
      %v3089 = vld [vmem:[%s3083 + $0x28] sm:$0xff]
      %v3090 = vld [vmem:[%s3083 + $0x30] sm:$0xff]
      %v3091 = vld [vmem:[%s3083 + $0x38] sm:$0xff]
      %v3093 = vsel %vm2107, %v3075, 0
      %v3096 = vsel %vm2107, %v3076, 0
      %v3099 = vsel %vm2107, %v3077, 0
      %v3102 = vsel %vm2107, %v3078, 0
      %v3105 = vsel %vm2107, %v3079, 0
      %v3108 = vsel %vm2107, %v3080, 0
      %v3111 = vsel %vm2107, %v3081, 0
      %v3114 = vsel %vm2107, %v3082, 0
      %3116 = vmatprep.subr.mxu0 0.0
      %3117 = vmatpush1.msra.mxu0 0.0
      %3118 = vmatprep.subr.mxu0 0.0
      %3119 = vmatpush1.msra.mxu0 0.0
      %3120 = vmatprep.subr.mxu0 0.0
      %3121 = vmatpush1.msra.mxu0 0.0
      %3122 = vmatprep.subr.mxu0 0.0
      %3123 = vmatpush1.msra.mxu0 0.0
      %3124 = vmatprep.subr.mxu0 0.0
      %3125 = vmatpush1.msra.mxu0 0.0
      %3126 = vmatprep.subr.mxu0 0.0
      %3127 = vmatpush1.msra.mxu0 0.0
      %3128 = vmatprep.subr.mxu0 0.0
      %3129 = vmatpush1.msra.mxu0 0.0
      %3130 = vmatprep.subr.mxu0 0.0
      %3131 = vmatpush1.msra.mxu0 0.0
      %3132 = vmatprep.subr.mxu0 0.0
      %3133 = vmatpush1.msra.mxu0 %v3091
      %3134 = vmatprep.subr.mxu0 0.0
      %3135 = vmatpush1.msra.mxu0 %v3090
      %3136 = vmatprep.subr.mxu0 0.0
      %3137 = vmatpush1.msra.mxu0 %v3089
      %3138 = vmatprep.subr.mxu0 0.0
      %3139 = vmatpush1.msra.mxu0 %v3088
      %3140 = vmatprep.subr.mxu0 0.0
      %3141 = vmatpush1.msra.mxu0 %v3087
      %3142 = vmatprep.subr.mxu0 0.0
      %3143 = vmatpush1.msra.mxu0 %v3086
      %3144 = vmatprep.subr.mxu0 0.0
      %3145 = vmatpush1.msra.mxu0 %v3085
      %3146 = vmatprep.subr.mxu0 0.0
      %3147 = vmatpush1.msra.mxu0 %v3084
      %3148 = vmatprep.subr.mxu0 0.0
      %3149 = vmatpush2.msra.mxu0 0.0
      %3150 = vmatprep.subr.mxu0 0.0
      %3151 = vmatpush2.msra.mxu0 0.0
      %3152 = vmatprep.subr.mxu0 0.0
      %3153 = vmatpush2.msra.mxu0 0.0
      %3154 = vmatprep.subr.mxu0 0.0
      %3155 = vmatpush2.msra.mxu0 0.0
      %3156 = vmatprep.subr.mxu0 0.0
      %3157 = vmatpush2.msra.mxu0 0.0
      %3158 = vmatprep.subr.mxu0 0.0
      %3159 = vmatpush2.msra.mxu0 0.0
      %3160 = vmatprep.subr.mxu0 0.0
      %3161 = vmatpush2.msra.mxu0 0.0
      %3162 = vmatprep.subr.mxu0 0.0
      %3163 = vmatpush2.msra.mxu0 0.0
      %3164 = vmatprep.subr.mxu0 0.0
      %3165 = vmatpush2.msra.mxu0 0.0
      %3166 = vmatprep.subr.mxu0 0.0
      %3167 = vmatpush2.msra.mxu0 0.0
      %3168 = vmatprep.subr.mxu0 0.0
      %3169 = vmatpush2.msra.mxu0 0.0
      %3170 = vmatprep.subr.mxu0 0.0
      %3171 = vmatpush2.msra.mxu0 0.0
      %3172 = vmatprep.subr.mxu0 0.0
      %3173 = vmatpush2.msra.mxu0 0.0
      %3174 = vmatprep.subr.mxu0 0.0
      %3175 = vmatpush2.msra.mxu0 0.0
      %3176 = vmatprep.subr.mxu0 0.0
      %3177 = vmatpush2.msra.mxu0 0.0
      %3178 = vmatprep.subr.mxu0 0.0
      %3179 = vmatpush2.msra.mxu0 0.0
      %3180 = vmatprep.mubr.f32.mxu0 0.0
      %3181 = vmatmul.mubr.f32.gmra.mxu0 %v3093
      %v3182 = vpop.f32.mrf.mxu0
      %v3183 = vadd.f32 0.0, %v3182
      %v3184 = vpop.f32.mrf.mxu0
      %3185 = vmatprep.mubr.f32.mxu0 0.0
      %3186 = vmatmul.mubr.f32.gmra.mxu0 %v3096
      %v3187 = vpop.f32.mrf.mxu0
      %v3188 = vadd.f32 0.0, %v3187
      %v3189 = vpop.f32.mrf.mxu0
      %3190 = vmatprep.mubr.f32.mxu0 0.0
      %3191 = vmatmul.mubr.f32.gmra.mxu0 %v3099
      %v3192 = vpop.f32.mrf.mxu0
      %v3193 = vadd.f32 0.0, %v3192
      %v3194 = vpop.f32.mrf.mxu0
      %3195 = vmatprep.mubr.f32.mxu0 0.0
      %3196 = vmatmul.mubr.f32.gmra.mxu0 %v3102
      %v3197 = vpop.f32.mrf.mxu0
      %v3198 = vadd.f32 0.0, %v3197
      %v3199 = vpop.f32.mrf.mxu0
      %3200 = vmatprep.mubr.f32.mxu0 0.0
      %3201 = vmatmul.mubr.f32.gmra.mxu0 %v3105
      %v3202 = vpop.f32.mrf.mxu0
      %v3203 = vadd.f32 0.0, %v3202
      %v3204 = vpop.f32.mrf.mxu0
      %3205 = vmatprep.mubr.f32.mxu0 0.0
      %3206 = vmatmul.mubr.f32.gmra.mxu0 %v3108
      %v3207 = vpop.f32.mrf.mxu0
      %v3208 = vadd.f32 0.0, %v3207
      %v3209 = vpop.f32.mrf.mxu0
      %3210 = vmatprep.mubr.f32.mxu0 0.0
      %3211 = vmatmul.mubr.f32.gmra.mxu0 %v3111
      %v3212 = vpop.f32.mrf.mxu0
      %v3213 = vadd.f32 0.0, %v3212
      %v3214 = vpop.f32.mrf.mxu0
      %3215 = vmatprep.mubr.f32.mxu0 0.0
      %3216 = vmatmul.mubr.f32.gmra.mxu0 %v3114
      %v3217 = vpop.f32.mrf.mxu0
      %v3218 = vadd.f32 0.0, %v3217
      %v3219 = vpop.f32.mrf.mxu0
      %3220 = vdwg.mxu0
      %v3221 = vadd.f32 %v3059, %v3183
      %v3222 = vadd.f32 %v3060, %v3188
      %v3223 = vadd.f32 %v3061, %v3193
      %v3224 = vadd.f32 %v3062, %v3198
      %v3225 = vadd.f32 %v3063, %v3203
      %v3226 = vadd.f32 %v3064, %v3208
      %v3227 = vadd.f32 %v3065, %v3213
      %v3228 = vadd.f32 %v3066, %v3218
      %v3229 = vld [vmem:[#allocation3 + $0x18] sm:$0xff]
      %v3230 = vld [vmem:[#allocation3 + $0x20] sm:$0xff]
      %v3231 = vld [vmem:[#allocation3 + $0x28] sm:$0xff]
      %v3232 = vld [vmem:[#allocation3 + $0x30] sm:$0xff]
      %v3233 = vld [vmem:[#allocation3 + $0x38] sm:$0xff]
      %v3234 = vld [vmem:[#allocation3 + $0x40] sm:$0xff]
      %v3235 = vld [vmem:[#allocation3 + $0x48] sm:$0xff]
      %v3236 = vld [vmem:[#allocation3 + $0x50] sm:$0xff]
      %s3237 = scalar_lea.vmem %s5, 448
      %v3238 = vld [vmem:[%s3237] sm:$0xff]
      %v3239 = vld [vmem:[%s3237 + $0x8] sm:$0xff]
      %v3240 = vld [vmem:[%s3237 + $0x10] sm:$0xff]
      %v3241 = vld [vmem:[%s3237 + $0x18] sm:$0xff]
      %v3242 = vld [vmem:[%s3237 + $0x20] sm:$0xff]
      %v3243 = vld [vmem:[%s3237 + $0x28] sm:$0xff]
      %v3244 = vld [vmem:[%s3237 + $0x30] sm:$0xff]
      %v3245 = vld [vmem:[%s3237 + $0x38] sm:$0xff]
      %v3247 = vsel %vm2107, %v3229, 0
      %v3250 = vsel %vm2107, %v3230, 0
      %v3253 = vsel %vm2107, %v3231, 0
      %v3256 = vsel %vm2107, %v3232, 0
      %v3259 = vsel %vm2107, %v3233, 0
      %v3262 = vsel %vm2107, %v3234, 0
      %v3265 = vsel %vm2107, %v3235, 0
      %v3268 = vsel %vm2107, %v3236, 0
      %3270 = vmatprep.subr.mxu0 0.0
      %3271 = vmatpush1.msra.mxu0 0.0
      %3272 = vmatprep.subr.mxu0 0.0
      %3273 = vmatpush1.msra.mxu0 0.0
      %3274 = vmatprep.subr.mxu0 0.0
      %3275 = vmatpush1.msra.mxu0 0.0
      %3276 = vmatprep.subr.mxu0 0.0
      %3277 = vmatpush1.msra.mxu0 0.0
      %3278 = vmatprep.subr.mxu0 0.0
      %3279 = vmatpush1.msra.mxu0 0.0
      %3280 = vmatprep.subr.mxu0 0.0
      %3281 = vmatpush1.msra.mxu0 0.0
      %3282 = vmatprep.subr.mxu0 0.0
      %3283 = vmatpush1.msra.mxu0 0.0
      %3284 = vmatprep.subr.mxu0 0.0
      %3285 = vmatpush1.msra.mxu0 0.0
      %3286 = vmatprep.subr.mxu0 0.0
      %3287 = vmatpush1.msra.mxu0 %v3245
      %3288 = vmatprep.subr.mxu0 0.0
      %3289 = vmatpush1.msra.mxu0 %v3244
      %3290 = vmatprep.subr.mxu0 0.0
      %3291 = vmatpush1.msra.mxu0 %v3243
      %3292 = vmatprep.subr.mxu0 0.0
      %3293 = vmatpush1.msra.mxu0 %v3242
      %3294 = vmatprep.subr.mxu0 0.0
      %3295 = vmatpush1.msra.mxu0 %v3241
      %3296 = vmatprep.subr.mxu0 0.0
      %3297 = vmatpush1.msra.mxu0 %v3240
      %3298 = vmatprep.subr.mxu0 0.0
      %3299 = vmatpush1.msra.mxu0 %v3239
      %3300 = vmatprep.subr.mxu0 0.0
      %3301 = vmatpush1.msra.mxu0 %v3238
      %3302 = vmatprep.subr.mxu0 0.0
      %3303 = vmatpush2.msra.mxu0 0.0
      %3304 = vmatprep.subr.mxu0 0.0
      %3305 = vmatpush2.msra.mxu0 0.0
      %3306 = vmatprep.subr.mxu0 0.0
      %3307 = vmatpush2.msra.mxu0 0.0
      %3308 = vmatprep.subr.mxu0 0.0
      %3309 = vmatpush2.msra.mxu0 0.0
      %3310 = vmatprep.subr.mxu0 0.0
      %3311 = vmatpush2.msra.mxu0 0.0
      %3312 = vmatprep.subr.mxu0 0.0
      %3313 = vmatpush2.msra.mxu0 0.0
      %3314 = vmatprep.subr.mxu0 0.0
      %3315 = vmatpush2.msra.mxu0 0.0
      %3316 = vmatprep.subr.mxu0 0.0
      %3317 = vmatpush2.msra.mxu0 0.0
      %3318 = vmatprep.subr.mxu0 0.0
      %3319 = vmatpush2.msra.mxu0 0.0
      %3320 = vmatprep.subr.mxu0 0.0
      %3321 = vmatpush2.msra.mxu0 0.0
      %3322 = vmatprep.subr.mxu0 0.0
      %3323 = vmatpush2.msra.mxu0 0.0
      %3324 = vmatprep.subr.mxu0 0.0
      %3325 = vmatpush2.msra.mxu0 0.0
      %3326 = vmatprep.subr.mxu0 0.0
      %3327 = vmatpush2.msra.mxu0 0.0
      %3328 = vmatprep.subr.mxu0 0.0
      %3329 = vmatpush2.msra.mxu0 0.0
      %3330 = vmatprep.subr.mxu0 0.0
      %3331 = vmatpush2.msra.mxu0 0.0
      %3332 = vmatprep.subr.mxu0 0.0
      %3333 = vmatpush2.msra.mxu0 0.0
      %3334 = vmatprep.mubr.f32.mxu0 0.0
      %3335 = vmatmul.mubr.f32.gmra.mxu0 %v3247
      %v3336 = vpop.f32.mrf.mxu0
      %v3337 = vadd.f32 0.0, %v3336
      %v3338 = vpop.f32.mrf.mxu0
      %3339 = vmatprep.mubr.f32.mxu0 0.0
      %3340 = vmatmul.mubr.f32.gmra.mxu0 %v3250
      %v3341 = vpop.f32.mrf.mxu0
      %v3342 = vadd.f32 0.0, %v3341
      %v3343 = vpop.f32.mrf.mxu0
      %3344 = vmatprep.mubr.f32.mxu0 0.0
      %3345 = vmatmul.mubr.f32.gmra.mxu0 %v3253
      %v3346 = vpop.f32.mrf.mxu0
      %v3347 = vadd.f32 0.0, %v3346
      %v3348 = vpop.f32.mrf.mxu0
      %3349 = vmatprep.mubr.f32.mxu0 0.0
      %3350 = vmatmul.mubr.f32.gmra.mxu0 %v3256
      %v3351 = vpop.f32.mrf.mxu0
      %v3352 = vadd.f32 0.0, %v3351
      %v3353 = vpop.f32.mrf.mxu0
      %3354 = vmatprep.mubr.f32.mxu0 0.0
      %3355 = vmatmul.mubr.f32.gmra.mxu0 %v3259
      %v3356 = vpop.f32.mrf.mxu0
      %v3357 = vadd.f32 0.0, %v3356
      %v3358 = vpop.f32.mrf.mxu0
      %3359 = vmatprep.mubr.f32.mxu0 0.0
      %3360 = vmatmul.mubr.f32.gmra.mxu0 %v3262
      %v3361 = vpop.f32.mrf.mxu0
      %v3362 = vadd.f32 0.0, %v3361
      %v3363 = vpop.f32.mrf.mxu0
      %3364 = vmatprep.mubr.f32.mxu0 0.0
      %3365 = vmatmul.mubr.f32.gmra.mxu0 %v3265
      %v3366 = vpop.f32.mrf.mxu0
      %v3367 = vadd.f32 0.0, %v3366
      %v3368 = vpop.f32.mrf.mxu0
      %3369 = vmatprep.mubr.f32.mxu0 0.0
      %3370 = vmatmul.mubr.f32.gmra.mxu0 %v3268
      %v3371 = vpop.f32.mrf.mxu0
      %v3372 = vadd.f32 0.0, %v3371
      %v3373 = vpop.f32.mrf.mxu0
      %3374 = vdwg.mxu0
      %v3375 = vadd.f32 %v3221, %v3337
      %v3376 = vadd.f32 %v3222, %v3342
      %v3377 = vadd.f32 %v3223, %v3347
      %v3378 = vadd.f32 %v3224, %v3352
      %v3379 = vadd.f32 %v3225, %v3357
      %v3380 = vadd.f32 %v3226, %v3362
      %v3381 = vadd.f32 %v3227, %v3367
      %v3382 = vadd.f32 %v3228, %v3372
      %v3383 = vld [vmem:[#allocation3 + $0x19] sm:$0xff]
      %v3384 = vld [vmem:[#allocation3 + $0x21] sm:$0xff]
      %v3385 = vld [vmem:[#allocation3 + $0x29] sm:$0xff]
      %v3386 = vld [vmem:[#allocation3 + $0x31] sm:$0xff]
      %v3387 = vld [vmem:[#allocation3 + $0x39] sm:$0xff]
      %v3388 = vld [vmem:[#allocation3 + $0x41] sm:$0xff]
      %v3389 = vld [vmem:[#allocation3 + $0x49] sm:$0xff]
      %v3390 = vld [vmem:[#allocation3 + $0x51] sm:$0xff]
      %v3391 = vmul.f32 %v3383, %v480
      %v3392 = vmul.f32 %v3384, %v481
      %v3393 = vmul.f32 %v3385, %v482
      %v3394 = vmul.f32 %v3386, %v483
      %v3395 = vmul.f32 %v3387, %v484
      %v3396 = vmul.f32 %v3388, %v485
      %v3397 = vmul.f32 %v3389, %v486
      %v3398 = vmul.f32 %v3390, %v487
      %s3399 = scalar_lea.vmem %s5, 512
      %v3400 = vld [vmem:[%s3399] sm:$0xff]
      %v3401 = vld [vmem:[%s3399 + $0x8] sm:$0xff]
      %v3402 = vld [vmem:[%s3399 + $0x10] sm:$0xff]
      %v3403 = vld [vmem:[%s3399 + $0x18] sm:$0xff]
      %v3404 = vld [vmem:[%s3399 + $0x20] sm:$0xff]
      %v3405 = vld [vmem:[%s3399 + $0x28] sm:$0xff]
      %v3406 = vld [vmem:[%s3399 + $0x30] sm:$0xff]
      %v3407 = vld [vmem:[%s3399 + $0x38] sm:$0xff]
      %v3409 = vsel %vm2107, %v3391, 0
      %v3412 = vsel %vm2107, %v3392, 0
      %v3415 = vsel %vm2107, %v3393, 0
      %v3418 = vsel %vm2107, %v3394, 0
      %v3421 = vsel %vm2107, %v3395, 0
      %v3424 = vsel %vm2107, %v3396, 0
      %v3427 = vsel %vm2107, %v3397, 0
      %v3430 = vsel %vm2107, %v3398, 0
      %3432 = vmatprep.subr.mxu0 0.0
      %3433 = vmatpush1.msra.mxu0 0.0
      %3434 = vmatprep.subr.mxu0 0.0
      %3435 = vmatpush1.msra.mxu0 0.0
      %3436 = vmatprep.subr.mxu0 0.0
      %3437 = vmatpush1.msra.mxu0 0.0
      %3438 = vmatprep.subr.mxu0 0.0
      %3439 = vmatpush1.msra.mxu0 0.0
      %3440 = vmatprep.subr.mxu0 0.0
      %3441 = vmatpush1.msra.mxu0 0.0
      %3442 = vmatprep.subr.mxu0 0.0
      %3443 = vmatpush1.msra.mxu0 0.0
      %3444 = vmatprep.subr.mxu0 0.0
      %3445 = vmatpush1.msra.mxu0 0.0
      %3446 = vmatprep.subr.mxu0 0.0
      %3447 = vmatpush1.msra.mxu0 0.0
      %3448 = vmatprep.subr.mxu0 0.0
      %3449 = vmatpush1.msra.mxu0 %v3407
      %3450 = vmatprep.subr.mxu0 0.0
      %3451 = vmatpush1.msra.mxu0 %v3406
      %3452 = vmatprep.subr.mxu0 0.0
      %3453 = vmatpush1.msra.mxu0 %v3405
      %3454 = vmatprep.subr.mxu0 0.0
      %3455 = vmatpush1.msra.mxu0 %v3404
      %3456 = vmatprep.subr.mxu0 0.0
      %3457 = vmatpush1.msra.mxu0 %v3403
      %3458 = vmatprep.subr.mxu0 0.0
      %3459 = vmatpush1.msra.mxu0 %v3402
      %3460 = vmatprep.subr.mxu0 0.0
      %3461 = vmatpush1.msra.mxu0 %v3401
      %3462 = vmatprep.subr.mxu0 0.0
      %3463 = vmatpush1.msra.mxu0 %v3400
      %3464 = vmatprep.subr.mxu0 0.0
      %3465 = vmatpush2.msra.mxu0 0.0
      %3466 = vmatprep.subr.mxu0 0.0
      %3467 = vmatpush2.msra.mxu0 0.0
      %3468 = vmatprep.subr.mxu0 0.0
      %3469 = vmatpush2.msra.mxu0 0.0
      %3470 = vmatprep.subr.mxu0 0.0
      %3471 = vmatpush2.msra.mxu0 0.0
      %3472 = vmatprep.subr.mxu0 0.0
      %3473 = vmatpush2.msra.mxu0 0.0
      %3474 = vmatprep.subr.mxu0 0.0
      %3475 = vmatpush2.msra.mxu0 0.0
      %3476 = vmatprep.subr.mxu0 0.0
      %3477 = vmatpush2.msra.mxu0 0.0
      %3478 = vmatprep.subr.mxu0 0.0
      %3479 = vmatpush2.msra.mxu0 0.0
      %3480 = vmatprep.subr.mxu0 0.0
      %3481 = vmatpush2.msra.mxu0 0.0
      %3482 = vmatprep.subr.mxu0 0.0
      %3483 = vmatpush2.msra.mxu0 0.0
      %3484 = vmatprep.subr.mxu0 0.0
      %3485 = vmatpush2.msra.mxu0 0.0
      %3486 = vmatprep.subr.mxu0 0.0
      %3487 = vmatpush2.msra.mxu0 0.0
      %3488 = vmatprep.subr.mxu0 0.0
      %3489 = vmatpush2.msra.mxu0 0.0
      %3490 = vmatprep.subr.mxu0 0.0
      %3491 = vmatpush2.msra.mxu0 0.0
      %3492 = vmatprep.subr.mxu0 0.0
      %3493 = vmatpush2.msra.mxu0 0.0
      %3494 = vmatprep.subr.mxu0 0.0
      %3495 = vmatpush2.msra.mxu0 0.0
      %3496 = vmatprep.mubr.f32.mxu0 0.0
      %3497 = vmatmul.mubr.f32.gmra.mxu0 %v3409
      %v3498 = vpop.f32.mrf.mxu0
      %v3499 = vadd.f32 0.0, %v3498
      %v3500 = vpop.f32.mrf.mxu0
      %3501 = vmatprep.mubr.f32.mxu0 0.0
      %3502 = vmatmul.mubr.f32.gmra.mxu0 %v3412
      %v3503 = vpop.f32.mrf.mxu0
      %v3504 = vadd.f32 0.0, %v3503
      %v3505 = vpop.f32.mrf.mxu0
      %3506 = vmatprep.mubr.f32.mxu0 0.0
      %3507 = vmatmul.mubr.f32.gmra.mxu0 %v3415
      %v3508 = vpop.f32.mrf.mxu0
      %v3509 = vadd.f32 0.0, %v3508
      %v3510 = vpop.f32.mrf.mxu0
      %3511 = vmatprep.mubr.f32.mxu0 0.0
      %3512 = vmatmul.mubr.f32.gmra.mxu0 %v3418
      %v3513 = vpop.f32.mrf.mxu0
      %v3514 = vadd.f32 0.0, %v3513
      %v3515 = vpop.f32.mrf.mxu0
      %3516 = vmatprep.mubr.f32.mxu0 0.0
      %3517 = vmatmul.mubr.f32.gmra.mxu0 %v3421
      %v3518 = vpop.f32.mrf.mxu0
      %v3519 = vadd.f32 0.0, %v3518
      %v3520 = vpop.f32.mrf.mxu0
      %3521 = vmatprep.mubr.f32.mxu0 0.0
      %3522 = vmatmul.mubr.f32.gmra.mxu0 %v3424
      %v3523 = vpop.f32.mrf.mxu0
      %v3524 = vadd.f32 0.0, %v3523
      %v3525 = vpop.f32.mrf.mxu0
      %3526 = vmatprep.mubr.f32.mxu0 0.0
      %3527 = vmatmul.mubr.f32.gmra.mxu0 %v3427
      %v3528 = vpop.f32.mrf.mxu0
      %v3529 = vadd.f32 0.0, %v3528
      %v3530 = vpop.f32.mrf.mxu0
      %3531 = vmatprep.mubr.f32.mxu0 0.0
      %3532 = vmatmul.mubr.f32.gmra.mxu0 %v3430
      %v3533 = vpop.f32.mrf.mxu0
      %v3534 = vadd.f32 0.0, %v3533
      %v3535 = vpop.f32.mrf.mxu0
      %3536 = vdwg.mxu0
      %v3537 = vadd.f32 %v3375, %v3499
      %v3538 = vadd.f32 %v3376, %v3504
      %v3539 = vadd.f32 %v3377, %v3509
      %v3540 = vadd.f32 %v3378, %v3514
      %v3541 = vadd.f32 %v3379, %v3519
      %v3542 = vadd.f32 %v3380, %v3524
      %v3543 = vadd.f32 %v3381, %v3529
      %v3544 = vadd.f32 %v3382, %v3534
      %v3545 = vld [vmem:[%s6] sm:$0x1]
      %v3547 = vlaneseq
      %v3548 = vshrl.u32 %v3547, 7
      %v3549 = vsub.s32 0, %v3548
      %v3550 = vrot.slane %v3545, %v3549
      %v3552 = vadd.f32 %v3537, %v3550
      %v3553 = vadd.f32 %v3538, %v3550
      %v3554 = vadd.f32 %v3539, %v3550
      %v3555 = vadd.f32 %v3540, %v3550
      %v3556 = vadd.f32 %v3541, %v3550
      %v3557 = vadd.f32 %v3542, %v3550
      %v3558 = vadd.f32 %v3543, %v3550
      %v3559 = vadd.f32 %v3544, %v3550
      %vm3560 = vcmp.gt.f32.partialorder %v3552, 0.0
      %vm3561 = vcmp.gt.f32.partialorder %v3553, 0.0
      %vm3562 = vcmp.gt.f32.partialorder %v3554, 0.0
      %vm3563 = vcmp.gt.f32.partialorder %v3555, 0.0
      %vm3564 = vcmp.gt.f32.partialorder %v3556, 0.0
      %vm3565 = vcmp.gt.f32.partialorder %v3557, 0.0
      %vm3566 = vcmp.gt.f32.partialorder %v3558, 0.0
      %vm3567 = vcmp.gt.f32.partialorder %v3559, 0.0
      %v3568 = vmul.f32 %v3552, 0.2
      %v3569 = vmul.f32 %v3553, 0.2
      %v3570 = vmul.f32 %v3554, 0.2
      %v3571 = vmul.f32 %v3555, 0.2
      %v3572 = vmul.f32 %v3556, 0.2
      %v3573 = vmul.f32 %v3557, 0.2
      %v3574 = vmul.f32 %v3558, 0.2
      %v3575 = vmul.f32 %v3559, 0.2
      %v3576 = vsel %vm3560, %v3552, %v3568
      %v3577 = vsel %vm3561, %v3553, %v3569
      %v3578 = vsel %vm3562, %v3554, %v3570
      %v3579 = vsel %vm3563, %v3555, %v3571
      %v3580 = vsel %vm3564, %v3556, %v3572
      %v3581 = vsel %vm3565, %v3557, %v3573
      %v3582 = vsel %vm3566, %v3558, %v3574
      %v3583 = vsel %vm3567, %v3559, %v3575
      %3584 = vst [vmem:[#allocation4] sm:$0xff] 0.0
      %3585 = vst [vmem:[#allocation4 + $0x8] sm:$0xff] 0.0
      %3586 = vst [vmem:[#allocation4 + $0x10] sm:$0xff] 0.0
      %3587 = vst [vmem:[#allocation4 + $0x18] sm:$0xff] 0.0
      %3588 = vst [vmem:[#allocation4 + $0x20] sm:$0xff] 0.0
      %3589 = vst [vmem:[#allocation4 + $0x28] sm:$0xff] 0.0
      %3590 = vst [vmem:[#allocation4 + $0x30] sm:$0xff] 0.0
      %3591 = vst [vmem:[#allocation4 + $0x38] sm:$0xff] 0.0
      %3592 = vst [vmem:[#allocation4 + $0x40] sm:$0xff] 0.0
      %3593 = vst [vmem:[#allocation4 + $0x48] sm:$0xff] 0.0
      %3594 = vst [vmem:[#allocation4 + $0x50] sm:$0xff] 0.0
      %3595 = vst [vmem:[#allocation4 + $0x58] sm:$0xff] 0.0
      %3596 = vst [vmem:[#allocation4 + $0x10] sm:$0xff] %v3576
      %3597 = vst [vmem:[#allocation4 + $0x18] sm:$0xff] %v3577
      %3598 = vst [vmem:[#allocation4 + $0x20] sm:$0xff] %v3578
      %3599 = vst [vmem:[#allocation4 + $0x28] sm:$0xff] %v3579
      %3600 = vst [vmem:[#allocation4 + $0x30] sm:$0xff] %v3580
      %3601 = vst [vmem:[#allocation4 + $0x38] sm:$0xff] %v3581
      %3602 = vst [vmem:[#allocation4 + $0x40] sm:$0xff] %v3582
      %3603 = vst [vmem:[#allocation4 + $0x48] sm:$0xff] %v3583
      %v3604 = vld [vmem:[#allocation4 + $0x7] sm:$0xff]
      %v3605 = vld [vmem:[#allocation4 + $0xf] sm:$0xff]
      %v3606 = vld [vmem:[#allocation4 + $0x17] sm:$0xff]
      %v3607 = vld [vmem:[#allocation4 + $0x1f] sm:$0xff]
      %v3608 = vld [vmem:[#allocation4 + $0x27] sm:$0xff]
      %v3609 = vld [vmem:[#allocation4 + $0x2f] sm:$0xff]
      %v3610 = vld [vmem:[#allocation4 + $0x37] sm:$0xff]
      %v3611 = vld [vmem:[#allocation4 + $0x3f] sm:$0xff]
      %v3612 = vmul.f32 %v3604, %v456
      %v3613 = vmul.f32 %v3605, %v457
      %v3614 = vmul.f32 %v3606, %v458
      %v3615 = vmul.f32 %v3607, %v459
      %v3616 = vmul.f32 %v3608, %v460
      %v3617 = vmul.f32 %v3609, %v461
      %v3618 = vmul.f32 %v3610, %v462
      %v3619 = vmul.f32 %v3611, %v463
      %v3620 = vld [vmem:[%s7] sm:$0xff]
      %v3621 = vld [vmem:[%s7 + $0x8] sm:$0xff]
      %v3622 = vld [vmem:[%s7 + $0x10] sm:$0xff]
      %v3623 = vld [vmem:[%s7 + $0x18] sm:$0xff]
      %v3624 = vld [vmem:[%s7 + $0x20] sm:$0xff]
      %v3625 = vld [vmem:[%s7 + $0x28] sm:$0xff]
      %v3626 = vld [vmem:[%s7 + $0x30] sm:$0xff]
      %v3627 = vld [vmem:[%s7 + $0x38] sm:$0xff]
      %v3628 = vld [vmem:[%s7 + $0x40] sm:$0xff]
      %v3629 = vld [vmem:[%s7 + $0x48] sm:$0xff]
      %v3630 = vld [vmem:[%s7 + $0x50] sm:$0xff]
      %v3631 = vld [vmem:[%s7 + $0x58] sm:$0xff]
      %v3632 = vld [vmem:[%s7 + $0x60] sm:$0xff]
      %v3633 = vld [vmem:[%s7 + $0x68] sm:$0xff]
      %v3634 = vld [vmem:[%s7 + $0x70] sm:$0xff]
      %v3635 = vld [vmem:[%s7 + $0x78] sm:$0xff]
      %v3636 = vld [vmem:[#allocation4 + $0x8] sm:$0xff]
      %v3637 = vld [vmem:[#allocation4 + $0x10] sm:$0xff]
      %v3638 = vld [vmem:[#allocation4 + $0x18] sm:$0xff]
      %v3639 = vld [vmem:[#allocation4 + $0x20] sm:$0xff]
      %v3640 = vld [vmem:[#allocation4 + $0x28] sm:$0xff]
      %v3641 = vld [vmem:[#allocation4 + $0x30] sm:$0xff]
      %v3642 = vld [vmem:[#allocation4 + $0x38] sm:$0xff]
      %v3643 = vld [vmem:[#allocation4 + $0x40] sm:$0xff]
      %s3644 = scalar_lea.vmem %s7, 128
      %v3645 = vld [vmem:[%s3644] sm:$0xff]
      %v3646 = vld [vmem:[%s3644 + $0x8] sm:$0xff]
      %v3647 = vld [vmem:[%s3644 + $0x10] sm:$0xff]
      %v3648 = vld [vmem:[%s3644 + $0x18] sm:$0xff]
      %v3649 = vld [vmem:[%s3644 + $0x20] sm:$0xff]
      %v3650 = vld [vmem:[%s3644 + $0x28] sm:$0xff]
      %v3651 = vld [vmem:[%s3644 + $0x30] sm:$0xff]
      %v3652 = vld [vmem:[%s3644 + $0x38] sm:$0xff]
      %v3653 = vld [vmem:[%s3644 + $0x40] sm:$0xff]
      %v3654 = vld [vmem:[%s3644 + $0x48] sm:$0xff]
      %v3655 = vld [vmem:[%s3644 + $0x50] sm:$0xff]
      %v3656 = vld [vmem:[%s3644 + $0x58] sm:$0xff]
      %v3657 = vld [vmem:[%s3644 + $0x60] sm:$0xff]
      %v3658 = vld [vmem:[%s3644 + $0x68] sm:$0xff]
      %v3659 = vld [vmem:[%s3644 + $0x70] sm:$0xff]
      %v3660 = vld [vmem:[%s3644 + $0x78] sm:$0xff]
      %3661 = vmatprep.subr.mxu0 0.0
      %3662 = vmatpush1.msra.mxu0 %v3660
      %3663 = vmatprep.subr.mxu0 0.0
      %3664 = vmatpush1.msra.mxu0 %v3659
      %3665 = vmatprep.subr.mxu0 0.0
      %3666 = vmatpush1.msra.mxu0 %v3658
      %3667 = vmatprep.subr.mxu0 0.0
      %3668 = vmatpush1.msra.mxu0 %v3657
      %3669 = vmatprep.subr.mxu0 0.0
      %3670 = vmatpush1.msra.mxu0 %v3656
      %3671 = vmatprep.subr.mxu0 0.0
      %3672 = vmatpush1.msra.mxu0 %v3655
      %3673 = vmatprep.subr.mxu0 0.0
      %3674 = vmatpush1.msra.mxu0 %v3654
      %3675 = vmatprep.subr.mxu0 0.0
      %3676 = vmatpush1.msra.mxu0 %v3653
      %3677 = vmatprep.subr.mxu0 0.0
      %3678 = vmatpush1.msra.mxu0 %v3652
      %3679 = vmatprep.subr.mxu0 0.0
      %3680 = vmatpush1.msra.mxu0 %v3651
      %3681 = vmatprep.subr.mxu0 0.0
      %3682 = vmatpush1.msra.mxu0 %v3650
      %3683 = vmatprep.subr.mxu0 0.0
      %3684 = vmatpush1.msra.mxu0 %v3649
      %3685 = vmatprep.subr.mxu0 0.0
      %3686 = vmatpush1.msra.mxu0 %v3648
      %3687 = vmatprep.subr.mxu0 0.0
      %3688 = vmatpush1.msra.mxu0 %v3647
      %3689 = vmatprep.subr.mxu0 0.0
      %3690 = vmatpush1.msra.mxu0 %v3646
      %3691 = vmatprep.subr.mxu0 0.0
      %3692 = vmatpush1.msra.mxu0 %v3645
      %3693 = vmatprep.subr.mxu0 0.0
      %3694 = vmatpush2.msra.mxu0 0.0
      %3695 = vmatprep.subr.mxu0 0.0
      %3696 = vmatpush2.msra.mxu0 0.0
      %3697 = vmatprep.subr.mxu0 0.0
      %3698 = vmatpush2.msra.mxu0 0.0
      %3699 = vmatprep.subr.mxu0 0.0
      %3700 = vmatpush2.msra.mxu0 0.0
      %3701 = vmatprep.subr.mxu0 0.0
      %3702 = vmatpush2.msra.mxu0 0.0
      %3703 = vmatprep.subr.mxu0 0.0
      %3704 = vmatpush2.msra.mxu0 0.0
      %3705 = vmatprep.subr.mxu0 0.0
      %3706 = vmatpush2.msra.mxu0 0.0
      %3707 = vmatprep.subr.mxu0 0.0
      %3708 = vmatpush2.msra.mxu0 0.0
      %3709 = vmatprep.subr.mxu0 0.0
      %3710 = vmatpush2.msra.mxu0 0.0
      %3711 = vmatprep.subr.mxu0 0.0
      %3712 = vmatpush2.msra.mxu0 0.0
      %3713 = vmatprep.subr.mxu0 0.0
      %3714 = vmatpush2.msra.mxu0 0.0
      %3715 = vmatprep.subr.mxu0 0.0
      %3716 = vmatpush2.msra.mxu0 0.0
      %3717 = vmatprep.subr.mxu0 0.0
      %3718 = vmatpush2.msra.mxu0 0.0
      %3719 = vmatprep.subr.mxu0 0.0
      %3720 = vmatpush2.msra.mxu0 0.0
      %3721 = vmatprep.subr.mxu0 0.0
      %3722 = vmatpush2.msra.mxu0 0.0
      %3723 = vmatprep.subr.mxu0 0.0
      %3724 = vmatpush2.msra.mxu0 0.0
      %3725 = vmatprep.mubr.f32.mxu0 0.0
      %3726 = vmatmul.mubr.f32.gmra.mxu0 %v3636
      %v3727 = vpop.f32.mrf.mxu0
      %v3728 = vadd.f32 0.0, %v3727
      %v3729 = vpop.f32.mrf.mxu0
      %3730 = vmatprep.mubr.f32.mxu0 0.0
      %3731 = vmatmul.mubr.f32.gmra.mxu0 %v3637
      %v3732 = vpop.f32.mrf.mxu0
      %v3733 = vadd.f32 0.0, %v3732
      %v3734 = vpop.f32.mrf.mxu0
      %3735 = vmatprep.mubr.f32.mxu0 0.0
      %3736 = vmatmul.mubr.f32.gmra.mxu0 %v3638
      %v3737 = vpop.f32.mrf.mxu0
      %v3738 = vadd.f32 0.0, %v3737
      %v3739 = vpop.f32.mrf.mxu0
      %3740 = vmatprep.mubr.f32.mxu0 0.0
      %3741 = vmatmul.mubr.f32.gmra.mxu0 %v3639
      %v3742 = vpop.f32.mrf.mxu0
      %v3743 = vadd.f32 0.0, %v3742
      %v3744 = vpop.f32.mrf.mxu0
      %3745 = vmatprep.mubr.f32.mxu0 0.0
      %3746 = vmatmul.mubr.f32.gmra.mxu0 %v3640
      %v3747 = vpop.f32.mrf.mxu0
      %v3748 = vadd.f32 0.0, %v3747
      %v3749 = vpop.f32.mrf.mxu0
      %3750 = vmatprep.mubr.f32.mxu0 0.0
      %3751 = vmatmul.mubr.f32.gmra.mxu0 %v3641
      %v3752 = vpop.f32.mrf.mxu0
      %v3753 = vadd.f32 0.0, %v3752
      %v3754 = vpop.f32.mrf.mxu0
      %3755 = vmatprep.mubr.f32.mxu0 0.0
      %3756 = vmatmul.mubr.f32.gmra.mxu0 %v3642
      %v3757 = vpop.f32.mrf.mxu0
      %v3758 = vadd.f32 0.0, %v3757
      %v3759 = vpop.f32.mrf.mxu0
      %3760 = vmatprep.mubr.f32.mxu0 0.0
      %3761 = vmatmul.mubr.f32.gmra.mxu0 %v3643
      %v3762 = vpop.f32.mrf.mxu0
      %v3763 = vadd.f32 0.0, %v3762
      %v3764 = vpop.f32.mrf.mxu0
      %3765 = vdwg.mxu0
      %3766 = vmatprep.subr.mxu0 0.0
      %3767 = vmatpush1.msra.mxu0 %v3635
      %3768 = vmatprep.subr.mxu0 0.0
      %3769 = vmatpush1.msra.mxu0 %v3634
      %3770 = vmatprep.subr.mxu0 0.0
      %3771 = vmatpush1.msra.mxu0 %v3633
      %3772 = vmatprep.subr.mxu0 0.0
      %3773 = vmatpush1.msra.mxu0 %v3632
      %3774 = vmatprep.subr.mxu0 0.0
      %3775 = vmatpush1.msra.mxu0 %v3631
      %3776 = vmatprep.subr.mxu0 0.0
      %3777 = vmatpush1.msra.mxu0 %v3630
      %3778 = vmatprep.subr.mxu0 0.0
      %3779 = vmatpush1.msra.mxu0 %v3629
      %3780 = vmatprep.subr.mxu0 0.0
      %3781 = vmatpush1.msra.mxu0 %v3628
      %3782 = vmatprep.subr.mxu0 0.0
      %3783 = vmatpush1.msra.mxu0 %v3627
      %3784 = vmatprep.subr.mxu0 0.0
      %3785 = vmatpush1.msra.mxu0 %v3626
      %3786 = vmatprep.subr.mxu0 0.0
      %3787 = vmatpush1.msra.mxu0 %v3625
      %3788 = vmatprep.subr.mxu0 0.0
      %3789 = vmatpush1.msra.mxu0 %v3624
      %3790 = vmatprep.subr.mxu0 0.0
      %3791 = vmatpush1.msra.mxu0 %v3623
      %3792 = vmatprep.subr.mxu0 0.0
      %3793 = vmatpush1.msra.mxu0 %v3622
      %3794 = vmatprep.subr.mxu0 0.0
      %3795 = vmatpush1.msra.mxu0 %v3621
      %3796 = vmatprep.subr.mxu0 0.0
      %3797 = vmatpush1.msra.mxu0 %v3620
      %3798 = vmatprep.subr.mxu0 0.0
      %3799 = vmatpush2.msra.mxu0 0.0
      %3800 = vmatprep.subr.mxu0 0.0
      %3801 = vmatpush2.msra.mxu0 0.0
      %3802 = vmatprep.subr.mxu0 0.0
      %3803 = vmatpush2.msra.mxu0 0.0
      %3804 = vmatprep.subr.mxu0 0.0
      %3805 = vmatpush2.msra.mxu0 0.0
      %3806 = vmatprep.subr.mxu0 0.0
      %3807 = vmatpush2.msra.mxu0 0.0
      %3808 = vmatprep.subr.mxu0 0.0
      %3809 = vmatpush2.msra.mxu0 0.0
      %3810 = vmatprep.subr.mxu0 0.0
      %3811 = vmatpush2.msra.mxu0 0.0
      %3812 = vmatprep.subr.mxu0 0.0
      %3813 = vmatpush2.msra.mxu0 0.0
      %3814 = vmatprep.subr.mxu0 0.0
      %3815 = vmatpush2.msra.mxu0 0.0
      %3816 = vmatprep.subr.mxu0 0.0
      %3817 = vmatpush2.msra.mxu0 0.0
      %3818 = vmatprep.subr.mxu0 0.0
      %3819 = vmatpush2.msra.mxu0 0.0
      %3820 = vmatprep.subr.mxu0 0.0
      %3821 = vmatpush2.msra.mxu0 0.0
      %3822 = vmatprep.subr.mxu0 0.0
      %3823 = vmatpush2.msra.mxu0 0.0
      %3824 = vmatprep.subr.mxu0 0.0
      %3825 = vmatpush2.msra.mxu0 0.0
      %3826 = vmatprep.subr.mxu0 0.0
      %3827 = vmatpush2.msra.mxu0 0.0
      %3828 = vmatprep.subr.mxu0 0.0
      %3829 = vmatpush2.msra.mxu0 0.0
      %3830 = vmatprep.mubr.f32.mxu0 0.0
      %3831 = vmatmul.mubr.f32.gmra.mxu0 %v3612
      %v3832 = vpop.f32.mrf.mxu0
      %v3833 = vadd.f32 %v3728, %v3832
      %v3834 = vpop.f32.mrf.mxu0
      %3835 = vmatprep.mubr.f32.mxu0 0.0
      %3836 = vmatmul.mubr.f32.gmra.mxu0 %v3613
      %v3837 = vpop.f32.mrf.mxu0
      %v3838 = vadd.f32 %v3733, %v3837
      %v3839 = vpop.f32.mrf.mxu0
      %3840 = vmatprep.mubr.f32.mxu0 0.0
      %3841 = vmatmul.mubr.f32.gmra.mxu0 %v3614
      %v3842 = vpop.f32.mrf.mxu0
      %v3843 = vadd.f32 %v3738, %v3842
      %v3844 = vpop.f32.mrf.mxu0
      %3845 = vmatprep.mubr.f32.mxu0 0.0
      %3846 = vmatmul.mubr.f32.gmra.mxu0 %v3615
      %v3847 = vpop.f32.mrf.mxu0
      %v3848 = vadd.f32 %v3743, %v3847
      %v3849 = vpop.f32.mrf.mxu0
      %3850 = vmatprep.mubr.f32.mxu0 0.0
      %3851 = vmatmul.mubr.f32.gmra.mxu0 %v3616
      %v3852 = vpop.f32.mrf.mxu0
      %v3853 = vadd.f32 %v3748, %v3852
      %v3854 = vpop.f32.mrf.mxu0
      %3855 = vmatprep.mubr.f32.mxu0 0.0
      %3856 = vmatmul.mubr.f32.gmra.mxu0 %v3617
      %v3857 = vpop.f32.mrf.mxu0
      %v3858 = vadd.f32 %v3753, %v3857
      %v3859 = vpop.f32.mrf.mxu0
      %3860 = vmatprep.mubr.f32.mxu0 0.0
      %3861 = vmatmul.mubr.f32.gmra.mxu0 %v3618
      %v3862 = vpop.f32.mrf.mxu0
      %v3863 = vadd.f32 %v3758, %v3862
      %v3864 = vpop.f32.mrf.mxu0
      %3865 = vmatprep.mubr.f32.mxu0 0.0
      %3866 = vmatmul.mubr.f32.gmra.mxu0 %v3619
      %v3867 = vpop.f32.mrf.mxu0
      %v3868 = vadd.f32 %v3763, %v3867
      %v3869 = vpop.f32.mrf.mxu0
      %3870 = vdwg.mxu0
      %v3871 = vld [vmem:[#allocation4 + $0x9] sm:$0xff]
      %v3872 = vld [vmem:[#allocation4 + $0x11] sm:$0xff]
      %v3873 = vld [vmem:[#allocation4 + $0x19] sm:$0xff]
      %v3874 = vld [vmem:[#allocation4 + $0x21] sm:$0xff]
      %v3875 = vld [vmem:[#allocation4 + $0x29] sm:$0xff]
      %v3876 = vld [vmem:[#allocation4 + $0x31] sm:$0xff]
      %v3877 = vld [vmem:[#allocation4 + $0x39] sm:$0xff]
      %v3878 = vld [vmem:[#allocation4 + $0x41] sm:$0xff]
      %v3879 = vmul.f32 %v3871, %v480
      %v3880 = vmul.f32 %v3872, %v481
      %v3881 = vmul.f32 %v3873, %v482
      %v3882 = vmul.f32 %v3874, %v483
      %v3883 = vmul.f32 %v3875, %v484
      %v3884 = vmul.f32 %v3876, %v485
      %v3885 = vmul.f32 %v3877, %v486
      %v3886 = vmul.f32 %v3878, %v487
      %s3887 = scalar_lea.vmem %s7, 256
      %v3888 = vld [vmem:[%s3887] sm:$0xff]
      %v3889 = vld [vmem:[%s3887 + $0x8] sm:$0xff]
      %v3890 = vld [vmem:[%s3887 + $0x10] sm:$0xff]
      %v3891 = vld [vmem:[%s3887 + $0x18] sm:$0xff]
      %v3892 = vld [vmem:[%s3887 + $0x20] sm:$0xff]
      %v3893 = vld [vmem:[%s3887 + $0x28] sm:$0xff]
      %v3894 = vld [vmem:[%s3887 + $0x30] sm:$0xff]
      %v3895 = vld [vmem:[%s3887 + $0x38] sm:$0xff]
      %v3896 = vld [vmem:[%s3887 + $0x40] sm:$0xff]
      %v3897 = vld [vmem:[%s3887 + $0x48] sm:$0xff]
      %v3898 = vld [vmem:[%s3887 + $0x50] sm:$0xff]
      %v3899 = vld [vmem:[%s3887 + $0x58] sm:$0xff]
      %v3900 = vld [vmem:[%s3887 + $0x60] sm:$0xff]
      %v3901 = vld [vmem:[%s3887 + $0x68] sm:$0xff]
      %v3902 = vld [vmem:[%s3887 + $0x70] sm:$0xff]
      %v3903 = vld [vmem:[%s3887 + $0x78] sm:$0xff]
      %3904 = vmatprep.subr.mxu0 0.0
      %3905 = vmatpush1.msra.mxu0 %v3903
      %3906 = vmatprep.subr.mxu0 0.0
      %3907 = vmatpush1.msra.mxu0 %v3902
      %3908 = vmatprep.subr.mxu0 0.0
      %3909 = vmatpush1.msra.mxu0 %v3901
      %3910 = vmatprep.subr.mxu0 0.0
      %3911 = vmatpush1.msra.mxu0 %v3900
      %3912 = vmatprep.subr.mxu0 0.0
      %3913 = vmatpush1.msra.mxu0 %v3899
      %3914 = vmatprep.subr.mxu0 0.0
      %3915 = vmatpush1.msra.mxu0 %v3898
      %3916 = vmatprep.subr.mxu0 0.0
      %3917 = vmatpush1.msra.mxu0 %v3897
      %3918 = vmatprep.subr.mxu0 0.0
      %3919 = vmatpush1.msra.mxu0 %v3896
      %3920 = vmatprep.subr.mxu0 0.0
      %3921 = vmatpush1.msra.mxu0 %v3895
      %3922 = vmatprep.subr.mxu0 0.0
      %3923 = vmatpush1.msra.mxu0 %v3894
      %3924 = vmatprep.subr.mxu0 0.0
      %3925 = vmatpush1.msra.mxu0 %v3893
      %3926 = vmatprep.subr.mxu0 0.0
      %3927 = vmatpush1.msra.mxu0 %v3892
      %3928 = vmatprep.subr.mxu0 0.0
      %3929 = vmatpush1.msra.mxu0 %v3891
      %3930 = vmatprep.subr.mxu0 0.0
      %3931 = vmatpush1.msra.mxu0 %v3890
      %3932 = vmatprep.subr.mxu0 0.0
      %3933 = vmatpush1.msra.mxu0 %v3889
      %3934 = vmatprep.subr.mxu0 0.0
      %3935 = vmatpush1.msra.mxu0 %v3888
      %3936 = vmatprep.subr.mxu0 0.0
      %3937 = vmatpush2.msra.mxu0 0.0
      %3938 = vmatprep.subr.mxu0 0.0
      %3939 = vmatpush2.msra.mxu0 0.0
      %3940 = vmatprep.subr.mxu0 0.0
      %3941 = vmatpush2.msra.mxu0 0.0
      %3942 = vmatprep.subr.mxu0 0.0
      %3943 = vmatpush2.msra.mxu0 0.0
      %3944 = vmatprep.subr.mxu0 0.0
      %3945 = vmatpush2.msra.mxu0 0.0
      %3946 = vmatprep.subr.mxu0 0.0
      %3947 = vmatpush2.msra.mxu0 0.0
      %3948 = vmatprep.subr.mxu0 0.0
      %3949 = vmatpush2.msra.mxu0 0.0
      %3950 = vmatprep.subr.mxu0 0.0
      %3951 = vmatpush2.msra.mxu0 0.0
      %3952 = vmatprep.subr.mxu0 0.0
      %3953 = vmatpush2.msra.mxu0 0.0
      %3954 = vmatprep.subr.mxu0 0.0
      %3955 = vmatpush2.msra.mxu0 0.0
      %3956 = vmatprep.subr.mxu0 0.0
      %3957 = vmatpush2.msra.mxu0 0.0
      %3958 = vmatprep.subr.mxu0 0.0
      %3959 = vmatpush2.msra.mxu0 0.0
      %3960 = vmatprep.subr.mxu0 0.0
      %3961 = vmatpush2.msra.mxu0 0.0
      %3962 = vmatprep.subr.mxu0 0.0
      %3963 = vmatpush2.msra.mxu0 0.0
      %3964 = vmatprep.subr.mxu0 0.0
      %3965 = vmatpush2.msra.mxu0 0.0
      %3966 = vmatprep.subr.mxu0 0.0
      %3967 = vmatpush2.msra.mxu0 0.0
      %3968 = vmatprep.mubr.f32.mxu0 0.0
      %3969 = vmatmul.mubr.f32.gmra.mxu0 %v3879
      %v3970 = vpop.f32.mrf.mxu0
      %v3971 = vadd.f32 0.0, %v3970
      %v3972 = vpop.f32.mrf.mxu0
      %3973 = vmatprep.mubr.f32.mxu0 0.0
      %3974 = vmatmul.mubr.f32.gmra.mxu0 %v3880
      %v3975 = vpop.f32.mrf.mxu0
      %v3976 = vadd.f32 0.0, %v3975
      %v3977 = vpop.f32.mrf.mxu0
      %3978 = vmatprep.mubr.f32.mxu0 0.0
      %3979 = vmatmul.mubr.f32.gmra.mxu0 %v3881
      %v3980 = vpop.f32.mrf.mxu0
      %v3981 = vadd.f32 0.0, %v3980
      %v3982 = vpop.f32.mrf.mxu0
      %3983 = vmatprep.mubr.f32.mxu0 0.0
      %3984 = vmatmul.mubr.f32.gmra.mxu0 %v3882
      %v3985 = vpop.f32.mrf.mxu0
      %v3986 = vadd.f32 0.0, %v3985
      %v3987 = vpop.f32.mrf.mxu0
      %3988 = vmatprep.mubr.f32.mxu0 0.0
      %3989 = vmatmul.mubr.f32.gmra.mxu0 %v3883
      %v3990 = vpop.f32.mrf.mxu0
      %v3991 = vadd.f32 0.0, %v3990
      %v3992 = vpop.f32.mrf.mxu0
      %3993 = vmatprep.mubr.f32.mxu0 0.0
      %3994 = vmatmul.mubr.f32.gmra.mxu0 %v3884
      %v3995 = vpop.f32.mrf.mxu0
      %v3996 = vadd.f32 0.0, %v3995
      %v3997 = vpop.f32.mrf.mxu0
      %3998 = vmatprep.mubr.f32.mxu0 0.0
      %3999 = vmatmul.mubr.f32.gmra.mxu0 %v3885
      %v4000 = vpop.f32.mrf.mxu0
      %v4001 = vadd.f32 0.0, %v4000
      %v4002 = vpop.f32.mrf.mxu0
      %4003 = vmatprep.mubr.f32.mxu0 0.0
      %4004 = vmatmul.mubr.f32.gmra.mxu0 %v3886
      %v4005 = vpop.f32.mrf.mxu0
      %v4006 = vadd.f32 0.0, %v4005
      %v4007 = vpop.f32.mrf.mxu0
      %4008 = vdwg.mxu0
      %v4009 = vadd.f32 %v3833, %v3971
      %v4010 = vadd.f32 %v3838, %v3976
      %v4011 = vadd.f32 %v3843, %v3981
      %v4012 = vadd.f32 %v3848, %v3986
      %v4013 = vadd.f32 %v3853, %v3991
      %v4014 = vadd.f32 %v3858, %v3996
      %v4015 = vadd.f32 %v3863, %v4001
      %v4016 = vadd.f32 %v3868, %v4006
      %v4017 = vld [vmem:[#allocation4 + $0xf] sm:$0xff]
      %v4018 = vld [vmem:[#allocation4 + $0x17] sm:$0xff]
      %v4019 = vld [vmem:[#allocation4 + $0x1f] sm:$0xff]
      %v4020 = vld [vmem:[#allocation4 + $0x27] sm:$0xff]
      %v4021 = vld [vmem:[#allocation4 + $0x2f] sm:$0xff]
      %v4022 = vld [vmem:[#allocation4 + $0x37] sm:$0xff]
      %v4023 = vld [vmem:[#allocation4 + $0x3f] sm:$0xff]
      %v4024 = vld [vmem:[#allocation4 + $0x47] sm:$0xff]
      %v4025 = vmul.f32 %v4017, %v456
      %v4026 = vmul.f32 %v4018, %v457
      %v4027 = vmul.f32 %v4019, %v458
      %v4028 = vmul.f32 %v4020, %v459
      %v4029 = vmul.f32 %v4021, %v460
      %v4030 = vmul.f32 %v4022, %v461
      %v4031 = vmul.f32 %v4023, %v462
      %v4032 = vmul.f32 %v4024, %v463
      %s4033 = scalar_lea.vmem %s7, 384
      %v4034 = vld [vmem:[%s4033] sm:$0xff]
      %v4035 = vld [vmem:[%s4033 + $0x8] sm:$0xff]
      %v4036 = vld [vmem:[%s4033 + $0x10] sm:$0xff]
      %v4037 = vld [vmem:[%s4033 + $0x18] sm:$0xff]
      %v4038 = vld [vmem:[%s4033 + $0x20] sm:$0xff]
      %v4039 = vld [vmem:[%s4033 + $0x28] sm:$0xff]
      %v4040 = vld [vmem:[%s4033 + $0x30] sm:$0xff]
      %v4041 = vld [vmem:[%s4033 + $0x38] sm:$0xff]
      %v4042 = vld [vmem:[%s4033 + $0x40] sm:$0xff]
      %v4043 = vld [vmem:[%s4033 + $0x48] sm:$0xff]
      %v4044 = vld [vmem:[%s4033 + $0x50] sm:$0xff]
      %v4045 = vld [vmem:[%s4033 + $0x58] sm:$0xff]
      %v4046 = vld [vmem:[%s4033 + $0x60] sm:$0xff]
      %v4047 = vld [vmem:[%s4033 + $0x68] sm:$0xff]
      %v4048 = vld [vmem:[%s4033 + $0x70] sm:$0xff]
      %v4049 = vld [vmem:[%s4033 + $0x78] sm:$0xff]
      %4050 = vmatprep.subr.mxu0 0.0
      %4051 = vmatpush1.msra.mxu0 %v4049
      %4052 = vmatprep.subr.mxu0 0.0
      %4053 = vmatpush1.msra.mxu0 %v4048
      %4054 = vmatprep.subr.mxu0 0.0
      %4055 = vmatpush1.msra.mxu0 %v4047
      %4056 = vmatprep.subr.mxu0 0.0
      %4057 = vmatpush1.msra.mxu0 %v4046
      %4058 = vmatprep.subr.mxu0 0.0
      %4059 = vmatpush1.msra.mxu0 %v4045
      %4060 = vmatprep.subr.mxu0 0.0
      %4061 = vmatpush1.msra.mxu0 %v4044
      %4062 = vmatprep.subr.mxu0 0.0
      %4063 = vmatpush1.msra.mxu0 %v4043
      %4064 = vmatprep.subr.mxu0 0.0
      %4065 = vmatpush1.msra.mxu0 %v4042
      %4066 = vmatprep.subr.mxu0 0.0
      %4067 = vmatpush1.msra.mxu0 %v4041
      %4068 = vmatprep.subr.mxu0 0.0
      %4069 = vmatpush1.msra.mxu0 %v4040
      %4070 = vmatprep.subr.mxu0 0.0
      %4071 = vmatpush1.msra.mxu0 %v4039
      %4072 = vmatprep.subr.mxu0 0.0
      %4073 = vmatpush1.msra.mxu0 %v4038
      %4074 = vmatprep.subr.mxu0 0.0
      %4075 = vmatpush1.msra.mxu0 %v4037
      %4076 = vmatprep.subr.mxu0 0.0
      %4077 = vmatpush1.msra.mxu0 %v4036
      %4078 = vmatprep.subr.mxu0 0.0
      %4079 = vmatpush1.msra.mxu0 %v4035
      %4080 = vmatprep.subr.mxu0 0.0
      %4081 = vmatpush1.msra.mxu0 %v4034
      %4082 = vmatprep.subr.mxu0 0.0
      %4083 = vmatpush2.msra.mxu0 0.0
      %4084 = vmatprep.subr.mxu0 0.0
      %4085 = vmatpush2.msra.mxu0 0.0
      %4086 = vmatprep.subr.mxu0 0.0
      %4087 = vmatpush2.msra.mxu0 0.0
      %4088 = vmatprep.subr.mxu0 0.0
      %4089 = vmatpush2.msra.mxu0 0.0
      %4090 = vmatprep.subr.mxu0 0.0
      %4091 = vmatpush2.msra.mxu0 0.0
      %4092 = vmatprep.subr.mxu0 0.0
      %4093 = vmatpush2.msra.mxu0 0.0
      %4094 = vmatprep.subr.mxu0 0.0
      %4095 = vmatpush2.msra.mxu0 0.0
      %4096 = vmatprep.subr.mxu0 0.0
      %4097 = vmatpush2.msra.mxu0 0.0
      %4098 = vmatprep.subr.mxu0 0.0
      %4099 = vmatpush2.msra.mxu0 0.0
      %4100 = vmatprep.subr.mxu0 0.0
      %4101 = vmatpush2.msra.mxu0 0.0
      %4102 = vmatprep.subr.mxu0 0.0
      %4103 = vmatpush2.msra.mxu0 0.0
      %4104 = vmatprep.subr.mxu0 0.0
      %4105 = vmatpush2.msra.mxu0 0.0
      %4106 = vmatprep.subr.mxu0 0.0
      %4107 = vmatpush2.msra.mxu0 0.0
      %4108 = vmatprep.subr.mxu0 0.0
      %4109 = vmatpush2.msra.mxu0 0.0
      %4110 = vmatprep.subr.mxu0 0.0
      %4111 = vmatpush2.msra.mxu0 0.0
      %4112 = vmatprep.subr.mxu0 0.0
      %4113 = vmatpush2.msra.mxu0 0.0
      %4114 = vmatprep.mubr.f32.mxu0 0.0
      %4115 = vmatmul.mubr.f32.gmra.mxu0 %v4025
      %v4116 = vpop.f32.mrf.mxu0
      %v4117 = vadd.f32 0.0, %v4116
      %v4118 = vpop.f32.mrf.mxu0
      %4119 = vmatprep.mubr.f32.mxu0 0.0
      %4120 = vmatmul.mubr.f32.gmra.mxu0 %v4026
      %v4121 = vpop.f32.mrf.mxu0
      %v4122 = vadd.f32 0.0, %v4121
      %v4123 = vpop.f32.mrf.mxu0
      %4124 = vmatprep.mubr.f32.mxu0 0.0
      %4125 = vmatmul.mubr.f32.gmra.mxu0 %v4027
      %v4126 = vpop.f32.mrf.mxu0
      %v4127 = vadd.f32 0.0, %v4126
      %v4128 = vpop.f32.mrf.mxu0
      %4129 = vmatprep.mubr.f32.mxu0 0.0
      %4130 = vmatmul.mubr.f32.gmra.mxu0 %v4028
      %v4131 = vpop.f32.mrf.mxu0
      %v4132 = vadd.f32 0.0, %v4131
      %v4133 = vpop.f32.mrf.mxu0
      %4134 = vmatprep.mubr.f32.mxu0 0.0
      %4135 = vmatmul.mubr.f32.gmra.mxu0 %v4029
      %v4136 = vpop.f32.mrf.mxu0
      %v4137 = vadd.f32 0.0, %v4136
      %v4138 = vpop.f32.mrf.mxu0
      %4139 = vmatprep.mubr.f32.mxu0 0.0
      %4140 = vmatmul.mubr.f32.gmra.mxu0 %v4030
      %v4141 = vpop.f32.mrf.mxu0
      %v4142 = vadd.f32 0.0, %v4141
      %v4143 = vpop.f32.mrf.mxu0
      %4144 = vmatprep.mubr.f32.mxu0 0.0
      %4145 = vmatmul.mubr.f32.gmra.mxu0 %v4031
      %v4146 = vpop.f32.mrf.mxu0
      %v4147 = vadd.f32 0.0, %v4146
      %v4148 = vpop.f32.mrf.mxu0
      %4149 = vmatprep.mubr.f32.mxu0 0.0
      %4150 = vmatmul.mubr.f32.gmra.mxu0 %v4032
      %v4151 = vpop.f32.mrf.mxu0
      %v4152 = vadd.f32 0.0, %v4151
      %v4153 = vpop.f32.mrf.mxu0
      %4154 = vdwg.mxu0
      %v4155 = vadd.f32 %v4009, %v4117
      %v4156 = vadd.f32 %v4010, %v4122
      %v4157 = vadd.f32 %v4011, %v4127
      %v4158 = vadd.f32 %v4012, %v4132
      %v4159 = vadd.f32 %v4013, %v4137
      %v4160 = vadd.f32 %v4014, %v4142
      %v4161 = vadd.f32 %v4015, %v4147
      %v4162 = vadd.f32 %v4016, %v4152
      %v4163 = vld [vmem:[#allocation4 + $0x10] sm:$0xff]
      %v4164 = vld [vmem:[#allocation4 + $0x18] sm:$0xff]
      %v4165 = vld [vmem:[#allocation4 + $0x20] sm:$0xff]
      %v4166 = vld [vmem:[#allocation4 + $0x28] sm:$0xff]
      %v4167 = vld [vmem:[#allocation4 + $0x30] sm:$0xff]
      %v4168 = vld [vmem:[#allocation4 + $0x38] sm:$0xff]
      %v4169 = vld [vmem:[#allocation4 + $0x40] sm:$0xff]
      %v4170 = vld [vmem:[#allocation4 + $0x48] sm:$0xff]
      %s4171 = scalar_lea.vmem %s7, 512
      %v4172 = vld [vmem:[%s4171] sm:$0xff]
      %v4173 = vld [vmem:[%s4171 + $0x8] sm:$0xff]
      %v4174 = vld [vmem:[%s4171 + $0x10] sm:$0xff]
      %v4175 = vld [vmem:[%s4171 + $0x18] sm:$0xff]
      %v4176 = vld [vmem:[%s4171 + $0x20] sm:$0xff]
      %v4177 = vld [vmem:[%s4171 + $0x28] sm:$0xff]
      %v4178 = vld [vmem:[%s4171 + $0x30] sm:$0xff]
      %v4179 = vld [vmem:[%s4171 + $0x38] sm:$0xff]
      %v4180 = vld [vmem:[%s4171 + $0x40] sm:$0xff]
      %v4181 = vld [vmem:[%s4171 + $0x48] sm:$0xff]
      %v4182 = vld [vmem:[%s4171 + $0x50] sm:$0xff]
      %v4183 = vld [vmem:[%s4171 + $0x58] sm:$0xff]
      %v4184 = vld [vmem:[%s4171 + $0x60] sm:$0xff]
      %v4185 = vld [vmem:[%s4171 + $0x68] sm:$0xff]
      %v4186 = vld [vmem:[%s4171 + $0x70] sm:$0xff]
      %v4187 = vld [vmem:[%s4171 + $0x78] sm:$0xff]
      %4188 = vmatprep.subr.mxu0 0.0
      %4189 = vmatpush1.msra.mxu0 %v4187
      %4190 = vmatprep.subr.mxu0 0.0
      %4191 = vmatpush1.msra.mxu0 %v4186
      %4192 = vmatprep.subr.mxu0 0.0
      %4193 = vmatpush1.msra.mxu0 %v4185
      %4194 = vmatprep.subr.mxu0 0.0
      %4195 = vmatpush1.msra.mxu0 %v4184
      %4196 = vmatprep.subr.mxu0 0.0
      %4197 = vmatpush1.msra.mxu0 %v4183
      %4198 = vmatprep.subr.mxu0 0.0
      %4199 = vmatpush1.msra.mxu0 %v4182
      %4200 = vmatprep.subr.mxu0 0.0
      %4201 = vmatpush1.msra.mxu0 %v4181
      %4202 = vmatprep.subr.mxu0 0.0
      %4203 = vmatpush1.msra.mxu0 %v4180
      %4204 = vmatprep.subr.mxu0 0.0
      %4205 = vmatpush1.msra.mxu0 %v4179
      %4206 = vmatprep.subr.mxu0 0.0
      %4207 = vmatpush1.msra.mxu0 %v4178
      %4208 = vmatprep.subr.mxu0 0.0
      %4209 = vmatpush1.msra.mxu0 %v4177
      %4210 = vmatprep.subr.mxu0 0.0
      %4211 = vmatpush1.msra.mxu0 %v4176
      %4212 = vmatprep.subr.mxu0 0.0
      %4213 = vmatpush1.msra.mxu0 %v4175
      %4214 = vmatprep.subr.mxu0 0.0
      %4215 = vmatpush1.msra.mxu0 %v4174
      %4216 = vmatprep.subr.mxu0 0.0
      %4217 = vmatpush1.msra.mxu0 %v4173
      %4218 = vmatprep.subr.mxu0 0.0
      %4219 = vmatpush1.msra.mxu0 %v4172
      %4220 = vmatprep.subr.mxu0 0.0
      %4221 = vmatpush2.msra.mxu0 0.0
      %4222 = vmatprep.subr.mxu0 0.0
      %4223 = vmatpush2.msra.mxu0 0.0
      %4224 = vmatprep.subr.mxu0 0.0
      %4225 = vmatpush2.msra.mxu0 0.0
      %4226 = vmatprep.subr.mxu0 0.0
      %4227 = vmatpush2.msra.mxu0 0.0
      %4228 = vmatprep.subr.mxu0 0.0
      %4229 = vmatpush2.msra.mxu0 0.0
      %4230 = vmatprep.subr.mxu0 0.0
      %4231 = vmatpush2.msra.mxu0 0.0
      %4232 = vmatprep.subr.mxu0 0.0
      %4233 = vmatpush2.msra.mxu0 0.0
      %4234 = vmatprep.subr.mxu0 0.0
      %4235 = vmatpush2.msra.mxu0 0.0
      %4236 = vmatprep.subr.mxu0 0.0
      %4237 = vmatpush2.msra.mxu0 0.0
      %4238 = vmatprep.subr.mxu0 0.0
      %4239 = vmatpush2.msra.mxu0 0.0
      %4240 = vmatprep.subr.mxu0 0.0
      %4241 = vmatpush2.msra.mxu0 0.0
      %4242 = vmatprep.subr.mxu0 0.0
      %4243 = vmatpush2.msra.mxu0 0.0
      %4244 = vmatprep.subr.mxu0 0.0
      %4245 = vmatpush2.msra.mxu0 0.0
      %4246 = vmatprep.subr.mxu0 0.0
      %4247 = vmatpush2.msra.mxu0 0.0
      %4248 = vmatprep.subr.mxu0 0.0
      %4249 = vmatpush2.msra.mxu0 0.0
      %4250 = vmatprep.subr.mxu0 0.0
      %4251 = vmatpush2.msra.mxu0 0.0
      %4252 = vmatprep.mubr.f32.mxu0 0.0
      %4253 = vmatmul.mubr.f32.gmra.mxu0 %v4163
      %v4254 = vpop.f32.mrf.mxu0
      %v4255 = vadd.f32 0.0, %v4254
      %v4256 = vpop.f32.mrf.mxu0
      %4257 = vmatprep.mubr.f32.mxu0 0.0
      %4258 = vmatmul.mubr.f32.gmra.mxu0 %v4164
      %v4259 = vpop.f32.mrf.mxu0
      %v4260 = vadd.f32 0.0, %v4259
      %v4261 = vpop.f32.mrf.mxu0
      %4262 = vmatprep.mubr.f32.mxu0 0.0
      %4263 = vmatmul.mubr.f32.gmra.mxu0 %v4165
      %v4264 = vpop.f32.mrf.mxu0
      %v4265 = vadd.f32 0.0, %v4264
      %v4266 = vpop.f32.mrf.mxu0
      %4267 = vmatprep.mubr.f32.mxu0 0.0
      %4268 = vmatmul.mubr.f32.gmra.mxu0 %v4166
      %v4269 = vpop.f32.mrf.mxu0
      %v4270 = vadd.f32 0.0, %v4269
      %v4271 = vpop.f32.mrf.mxu0
      %4272 = vmatprep.mubr.f32.mxu0 0.0
      %4273 = vmatmul.mubr.f32.gmra.mxu0 %v4167
      %v4274 = vpop.f32.mrf.mxu0
      %v4275 = vadd.f32 0.0, %v4274
      %v4276 = vpop.f32.mrf.mxu0
      %4277 = vmatprep.mubr.f32.mxu0 0.0
      %4278 = vmatmul.mubr.f32.gmra.mxu0 %v4168
      %v4279 = vpop.f32.mrf.mxu0
      %v4280 = vadd.f32 0.0, %v4279
      %v4281 = vpop.f32.mrf.mxu0
      %4282 = vmatprep.mubr.f32.mxu0 0.0
      %4283 = vmatmul.mubr.f32.gmra.mxu0 %v4169
      %v4284 = vpop.f32.mrf.mxu0
      %v4285 = vadd.f32 0.0, %v4284
      %v4286 = vpop.f32.mrf.mxu0
      %4287 = vmatprep.mubr.f32.mxu0 0.0
      %4288 = vmatmul.mubr.f32.gmra.mxu0 %v4170
      %v4289 = vpop.f32.mrf.mxu0
      %v4290 = vadd.f32 0.0, %v4289
      %v4291 = vpop.f32.mrf.mxu0
      %4292 = vdwg.mxu0
      %v4293 = vadd.f32 %v4155, %v4255
      %v4294 = vadd.f32 %v4156, %v4260
      %v4295 = vadd.f32 %v4157, %v4265
      %v4296 = vadd.f32 %v4158, %v4270
      %v4297 = vadd.f32 %v4159, %v4275
      %v4298 = vadd.f32 %v4160, %v4280
      %v4299 = vadd.f32 %v4161, %v4285
      %v4300 = vadd.f32 %v4162, %v4290
      %v4301 = vld [vmem:[#allocation4 + $0x11] sm:$0xff]
      %v4302 = vld [vmem:[#allocation4 + $0x19] sm:$0xff]
      %v4303 = vld [vmem:[#allocation4 + $0x21] sm:$0xff]
      %v4304 = vld [vmem:[#allocation4 + $0x29] sm:$0xff]
      %v4305 = vld [vmem:[#allocation4 + $0x31] sm:$0xff]
      %v4306 = vld [vmem:[#allocation4 + $0x39] sm:$0xff]
      %v4307 = vld [vmem:[#allocation4 + $0x41] sm:$0xff]
      %v4308 = vld [vmem:[#allocation4 + $0x49] sm:$0xff]
      %v4309 = vmul.f32 %v4301, %v480
      %v4310 = vmul.f32 %v4302, %v481
      %v4311 = vmul.f32 %v4303, %v482
      %v4312 = vmul.f32 %v4304, %v483
      %v4313 = vmul.f32 %v4305, %v484
      %v4314 = vmul.f32 %v4306, %v485
      %v4315 = vmul.f32 %v4307, %v486
      %v4316 = vmul.f32 %v4308, %v487
      %s4317 = scalar_lea.vmem %s7, 640
      %v4318 = vld [vmem:[%s4317] sm:$0xff]
      %v4319 = vld [vmem:[%s4317 + $0x8] sm:$0xff]
      %v4320 = vld [vmem:[%s4317 + $0x10] sm:$0xff]
      %v4321 = vld [vmem:[%s4317 + $0x18] sm:$0xff]
      %v4322 = vld [vmem:[%s4317 + $0x20] sm:$0xff]
      %v4323 = vld [vmem:[%s4317 + $0x28] sm:$0xff]
      %v4324 = vld [vmem:[%s4317 + $0x30] sm:$0xff]
      %v4325 = vld [vmem:[%s4317 + $0x38] sm:$0xff]
      %v4326 = vld [vmem:[%s4317 + $0x40] sm:$0xff]
      %v4327 = vld [vmem:[%s4317 + $0x48] sm:$0xff]
      %v4328 = vld [vmem:[%s4317 + $0x50] sm:$0xff]
      %v4329 = vld [vmem:[%s4317 + $0x58] sm:$0xff]
      %v4330 = vld [vmem:[%s4317 + $0x60] sm:$0xff]
      %v4331 = vld [vmem:[%s4317 + $0x68] sm:$0xff]
      %v4332 = vld [vmem:[%s4317 + $0x70] sm:$0xff]
      %v4333 = vld [vmem:[%s4317 + $0x78] sm:$0xff]
      %4334 = vmatprep.subr.mxu0 0.0
      %4335 = vmatpush1.msra.mxu0 %v4333
      %4336 = vmatprep.subr.mxu0 0.0
      %4337 = vmatpush1.msra.mxu0 %v4332
      %4338 = vmatprep.subr.mxu0 0.0
      %4339 = vmatpush1.msra.mxu0 %v4331
      %4340 = vmatprep.subr.mxu0 0.0
      %4341 = vmatpush1.msra.mxu0 %v4330
      %4342 = vmatprep.subr.mxu0 0.0
      %4343 = vmatpush1.msra.mxu0 %v4329
      %4344 = vmatprep.subr.mxu0 0.0
      %4345 = vmatpush1.msra.mxu0 %v4328
      %4346 = vmatprep.subr.mxu0 0.0
      %4347 = vmatpush1.msra.mxu0 %v4327
      %4348 = vmatprep.subr.mxu0 0.0
      %4349 = vmatpush1.msra.mxu0 %v4326
      %4350 = vmatprep.subr.mxu0 0.0
      %4351 = vmatpush1.msra.mxu0 %v4325
      %4352 = vmatprep.subr.mxu0 0.0
      %4353 = vmatpush1.msra.mxu0 %v4324
      %4354 = vmatprep.subr.mxu0 0.0
      %4355 = vmatpush1.msra.mxu0 %v4323
      %4356 = vmatprep.subr.mxu0 0.0
      %4357 = vmatpush1.msra.mxu0 %v4322
      %4358 = vmatprep.subr.mxu0 0.0
      %4359 = vmatpush1.msra.mxu0 %v4321
      %4360 = vmatprep.subr.mxu0 0.0
      %4361 = vmatpush1.msra.mxu0 %v4320
      %4362 = vmatprep.subr.mxu0 0.0
      %4363 = vmatpush1.msra.mxu0 %v4319
      %4364 = vmatprep.subr.mxu0 0.0
      %4365 = vmatpush1.msra.mxu0 %v4318
      %4366 = vmatprep.subr.mxu0 0.0
      %4367 = vmatpush2.msra.mxu0 0.0
      %4368 = vmatprep.subr.mxu0 0.0
      %4369 = vmatpush2.msra.mxu0 0.0
      %4370 = vmatprep.subr.mxu0 0.0
      %4371 = vmatpush2.msra.mxu0 0.0
      %4372 = vmatprep.subr.mxu0 0.0
      %4373 = vmatpush2.msra.mxu0 0.0
      %4374 = vmatprep.subr.mxu0 0.0
      %4375 = vmatpush2.msra.mxu0 0.0
      %4376 = vmatprep.subr.mxu0 0.0
      %4377 = vmatpush2.msra.mxu0 0.0
      %4378 = vmatprep.subr.mxu0 0.0
      %4379 = vmatpush2.msra.mxu0 0.0
      %4380 = vmatprep.subr.mxu0 0.0
      %4381 = vmatpush2.msra.mxu0 0.0
      %4382 = vmatprep.subr.mxu0 0.0
      %4383 = vmatpush2.msra.mxu0 0.0
      %4384 = vmatprep.subr.mxu0 0.0
      %4385 = vmatpush2.msra.mxu0 0.0
      %4386 = vmatprep.subr.mxu0 0.0
      %4387 = vmatpush2.msra.mxu0 0.0
      %4388 = vmatprep.subr.mxu0 0.0
      %4389 = vmatpush2.msra.mxu0 0.0
      %4390 = vmatprep.subr.mxu0 0.0
      %4391 = vmatpush2.msra.mxu0 0.0
      %4392 = vmatprep.subr.mxu0 0.0
      %4393 = vmatpush2.msra.mxu0 0.0
      %4394 = vmatprep.subr.mxu0 0.0
      %4395 = vmatpush2.msra.mxu0 0.0
      %4396 = vmatprep.subr.mxu0 0.0
      %4397 = vmatpush2.msra.mxu0 0.0
      %4398 = vmatprep.mubr.f32.mxu0 0.0
      %4399 = vmatmul.mubr.f32.gmra.mxu0 %v4309
      %v4400 = vpop.f32.mrf.mxu0
      %v4401 = vadd.f32 0.0, %v4400
      %v4402 = vpop.f32.mrf.mxu0
      %4403 = vmatprep.mubr.f32.mxu0 0.0
      %4404 = vmatmul.mubr.f32.gmra.mxu0 %v4310
      %v4405 = vpop.f32.mrf.mxu0
      %v4406 = vadd.f32 0.0, %v4405
      %v4407 = vpop.f32.mrf.mxu0
      %4408 = vmatprep.mubr.f32.mxu0 0.0
      %4409 = vmatmul.mubr.f32.gmra.mxu0 %v4311
      %v4410 = vpop.f32.mrf.mxu0
      %v4411 = vadd.f32 0.0, %v4410
      %v4412 = vpop.f32.mrf.mxu0
      %4413 = vmatprep.mubr.f32.mxu0 0.0
      %4414 = vmatmul.mubr.f32.gmra.mxu0 %v4312
      %v4415 = vpop.f32.mrf.mxu0
      %v4416 = vadd.f32 0.0, %v4415
      %v4417 = vpop.f32.mrf.mxu0
      %4418 = vmatprep.mubr.f32.mxu0 0.0
      %4419 = vmatmul.mubr.f32.gmra.mxu0 %v4313
      %v4420 = vpop.f32.mrf.mxu0
      %v4421 = vadd.f32 0.0, %v4420
      %v4422 = vpop.f32.mrf.mxu0
      %4423 = vmatprep.mubr.f32.mxu0 0.0
      %4424 = vmatmul.mubr.f32.gmra.mxu0 %v4314
      %v4425 = vpop.f32.mrf.mxu0
      %v4426 = vadd.f32 0.0, %v4425
      %v4427 = vpop.f32.mrf.mxu0
      %4428 = vmatprep.mubr.f32.mxu0 0.0
      %4429 = vmatmul.mubr.f32.gmra.mxu0 %v4315
      %v4430 = vpop.f32.mrf.mxu0
      %v4431 = vadd.f32 0.0, %v4430
      %v4432 = vpop.f32.mrf.mxu0
      %4433 = vmatprep.mubr.f32.mxu0 0.0
      %4434 = vmatmul.mubr.f32.gmra.mxu0 %v4316
      %v4435 = vpop.f32.mrf.mxu0
      %v4436 = vadd.f32 0.0, %v4435
      %v4437 = vpop.f32.mrf.mxu0
      %4438 = vdwg.mxu0
      %v4439 = vadd.f32 %v4293, %v4401
      %v4440 = vadd.f32 %v4294, %v4406
      %v4441 = vadd.f32 %v4295, %v4411
      %v4442 = vadd.f32 %v4296, %v4416
      %v4443 = vadd.f32 %v4297, %v4421
      %v4444 = vadd.f32 %v4298, %v4426
      %v4445 = vadd.f32 %v4299, %v4431
      %v4446 = vadd.f32 %v4300, %v4436
      %v4447 = vld [vmem:[#allocation4 + $0x17] sm:$0xff]
      %v4448 = vld [vmem:[#allocation4 + $0x1f] sm:$0xff]
      %v4449 = vld [vmem:[#allocation4 + $0x27] sm:$0xff]
      %v4450 = vld [vmem:[#allocation4 + $0x2f] sm:$0xff]
      %v4451 = vld [vmem:[#allocation4 + $0x37] sm:$0xff]
      %v4452 = vld [vmem:[#allocation4 + $0x3f] sm:$0xff]
      %v4453 = vld [vmem:[#allocation4 + $0x47] sm:$0xff]
      %v4454 = vld [vmem:[#allocation4 + $0x4f] sm:$0xff]
      %v4455 = vmul.f32 %v4447, %v456
      %v4456 = vmul.f32 %v4448, %v457
      %v4457 = vmul.f32 %v4449, %v458
      %v4458 = vmul.f32 %v4450, %v459
      %v4459 = vmul.f32 %v4451, %v460
      %v4460 = vmul.f32 %v4452, %v461
      %v4461 = vmul.f32 %v4453, %v462
      %v4462 = vmul.f32 %v4454, %v463
      %s4463 = scalar_lea.vmem %s7, 768
      %v4464 = vld [vmem:[%s4463] sm:$0xff]
      %v4465 = vld [vmem:[%s4463 + $0x8] sm:$0xff]
      %v4466 = vld [vmem:[%s4463 + $0x10] sm:$0xff]
      %v4467 = vld [vmem:[%s4463 + $0x18] sm:$0xff]
      %v4468 = vld [vmem:[%s4463 + $0x20] sm:$0xff]
      %v4469 = vld [vmem:[%s4463 + $0x28] sm:$0xff]
      %v4470 = vld [vmem:[%s4463 + $0x30] sm:$0xff]
      %v4471 = vld [vmem:[%s4463 + $0x38] sm:$0xff]
      %v4472 = vld [vmem:[%s4463 + $0x40] sm:$0xff]
      %v4473 = vld [vmem:[%s4463 + $0x48] sm:$0xff]
      %v4474 = vld [vmem:[%s4463 + $0x50] sm:$0xff]
      %v4475 = vld [vmem:[%s4463 + $0x58] sm:$0xff]
      %v4476 = vld [vmem:[%s4463 + $0x60] sm:$0xff]
      %v4477 = vld [vmem:[%s4463 + $0x68] sm:$0xff]
      %v4478 = vld [vmem:[%s4463 + $0x70] sm:$0xff]
      %v4479 = vld [vmem:[%s4463 + $0x78] sm:$0xff]
      %4480 = vmatprep.subr.mxu0 0.0
      %4481 = vmatpush1.msra.mxu0 %v4479
      %4482 = vmatprep.subr.mxu0 0.0
      %4483 = vmatpush1.msra.mxu0 %v4478
      %4484 = vmatprep.subr.mxu0 0.0
      %4485 = vmatpush1.msra.mxu0 %v4477
      %4486 = vmatprep.subr.mxu0 0.0
      %4487 = vmatpush1.msra.mxu0 %v4476
      %4488 = vmatprep.subr.mxu0 0.0
      %4489 = vmatpush1.msra.mxu0 %v4475
      %4490 = vmatprep.subr.mxu0 0.0
      %4491 = vmatpush1.msra.mxu0 %v4474
      %4492 = vmatprep.subr.mxu0 0.0
      %4493 = vmatpush1.msra.mxu0 %v4473
      %4494 = vmatprep.subr.mxu0 0.0
      %4495 = vmatpush1.msra.mxu0 %v4472
      %4496 = vmatprep.subr.mxu0 0.0
      %4497 = vmatpush1.msra.mxu0 %v4471
      %4498 = vmatprep.subr.mxu0 0.0
      %4499 = vmatpush1.msra.mxu0 %v4470
      %4500 = vmatprep.subr.mxu0 0.0
      %4501 = vmatpush1.msra.mxu0 %v4469
      %4502 = vmatprep.subr.mxu0 0.0
      %4503 = vmatpush1.msra.mxu0 %v4468
      %4504 = vmatprep.subr.mxu0 0.0
      %4505 = vmatpush1.msra.mxu0 %v4467
      %4506 = vmatprep.subr.mxu0 0.0
      %4507 = vmatpush1.msra.mxu0 %v4466
      %4508 = vmatprep.subr.mxu0 0.0
      %4509 = vmatpush1.msra.mxu0 %v4465
      %4510 = vmatprep.subr.mxu0 0.0
      %4511 = vmatpush1.msra.mxu0 %v4464
      %4512 = vmatprep.subr.mxu0 0.0
      %4513 = vmatpush2.msra.mxu0 0.0
      %4514 = vmatprep.subr.mxu0 0.0
      %4515 = vmatpush2.msra.mxu0 0.0
      %4516 = vmatprep.subr.mxu0 0.0
      %4517 = vmatpush2.msra.mxu0 0.0
      %4518 = vmatprep.subr.mxu0 0.0
      %4519 = vmatpush2.msra.mxu0 0.0
      %4520 = vmatprep.subr.mxu0 0.0
      %4521 = vmatpush2.msra.mxu0 0.0
      %4522 = vmatprep.subr.mxu0 0.0
      %4523 = vmatpush2.msra.mxu0 0.0
      %4524 = vmatprep.subr.mxu0 0.0
      %4525 = vmatpush2.msra.mxu0 0.0
      %4526 = vmatprep.subr.mxu0 0.0
      %4527 = vmatpush2.msra.mxu0 0.0
      %4528 = vmatprep.subr.mxu0 0.0
      %4529 = vmatpush2.msra.mxu0 0.0
      %4530 = vmatprep.subr.mxu0 0.0
      %4531 = vmatpush2.msra.mxu0 0.0
      %4532 = vmatprep.subr.mxu0 0.0
      %4533 = vmatpush2.msra.mxu0 0.0
      %4534 = vmatprep.subr.mxu0 0.0
      %4535 = vmatpush2.msra.mxu0 0.0
      %4536 = vmatprep.subr.mxu0 0.0
      %4537 = vmatpush2.msra.mxu0 0.0
      %4538 = vmatprep.subr.mxu0 0.0
      %4539 = vmatpush2.msra.mxu0 0.0
      %4540 = vmatprep.subr.mxu0 0.0
      %4541 = vmatpush2.msra.mxu0 0.0
      %4542 = vmatprep.subr.mxu0 0.0
      %4543 = vmatpush2.msra.mxu0 0.0
      %4544 = vmatprep.mubr.f32.mxu0 0.0
      %4545 = vmatmul.mubr.f32.gmra.mxu0 %v4455
      %v4546 = vpop.f32.mrf.mxu0
      %v4547 = vadd.f32 0.0, %v4546
      %v4548 = vpop.f32.mrf.mxu0
      %4549 = vmatprep.mubr.f32.mxu0 0.0
      %4550 = vmatmul.mubr.f32.gmra.mxu0 %v4456
      %v4551 = vpop.f32.mrf.mxu0
      %v4552 = vadd.f32 0.0, %v4551
      %v4553 = vpop.f32.mrf.mxu0
      %4554 = vmatprep.mubr.f32.mxu0 0.0
      %4555 = vmatmul.mubr.f32.gmra.mxu0 %v4457
      %v4556 = vpop.f32.mrf.mxu0
      %v4557 = vadd.f32 0.0, %v4556
      %v4558 = vpop.f32.mrf.mxu0
      %4559 = vmatprep.mubr.f32.mxu0 0.0
      %4560 = vmatmul.mubr.f32.gmra.mxu0 %v4458
      %v4561 = vpop.f32.mrf.mxu0
      %v4562 = vadd.f32 0.0, %v4561
      %v4563 = vpop.f32.mrf.mxu0
      %4564 = vmatprep.mubr.f32.mxu0 0.0
      %4565 = vmatmul.mubr.f32.gmra.mxu0 %v4459
      %v4566 = vpop.f32.mrf.mxu0
      %v4567 = vadd.f32 0.0, %v4566
      %v4568 = vpop.f32.mrf.mxu0
      %4569 = vmatprep.mubr.f32.mxu0 0.0
      %4570 = vmatmul.mubr.f32.gmra.mxu0 %v4460
      %v4571 = vpop.f32.mrf.mxu0
      %v4572 = vadd.f32 0.0, %v4571
      %v4573 = vpop.f32.mrf.mxu0
      %4574 = vmatprep.mubr.f32.mxu0 0.0
      %4575 = vmatmul.mubr.f32.gmra.mxu0 %v4461
      %v4576 = vpop.f32.mrf.mxu0
      %v4577 = vadd.f32 0.0, %v4576
      %v4578 = vpop.f32.mrf.mxu0
      %4579 = vmatprep.mubr.f32.mxu0 0.0
      %4580 = vmatmul.mubr.f32.gmra.mxu0 %v4462
      %v4581 = vpop.f32.mrf.mxu0
      %v4582 = vadd.f32 0.0, %v4581
      %v4583 = vpop.f32.mrf.mxu0
      %4584 = vdwg.mxu0
      %v4585 = vadd.f32 %v4439, %v4547
      %v4586 = vadd.f32 %v4440, %v4552
      %v4587 = vadd.f32 %v4441, %v4557
      %v4588 = vadd.f32 %v4442, %v4562
      %v4589 = vadd.f32 %v4443, %v4567
      %v4590 = vadd.f32 %v4444, %v4572
      %v4591 = vadd.f32 %v4445, %v4577
      %v4592 = vadd.f32 %v4446, %v4582
      %v4593 = vld [vmem:[#allocation4 + $0x18] sm:$0xff]
      %v4594 = vld [vmem:[#allocation4 + $0x20] sm:$0xff]
      %v4595 = vld [vmem:[#allocation4 + $0x28] sm:$0xff]
      %v4596 = vld [vmem:[#allocation4 + $0x30] sm:$0xff]
      %v4597 = vld [vmem:[#allocation4 + $0x38] sm:$0xff]
      %v4598 = vld [vmem:[#allocation4 + $0x40] sm:$0xff]
      %v4599 = vld [vmem:[#allocation4 + $0x48] sm:$0xff]
      %v4600 = vld [vmem:[#allocation4 + $0x50] sm:$0xff]
      %s4601 = scalar_lea.vmem %s7, 896
      %v4602 = vld [vmem:[%s4601] sm:$0xff]
      %v4603 = vld [vmem:[%s4601 + $0x8] sm:$0xff]
      %v4604 = vld [vmem:[%s4601 + $0x10] sm:$0xff]
      %v4605 = vld [vmem:[%s4601 + $0x18] sm:$0xff]
      %v4606 = vld [vmem:[%s4601 + $0x20] sm:$0xff]
      %v4607 = vld [vmem:[%s4601 + $0x28] sm:$0xff]
      %v4608 = vld [vmem:[%s4601 + $0x30] sm:$0xff]
      %v4609 = vld [vmem:[%s4601 + $0x38] sm:$0xff]
      %v4610 = vld [vmem:[%s4601 + $0x40] sm:$0xff]
      %v4611 = vld [vmem:[%s4601 + $0x48] sm:$0xff]
      %v4612 = vld [vmem:[%s4601 + $0x50] sm:$0xff]
      %v4613 = vld [vmem:[%s4601 + $0x58] sm:$0xff]
      %v4614 = vld [vmem:[%s4601 + $0x60] sm:$0xff]
      %v4615 = vld [vmem:[%s4601 + $0x68] sm:$0xff]
      %v4616 = vld [vmem:[%s4601 + $0x70] sm:$0xff]
      %v4617 = vld [vmem:[%s4601 + $0x78] sm:$0xff]
      %4618 = vmatprep.subr.mxu0 0.0
      %4619 = vmatpush1.msra.mxu0 %v4617
      %4620 = vmatprep.subr.mxu0 0.0
      %4621 = vmatpush1.msra.mxu0 %v4616
      %4622 = vmatprep.subr.mxu0 0.0
      %4623 = vmatpush1.msra.mxu0 %v4615
      %4624 = vmatprep.subr.mxu0 0.0
      %4625 = vmatpush1.msra.mxu0 %v4614
      %4626 = vmatprep.subr.mxu0 0.0
      %4627 = vmatpush1.msra.mxu0 %v4613
      %4628 = vmatprep.subr.mxu0 0.0
      %4629 = vmatpush1.msra.mxu0 %v4612
      %4630 = vmatprep.subr.mxu0 0.0
      %4631 = vmatpush1.msra.mxu0 %v4611
      %4632 = vmatprep.subr.mxu0 0.0
      %4633 = vmatpush1.msra.mxu0 %v4610
      %4634 = vmatprep.subr.mxu0 0.0
      %4635 = vmatpush1.msra.mxu0 %v4609
      %4636 = vmatprep.subr.mxu0 0.0
      %4637 = vmatpush1.msra.mxu0 %v4608
      %4638 = vmatprep.subr.mxu0 0.0
      %4639 = vmatpush1.msra.mxu0 %v4607
      %4640 = vmatprep.subr.mxu0 0.0
      %4641 = vmatpush1.msra.mxu0 %v4606
      %4642 = vmatprep.subr.mxu0 0.0
      %4643 = vmatpush1.msra.mxu0 %v4605
      %4644 = vmatprep.subr.mxu0 0.0
      %4645 = vmatpush1.msra.mxu0 %v4604
      %4646 = vmatprep.subr.mxu0 0.0
      %4647 = vmatpush1.msra.mxu0 %v4603
      %4648 = vmatprep.subr.mxu0 0.0
      %4649 = vmatpush1.msra.mxu0 %v4602
      %4650 = vmatprep.subr.mxu0 0.0
      %4651 = vmatpush2.msra.mxu0 0.0
      %4652 = vmatprep.subr.mxu0 0.0
      %4653 = vmatpush2.msra.mxu0 0.0
      %4654 = vmatprep.subr.mxu0 0.0
      %4655 = vmatpush2.msra.mxu0 0.0
      %4656 = vmatprep.subr.mxu0 0.0
      %4657 = vmatpush2.msra.mxu0 0.0
      %4658 = vmatprep.subr.mxu0 0.0
      %4659 = vmatpush2.msra.mxu0 0.0
      %4660 = vmatprep.subr.mxu0 0.0
      %4661 = vmatpush2.msra.mxu0 0.0
      %4662 = vmatprep.subr.mxu0 0.0
      %4663 = vmatpush2.msra.mxu0 0.0
      %4664 = vmatprep.subr.mxu0 0.0
      %4665 = vmatpush2.msra.mxu0 0.0
      %4666 = vmatprep.subr.mxu0 0.0
      %4667 = vmatpush2.msra.mxu0 0.0
      %4668 = vmatprep.subr.mxu0 0.0
      %4669 = vmatpush2.msra.mxu0 0.0
      %4670 = vmatprep.subr.mxu0 0.0
      %4671 = vmatpush2.msra.mxu0 0.0
      %4672 = vmatprep.subr.mxu0 0.0
      %4673 = vmatpush2.msra.mxu0 0.0
      %4674 = vmatprep.subr.mxu0 0.0
      %4675 = vmatpush2.msra.mxu0 0.0
      %4676 = vmatprep.subr.mxu0 0.0
      %4677 = vmatpush2.msra.mxu0 0.0
      %4678 = vmatprep.subr.mxu0 0.0
      %4679 = vmatpush2.msra.mxu0 0.0
      %4680 = vmatprep.subr.mxu0 0.0
      %4681 = vmatpush2.msra.mxu0 0.0
      %4682 = vmatprep.mubr.f32.mxu0 0.0
      %4683 = vmatmul.mubr.f32.gmra.mxu0 %v4593
      %v4684 = vpop.f32.mrf.mxu0
      %v4685 = vadd.f32 0.0, %v4684
      %v4686 = vpop.f32.mrf.mxu0
      %4687 = vmatprep.mubr.f32.mxu0 0.0
      %4688 = vmatmul.mubr.f32.gmra.mxu0 %v4594
      %v4689 = vpop.f32.mrf.mxu0
      %v4690 = vadd.f32 0.0, %v4689
      %v4691 = vpop.f32.mrf.mxu0
      %4692 = vmatprep.mubr.f32.mxu0 0.0
      %4693 = vmatmul.mubr.f32.gmra.mxu0 %v4595
      %v4694 = vpop.f32.mrf.mxu0
      %v4695 = vadd.f32 0.0, %v4694
      %v4696 = vpop.f32.mrf.mxu0
      %4697 = vmatprep.mubr.f32.mxu0 0.0
      %4698 = vmatmul.mubr.f32.gmra.mxu0 %v4596
      %v4699 = vpop.f32.mrf.mxu0
      %v4700 = vadd.f32 0.0, %v4699
      %v4701 = vpop.f32.mrf.mxu0
      %4702 = vmatprep.mubr.f32.mxu0 0.0
      %4703 = vmatmul.mubr.f32.gmra.mxu0 %v4597
      %v4704 = vpop.f32.mrf.mxu0
      %v4705 = vadd.f32 0.0, %v4704
      %v4706 = vpop.f32.mrf.mxu0
      %4707 = vmatprep.mubr.f32.mxu0 0.0
      %4708 = vmatmul.mubr.f32.gmra.mxu0 %v4598
      %v4709 = vpop.f32.mrf.mxu0
      %v4710 = vadd.f32 0.0, %v4709
      %v4711 = vpop.f32.mrf.mxu0
      %4712 = vmatprep.mubr.f32.mxu0 0.0
      %4713 = vmatmul.mubr.f32.gmra.mxu0 %v4599
      %v4714 = vpop.f32.mrf.mxu0
      %v4715 = vadd.f32 0.0, %v4714
      %v4716 = vpop.f32.mrf.mxu0
      %4717 = vmatprep.mubr.f32.mxu0 0.0
      %4718 = vmatmul.mubr.f32.gmra.mxu0 %v4600
      %v4719 = vpop.f32.mrf.mxu0
      %v4720 = vadd.f32 0.0, %v4719
      %v4721 = vpop.f32.mrf.mxu0
      %4722 = vdwg.mxu0
      %v4723 = vadd.f32 %v4585, %v4685
      %v4724 = vadd.f32 %v4586, %v4690
      %v4725 = vadd.f32 %v4587, %v4695
      %v4726 = vadd.f32 %v4588, %v4700
      %v4727 = vadd.f32 %v4589, %v4705
      %v4728 = vadd.f32 %v4590, %v4710
      %v4729 = vadd.f32 %v4591, %v4715
      %v4730 = vadd.f32 %v4592, %v4720
      %v4731 = vld [vmem:[#allocation4 + $0x19] sm:$0xff]
      %v4732 = vld [vmem:[#allocation4 + $0x21] sm:$0xff]
      %v4733 = vld [vmem:[#allocation4 + $0x29] sm:$0xff]
      %v4734 = vld [vmem:[#allocation4 + $0x31] sm:$0xff]
      %v4735 = vld [vmem:[#allocation4 + $0x39] sm:$0xff]
      %v4736 = vld [vmem:[#allocation4 + $0x41] sm:$0xff]
      %v4737 = vld [vmem:[#allocation4 + $0x49] sm:$0xff]
      %v4738 = vld [vmem:[#allocation4 + $0x51] sm:$0xff]
      %v4739 = vmul.f32 %v4731, %v480
      %v4740 = vmul.f32 %v4732, %v481
      %v4741 = vmul.f32 %v4733, %v482
      %v4742 = vmul.f32 %v4734, %v483
      %v4743 = vmul.f32 %v4735, %v484
      %v4744 = vmul.f32 %v4736, %v485
      %v4745 = vmul.f32 %v4737, %v486
      %v4746 = vmul.f32 %v4738, %v487
      %s4747 = scalar_lea.vmem %s7, 1024
      %v4748 = vld [vmem:[%s4747] sm:$0xff]
      %v4749 = vld [vmem:[%s4747 + $0x8] sm:$0xff]
      %v4750 = vld [vmem:[%s4747 + $0x10] sm:$0xff]
      %v4751 = vld [vmem:[%s4747 + $0x18] sm:$0xff]
      %v4752 = vld [vmem:[%s4747 + $0x20] sm:$0xff]
      %v4753 = vld [vmem:[%s4747 + $0x28] sm:$0xff]
      %v4754 = vld [vmem:[%s4747 + $0x30] sm:$0xff]
      %v4755 = vld [vmem:[%s4747 + $0x38] sm:$0xff]
      %v4756 = vld [vmem:[%s4747 + $0x40] sm:$0xff]
      %v4757 = vld [vmem:[%s4747 + $0x48] sm:$0xff]
      %v4758 = vld [vmem:[%s4747 + $0x50] sm:$0xff]
      %v4759 = vld [vmem:[%s4747 + $0x58] sm:$0xff]
      %v4760 = vld [vmem:[%s4747 + $0x60] sm:$0xff]
      %v4761 = vld [vmem:[%s4747 + $0x68] sm:$0xff]
      %v4762 = vld [vmem:[%s4747 + $0x70] sm:$0xff]
      %v4763 = vld [vmem:[%s4747 + $0x78] sm:$0xff]
      %4764 = vmatprep.subr.mxu0 0.0
      %4765 = vmatpush1.msra.mxu0 %v4763
      %4766 = vmatprep.subr.mxu0 0.0
      %4767 = vmatpush1.msra.mxu0 %v4762
      %4768 = vmatprep.subr.mxu0 0.0
      %4769 = vmatpush1.msra.mxu0 %v4761
      %4770 = vmatprep.subr.mxu0 0.0
      %4771 = vmatpush1.msra.mxu0 %v4760
      %4772 = vmatprep.subr.mxu0 0.0
      %4773 = vmatpush1.msra.mxu0 %v4759
      %4774 = vmatprep.subr.mxu0 0.0
      %4775 = vmatpush1.msra.mxu0 %v4758
      %4776 = vmatprep.subr.mxu0 0.0
      %4777 = vmatpush1.msra.mxu0 %v4757
      %4778 = vmatprep.subr.mxu0 0.0
      %4779 = vmatpush1.msra.mxu0 %v4756
      %4780 = vmatprep.subr.mxu0 0.0
      %4781 = vmatpush1.msra.mxu0 %v4755
      %4782 = vmatprep.subr.mxu0 0.0
      %4783 = vmatpush1.msra.mxu0 %v4754
      %4784 = vmatprep.subr.mxu0 0.0
      %4785 = vmatpush1.msra.mxu0 %v4753
      %4786 = vmatprep.subr.mxu0 0.0
      %4787 = vmatpush1.msra.mxu0 %v4752
      %4788 = vmatprep.subr.mxu0 0.0
      %4789 = vmatpush1.msra.mxu0 %v4751
      %4790 = vmatprep.subr.mxu0 0.0
      %4791 = vmatpush1.msra.mxu0 %v4750
      %4792 = vmatprep.subr.mxu0 0.0
      %4793 = vmatpush1.msra.mxu0 %v4749
      %4794 = vmatprep.subr.mxu0 0.0
      %4795 = vmatpush1.msra.mxu0 %v4748
      %4796 = vmatprep.subr.mxu0 0.0
      %4797 = vmatpush2.msra.mxu0 0.0
      %4798 = vmatprep.subr.mxu0 0.0
      %4799 = vmatpush2.msra.mxu0 0.0
      %4800 = vmatprep.subr.mxu0 0.0
      %4801 = vmatpush2.msra.mxu0 0.0
      %4802 = vmatprep.subr.mxu0 0.0
      %4803 = vmatpush2.msra.mxu0 0.0
      %4804 = vmatprep.subr.mxu0 0.0
      %4805 = vmatpush2.msra.mxu0 0.0
      %4806 = vmatprep.subr.mxu0 0.0
      %4807 = vmatpush2.msra.mxu0 0.0
      %4808 = vmatprep.subr.mxu0 0.0
      %4809 = vmatpush2.msra.mxu0 0.0
      %4810 = vmatprep.subr.mxu0 0.0
      %4811 = vmatpush2.msra.mxu0 0.0
      %4812 = vmatprep.subr.mxu0 0.0
      %4813 = vmatpush2.msra.mxu0 0.0
      %4814 = vmatprep.subr.mxu0 0.0
      %4815 = vmatpush2.msra.mxu0 0.0
      %4816 = vmatprep.subr.mxu0 0.0
      %4817 = vmatpush2.msra.mxu0 0.0
      %4818 = vmatprep.subr.mxu0 0.0
      %4819 = vmatpush2.msra.mxu0 0.0
      %4820 = vmatprep.subr.mxu0 0.0
      %4821 = vmatpush2.msra.mxu0 0.0
      %4822 = vmatprep.subr.mxu0 0.0
      %4823 = vmatpush2.msra.mxu0 0.0
      %4824 = vmatprep.subr.mxu0 0.0
      %4825 = vmatpush2.msra.mxu0 0.0
      %4826 = vmatprep.subr.mxu0 0.0
      %4827 = vmatpush2.msra.mxu0 0.0
      %4828 = vmatprep.mubr.f32.mxu0 0.0
      %4829 = vmatmul.mubr.f32.gmra.mxu0 %v4739
      %v4830 = vpop.f32.mrf.mxu0
      %v4831 = vadd.f32 0.0, %v4830
      %v4832 = vpop.f32.mrf.mxu0
      %4833 = vmatprep.mubr.f32.mxu0 0.0
      %4834 = vmatmul.mubr.f32.gmra.mxu0 %v4740
      %v4835 = vpop.f32.mrf.mxu0
      %v4836 = vadd.f32 0.0, %v4835
      %v4837 = vpop.f32.mrf.mxu0
      %4838 = vmatprep.mubr.f32.mxu0 0.0
      %4839 = vmatmul.mubr.f32.gmra.mxu0 %v4741
      %v4840 = vpop.f32.mrf.mxu0
      %v4841 = vadd.f32 0.0, %v4840
      %v4842 = vpop.f32.mrf.mxu0
      %4843 = vmatprep.mubr.f32.mxu0 0.0
      %4844 = vmatmul.mubr.f32.gmra.mxu0 %v4742
      %v4845 = vpop.f32.mrf.mxu0
      %v4846 = vadd.f32 0.0, %v4845
      %v4847 = vpop.f32.mrf.mxu0
      %4848 = vmatprep.mubr.f32.mxu0 0.0
      %4849 = vmatmul.mubr.f32.gmra.mxu0 %v4743
      %v4850 = vpop.f32.mrf.mxu0
      %v4851 = vadd.f32 0.0, %v4850
      %v4852 = vpop.f32.mrf.mxu0
      %4853 = vmatprep.mubr.f32.mxu0 0.0
      %4854 = vmatmul.mubr.f32.gmra.mxu0 %v4744
      %v4855 = vpop.f32.mrf.mxu0
      %v4856 = vadd.f32 0.0, %v4855
      %v4857 = vpop.f32.mrf.mxu0
      %4858 = vmatprep.mubr.f32.mxu0 0.0
      %4859 = vmatmul.mubr.f32.gmra.mxu0 %v4745
      %v4860 = vpop.f32.mrf.mxu0
      %v4861 = vadd.f32 0.0, %v4860
      %v4862 = vpop.f32.mrf.mxu0
      %4863 = vmatprep.mubr.f32.mxu0 0.0
      %4864 = vmatmul.mubr.f32.gmra.mxu0 %v4746
      %v4865 = vpop.f32.mrf.mxu0
      %v4866 = vadd.f32 0.0, %v4865
      %v4867 = vpop.f32.mrf.mxu0
      %4868 = vdwg.mxu0
      %v4869 = vadd.f32 %v4723, %v4831
      %v4870 = vadd.f32 %v4724, %v4836
      %v4871 = vadd.f32 %v4725, %v4841
      %v4872 = vadd.f32 %v4726, %v4846
      %v4873 = vadd.f32 %v4727, %v4851
      %v4874 = vadd.f32 %v4728, %v4856
      %v4875 = vadd.f32 %v4729, %v4861
      %v4876 = vadd.f32 %v4730, %v4866
      %v4877 = vld [vmem:[#allocation5] sm:$0x1]
      %v4879 = vlaneseq
      %v4880 = vshrl.u32 %v4879, 7
      %v4881 = vsub.s32 0, %v4880
      %v4882 = vrot.slane %v4877, %v4881
      %v4884 = vadd.f32 %v4869, %v4882
      %v4885 = vadd.f32 %v4870, %v4882
      %v4886 = vadd.f32 %v4871, %v4882
      %v4887 = vadd.f32 %v4872, %v4882
      %v4888 = vadd.f32 %v4873, %v4882
      %v4889 = vadd.f32 %v4874, %v4882
      %v4890 = vadd.f32 %v4875, %v4882
      %v4891 = vadd.f32 %v4876, %v4882
      %vm4892 = vcmask 7168
      %4893 = vst.msk [vmem:[%s334] sm:$0xff] %vm4892, %v4884
      %4894 = vst.msk [vmem:[%s334 + $0x8] sm:$0xff] %vm4892, %v4885
      %4895 = vst.msk [vmem:[%s334 + $0x10] sm:$0xff] %vm4892, %v4886
      %4896 = vst.msk [vmem:[%s334 + $0x18] sm:$0xff] %vm4892, %v4887
      %4897 = vst.msk [vmem:[%s334 + $0x20] sm:$0xff] %vm4892, %v4888
      %4898 = vst.msk [vmem:[%s334 + $0x28] sm:$0xff] %vm4892, %v4889
      %4899 = vst.msk [vmem:[%s334 + $0x30] sm:$0xff] %vm4892, %v4890
      %4900 = vst.msk [vmem:[%s334 + $0x38] sm:$0xff] %vm4892, %v4891
      %p4901 = scmp.lt.s32.totalorder %s22, 1
      %s4902 = scalar_select %p4901, %s22, 1
      %s4903 = smul.addr %s4902, 8
      %s4904 = smul.addr %s4903, 8
      %s4905 = scalar_lea.vmem %s9, %s4904
      // Predicated region
      $region57: #{small_patch_discriminator.1} parent=55 // pred_check
        %p4906 = pneg %p234
      $region58: #{small_patch_discriminator.1} parent=55 // pred_check_branch
        %4908 = sbr.rel (%p4906) target = $region60
      $region59: #{small_patch_discriminator.1} parent=55 // pred_region
        _
      $region60: #{small_patch_discriminator.1} parent=55 // pred_fallthru
        _
    $region56: #{small_patch_discriminator.1} parent=5 // pred_fallthru
      _
    %p4909 = scmp.le.s32.totalorder 2, %s17
    // Predicated region
    $region61: #{small_patch_discriminator.1} parent=5 // pred_check
      %p4910 = pneg %p4909
    $region62: #{small_patch_discriminator.1} parent=5 // pred_check_branch
      %4912 = sbr.rel (%p4910) target = $region64
    $region63: #{small_patch_discriminator.1} parent=5 // pred_region
      %s4913 = ssub.s32 %s17, 2
      // Predicated region
      $region65: #{small_patch_discriminator.1} parent=63 // pred_check
        %p4914 = pneg %p240
      $region66: #{small_patch_discriminator.1} parent=63 // pred_check_branch
        %4916 = sbr.rel (%p4914) target = $region68
      $region67: #{small_patch_discriminator.1} parent=63 // pred_region
        %p4917 = scmp.lt.s32.totalorder %s23, 1
        %s4918 = scalar_select %p4917, %s23, 1
        %s4919 = smul.addr %s4918, 8
        %s4920 = smul.addr %s4919, 8
        %s4921 = scalar_lea.vmem %s9, %s4920
      $region68: #{small_patch_discriminator.1} parent=63 // pred_fallthru
        _
    $region64: #{small_patch_discriminator.1} parent=5 // pred_fallthru
      _
  $region6: #{small_patch_discriminator.1} parent=0 // loop_footer
    %s21 = sadd.s32 1, %s17
  $region7: #{small_patch_discriminator.1} parent=0 // loop_footer_branch
    %16 = sbr.rel target = $region3
  $region8: #{small_patch_discriminator.1} parent=0 // loop_exit
    _

</llo_original>
